<compile_context>
chip_gen: v7x
topology: tpu7x:2x2x1
jax: 0.10.0
libtpu: 0.0.40
codegen_flags: <defaults>
</compile_context>

<pallas_src>
import functools

import jax
import jax.numpy as jnp
from jax.experimental import pallas as pl
from jax.experimental.pallas import tpu as pltpu


# ----------------------------------------------------------------------------
# Pallas kernels
# ----------------------------------------------------------------------------
def _mm_kernel(a_ref, w_ref, b_ref, o_ref, acc_ref, *, relu):
    """act(a @ w + bias); grid = (M, N, K) tiles, K last (accumulator axis)."""
    @pl.when(pl.program_id(2) == 0)
    def _():
        acc_ref[...] = jnp.zeros_like(acc_ref)

    acc_ref[...] += jnp.dot(a_ref[...], w_ref[...],
                            preferred_element_type=jnp.float32)

    @pl.when(pl.program_id(2) == pl.num_programs(2) - 1)
    def _():
        r = acc_ref[...] + b_ref[...]
        if relu:
            r = jnp.maximum(r, 0.0)
        o_ref[...] = r.astype(o_ref.dtype)


def _mm_res_kernel(a_ref, w_ref, b_ref, res_ref, o_ref, acc_ref, *, relu):
    """act(a @ w + bias + residual); residual add fused in the finalize step."""
    @pl.when(pl.program_id(2) == 0)
    def _():
        acc_ref[...] = jnp.zeros_like(acc_ref)

    acc_ref[...] += jnp.dot(a_ref[...], w_ref[...],
                            preferred_element_type=jnp.float32)

    @pl.when(pl.program_id(2) == pl.num_programs(2) - 1)
    def _():
        r = acc_ref[...] + b_ref[...] + res_ref[...].astype(jnp.float32)
        if relu:
            r = jnp.maximum(r, 0.0)
        o_ref[...] = r.astype(o_ref.dtype)


# ----------------------------------------------------------------------------
# Pallas wrapper
# ----------------------------------------------------------------------------
def _round_up(x, m):
    return ((x + m - 1) // m) * m


def matmul_bn_act(a, w, bias, *, residual=None, relu=True,
                  out_dtype=jnp.bfloat16, tm_max=256, tn_max=512, tk_max=512):
    """Fused  act(a @ w + bias [+ residual])  on the MXU.

    a:        (M, K) activations (cast to bf16)
    w:        (K, N) BN-folded weight (cast to bf16)
    bias:     (N,)   BN-folded bias (f32)
    residual: optional (M, N) tensor added before the activation (f32 add).
    """
    M, K = a.shape
    K2, N = w.shape
    assert K2 == K

    tm = min(tm_max, _round_up(M, 8))          # cap tm: A-tile VMEM stays bounded
    Mp = _round_up(M, tm)
    tn = min(tn_max, _round_up(N, 128))        # lane-dense output tiles
    Np = _round_up(N, tn)
    tk = min(tk_max, _round_up(K, 128))
    Kp = _round_up(K, tk)

    # jnp.pad with zero widths is a no-op, so aligned shapes incur no copy.
    a_p = jnp.pad(a.astype(jnp.bfloat16), ((0, Mp - M), (0, Kp - K)))
    w_p = jnp.pad(w.astype(jnp.bfloat16), ((0, Kp - K), (0, Np - N)))
    b_p = jnp.pad(bias.astype(jnp.float32).reshape(1, N), ((0, 0), (0, Np - N)))

    grid = (Mp // tm, Np // tn, Kp // tk)

    in_specs = [
        pl.BlockSpec((tm, tk), lambda i, j, k: (i, k)),
        pl.BlockSpec((tk, tn), lambda i, j, k: (k, j)),
        pl.BlockSpec((1, tn), lambda i, j, k: (0, j)),
    ]
    inputs = [a_p, w_p, b_p]
    if residual is not None:
        r_p = jnp.pad(residual.astype(jnp.float32), ((0, Mp - M), (0, Np - N)))
        in_specs.append(pl.BlockSpec((tm, tn), lambda i, j, k: (i, j)))
        inputs.append(r_p)
        kernel = functools.partial(_mm_res_kernel, relu=relu)
    else:
        kernel = functools.partial(_mm_kernel, relu=relu)

    out = pl.pallas_call(
        kernel,
        out_shape=jax.ShapeDtypeStruct((Mp, Np), out_dtype),
        grid_spec=pltpu.PrefetchScalarGridSpec(
            num_scalar_prefetch=0,
            grid=grid,
            in_specs=in_specs,
            out_specs=pl.BlockSpec((tm, tn), lambda i, j, k: (i, j)),
            scratch_shapes=[pltpu.VMEM((tm, tn), jnp.float32)],
        ),
        compiler_params=pltpu.CompilerParams(
            dimension_semantics=("parallel", "parallel", "arbitrary")),
    )(*inputs)
    return out[:M, :N]


# ----------------------------------------------------------------------------
# Glue: im2col for the 3x3 conv (stride / dilation, padding = dilation)
# ----------------------------------------------------------------------------
def _im2col_3x3(x, *, stride, dilation):
    """x: NHWC.  Returns ((B*Ho*Wo, 9*C) with K order (kh, kw, cin), Ho, Wo)."""
    B, H, W, C = x.shape
    pad = dilation
    xp = jnp.pad(x, ((0, 0), (pad, pad), (pad, pad), (0, 0)))
    Hp, Wp = H + 2 * pad, W + 2 * pad
    Ho = (Hp - 2 * dilation - 1) // stride + 1
    Wo = (Wp - 2 * dilation - 1) // stride + 1
    cols = []
    for kh in range(3):
        for kw in range(3):
            hs, ws = kh * dilation, kw * dilation
            cols.append(xp[:, hs:hs + stride * (Ho - 1) + 1:stride,
                              ws:ws + stride * (Wo - 1) + 1:stride, :])
    p = jnp.concatenate(cols, axis=-1)                    # (B, Ho, Wo, 9*C)
    return p.reshape(B * Ho * Wo, 9 * C), Ho, Wo


# ----------------------------------------------------------------------------
# Parameters: raw (PyTorch-layout) init + one-time BN folding / pre-transpose
# ----------------------------------------------------------------------------
def init_bottleneck_params(key, inplanes, planes, *, groups=1, base_width=64,
                           downsample=False, expansion=4):
    width = int(planes * (base_width / 64.0)) * groups
    out_ch = planes * expansion
    ks = jax.random.split(key, 8)

    def conv_w(k, cout, cin, ksz):
        fan_in = cin * ksz * ksz
        return jax.random.normal(k, (cout, cin, ksz, ksz),
                                 jnp.float32) / jnp.sqrt(fan_in)

    def bn_p(k, c):
        k1, k2, k3, k4 = jax.random.split(k, 4)
        return dict(
            gamma=1.0 + 0.1 * jax.random.normal(k1, (c,), jnp.float32),
            beta=0.1 * jax.random.normal(k2, (c,), jnp.float32),
            mean=0.1 * jax.random.normal(k3, (c,), jnp.float32),
            var=jnp.abs(jax.random.normal(k4, (c,), jnp.float32)) + 0.5,
        )

    p = dict(
        conv1_w=conv_w(ks[0], width, inplanes, 1), bn1=bn_p(ks[1], width),
        conv2_w=conv_w(ks[2], width, width // groups, 3), bn2=bn_p(ks[3], width),
        conv3_w=conv_w(ks[4], out_ch, width, 1), bn3=bn_p(ks[5], out_ch),
    )
    if downsample:
        p["down_w"] = conv_w(ks[6], out_ch, inplanes, 1)
        p["down_bn"] = bn_p(ks[7], out_ch)
    return p


def _fold_conv_bn(w, bn, eps=1e-5):
    """Fold eval-mode BN into a conv: returns ((KH*KW*Cin, Cout) bf16, (Cout,) f32)."""
    scale = bn["gamma"] / jnp.sqrt(bn["var"] + eps)                     # (Cout,)
    wmat = jnp.transpose(w, (2, 3, 1, 0)).reshape(-1, w.shape[0])       # K = (kh,kw,cin)
    wmat = wmat * scale[None, :]
    bias = bn["beta"] - bn["mean"] * scale
    return wmat.astype(jnp.bfloat16), bias.astype(jnp.float32)


def prepare_params(raw):
    """One-time weight prep (outside the per-call path): transpose + BN fold + bf16."""
    f = {}
    f["w1"], f["b1"] = _fold_conv_bn(raw["conv1_w"], raw["bn1"])
    f["w2"], f["b2"] = _fold_conv_bn(raw["conv2_w"], raw["bn2"])
    f["w3"], f["b3"] = _fold_conv_bn(raw["conv3_w"], raw["bn3"])
    if "down_w" in raw:
        f["wd"], f["bd"] = _fold_conv_bn(raw["down_w"], raw["down_bn"])
    return f


# ----------------------------------------------------------------------------
# Bottleneck forward
# ----------------------------------------------------------------------------
def bottleneck_forward(folded, x_nchw, *, stride=1, dilation=1,
                       has_downsample=False):
    B, Cin, H, W = x_nchw.shape
    x = jnp.transpose(x_nchw, (0, 2, 3, 1))                 # -> NHWC, f32

    # conv1 (1x1) + bn1 + relu   (single fused Pallas matmul)
    width = folded["w1"].shape[1]
    out = matmul_bn_act(x.reshape(B * H * W, Cin), folded["w1"], folded["b1"],
                        relu=True)
    out = out.reshape(B, H, W, width)                       # bf16 activations

    # conv2 (3x3, stride, dilation, pad=dilation) + bn2 + relu
    a2, Ho, Wo = _im2col_3x3(out, stride=stride, dilation=dilation)
    out = matmul_bn_act(a2, folded["w2"], folded["b2"], relu=True)

    # identity / downsample path
    out_ch = folded["w3"].shape[1]
    if has_downsample:
        xi = x[:, ::stride, ::stride, :].reshape(B * Ho * Wo, Cin)
        identity = matmul_bn_act(xi, folded["wd"], folded["bd"], relu=False,
                                 out_dtype=jnp.float32)
    else:
        assert stride == 1 and Cin == out_ch, "identity path requires matching shapes"
        identity = x.reshape(B * H * W, Cin).astype(jnp.float32)

    # conv3 (1x1) + bn3 + residual add + final relu, fused in one kernel
    y = matmul_bn_act(out, folded["w3"], folded["b3"], residual=identity,
                      relu=True, out_dtype=jnp.float32)
    y = y.reshape(B, Ho, Wo, out_ch)
    return jnp.transpose(y, (0, 3, 1, 2))                   # -> NCHW


# ----------------------------------------------------------------------------
# Main
# ----------------------------------------------------------------------------
if __name__ == "__main__":
    key = jax.random.PRNGKey(0)
    k_params, k_input = jax.random.split(key)

    # Small Bottleneck: inplanes=64, planes=16 -> width=16, out=64 (= inplanes),
    # stride=1, groups=1, dilation=1, downsample=None (pure identity residual).
    inplanes, planes = 64, 16
    B, H, W = 2, 16, 16

    raw = init_bottleneck_params(k_params, inplanes, planes, downsample=False)
    folded = prepare_params(raw)            # BN folded + pre-transposed bf16, once

    x = jax.random.normal(k_input, (B, inplanes, H, W), jnp.float32)

    fwd = jax.jit(functools.partial(bottleneck_forward, stride=1, dilation=1,
                                    has_downsample=False))
    y = fwd(folded, x)
    jax.block_until_ready(y)

    assert y.shape == (B, planes * 4, H, W), y.shape
    assert bool(jnp.all(jnp.isfinite(y)))
    assert bool(jnp.all(y >= 0.0))          # final ReLU
    print("KERNEL_OK")
</pallas_src>

<mosaic_0001>
module attributes {stable_mosaic.version = 11 : i64} {
  func.func @_mm_kernel(%arg0: i32, %arg1: i32, %arg2: i32, %arg3: memref<256x128xbf16, #tpu.memory_space<vmem>>, %arg4: memref<128x128xbf16, #tpu.memory_space<vmem>>, %arg5: memref<1x128xf32, #tpu.memory_space<vmem>>, %arg6: memref<256x128xbf16, #tpu.memory_space<vmem>>, %arg7: memref<256x128xf32, #tpu.memory_space<vmem>>) attributes {dimension_semantics = [#tpu.dimension_semantics<parallel>, #tpu.dimension_semantics<parallel>, #tpu.dimension_semantics<arbitrary>], iteration_bounds = array<i64: 2, 1, 1>, scalar_prefetch = 0 : i64, scratch_operands = 1 : i64, tpu.core_type = #tpu.core_type<tc>, window_params = [{transform_indices = @transform_0, window_bounds = array<i64: 256, 128>}, {transform_indices = @transform_1, window_bounds = array<i64: 128, 128>}, {transform_indices = @transform_2, window_bounds = array<i64: 1, 128>}, {transform_indices = @transform_3, window_bounds = array<i64: 256, 128>}]} {
    %c0_i32 = arith.constant 0 : i32
    %0 = arith.cmpi eq, %arg2, %c0_i32 : i32
    %1 = arith.extui %0 : i1 to i32
    %c0_i32_0 = arith.constant 0 : i32
    %2 = arith.cmpi ne, %1, %c0_i32_0 : i32
    scf.if %2 {
      %cst_10 = arith.constant 0.000000e+00 : f32
      %12 = vector.broadcast %cst_10 : f32 to vector<256x128xf32>
      %c0_11 = arith.constant 0 : index
      %c0_12 = arith.constant 0 : index
      %13 = vector.load %arg7[%c0_11, %c0_12] : memref<256x128xf32, #tpu.memory_space<vmem>>, vector<256x128xf32>
      tpu.vector_store %arg7[%c0_11, %c0_12], %12 {strides = array<i32>} : memref<256x128xf32, #tpu.memory_space<vmem>>, vector<256x128xf32>,
    } else {
    }
    %c0 = arith.constant 0 : index
    %c0_1 = arith.constant 0 : index
    %3 = vector.load %arg7[%c0, %c0_1] : memref<256x128xf32, #tpu.memory_space<vmem>>, vector<256x128xf32>
    %c0_2 = arith.constant 0 : index
    %c0_3 = arith.constant 0 : index
    %4 = vector.load %arg3[%c0_2, %c0_3] : memref<256x128xbf16, #tpu.memory_space<vmem>>, vector<256x128xbf16>
    %c0_4 = arith.constant 0 : index
    %c0_5 = arith.constant 0 : index
    %5 = vector.load %arg4[%c0_4, %c0_5] : memref<128x128xbf16, #tpu.memory_space<vmem>>, vector<128x128xbf16>
    %cst = arith.constant dense<0.000000e+00> : vector<256x128xf32>
    %6 = tpu.matmul %4, %5, %cst {dimension_numbers = #tpu.dot_dimension_numbers<[1], [0], [0], [1], [0, 0, 1, 1], [], []>} : vector<256x128xbf16>, vector<128x128xbf16>, vector<256x128xf32> -> vector<256x128xf32>
    %7 = arith.addf %3, %6 : vector<256x128xf32>
    %c0_6 = arith.constant 0 : index
    %c0_7 = arith.constant 0 : index
    %8 = vector.load %arg7[%c0_6, %c0_7] : memref<256x128xf32, #tpu.memory_space<vmem>>, vector<256x128xf32>
    tpu.vector_store %arg7[%c0_6, %c0_7], %7 {strides = array<i32>} : memref<256x128xf32, #tpu.memory_space<vmem>>, vector<256x128xf32>,
    %c0_i32_8 = arith.constant 0 : i32
    %9 = arith.cmpi eq, %arg2, %c0_i32_8 : i32
    %10 = arith.extui %9 : i1 to i32
    %c0_i32_9 = arith.constant 0 : i32
    %11 = arith.cmpi ne, %10, %c0_i32_9 : i32
    scf.if %11 {
      %c0_10 = arith.constant 0 : index
      %c0_11 = arith.constant 0 : index
      %12 = vector.load %arg7[%c0_10, %c0_11] : memref<256x128xf32, #tpu.memory_space<vmem>>, vector<256x128xf32>
      %c0_12 = arith.constant 0 : index
      %c0_13 = arith.constant 0 : index
      %13 = vector.load %arg5[%c0_12, %c0_13] : memref<1x128xf32, #tpu.memory_space<vmem>>, vector<1x128xf32>
      %14 = vector.broadcast %13 : vector<1x128xf32> to vector<256x128xf32>
      %15 = arith.addf %12, %14 : vector<256x128xf32>
      %cst_14 = arith.constant 0.000000e+00 : f32
      %16 = vector.broadcast %cst_14 : f32 to vector<256x128xf32>
      %17 = arith.maximumf %15, %16 : vector<256x128xf32>
      %18 = arith.truncf %17 : vector<256x128xf32> to vector<256x128xbf16>
      %c0_15 = arith.constant 0 : index
      %c0_16 = arith.constant 0 : index
      %19 = vector.load %arg6[%c0_15, %c0_16] : memref<256x128xbf16, #tpu.memory_space<vmem>>, vector<256x128xbf16>
      tpu.vector_store %arg6[%c0_15, %c0_16], %18 {strides = array<i32>} : memref<256x128xbf16, #tpu.memory_space<vmem>>, vector<256x128xbf16>,
    } else {
    }
    return
  }
  func.func @transform_0(%arg0: i32, %arg1: i32, %arg2: i32) -> (i32, i32) {
    %c0_i32 = arith.constant 0 : i32
    return %arg0, %arg2 : i32, i32
  }
  func.func @transform_1(%arg0: i32, %arg1: i32, %arg2: i32) -> (i32, i32) {
    %c0_i32 = arith.constant 0 : i32
    return %arg2, %arg1 : i32, i32
  }
  func.func @transform_2(%arg0: i32, %arg1: i32, %arg2: i32) -> (i32, i32) {
    %c0_i32 = arith.constant 0 : i32
    %c0_i32_0 = arith.constant 0 : i32
    return %c0_i32, %arg1 : i32, i32
  }
  func.func @transform_3(%arg0: i32, %arg1: i32, %arg2: i32) -> (i32, i32) {
    %c0_i32 = arith.constant 0 : i32
    return %arg0, %arg1 : i32, i32
  }
}

module attributes {stable_mosaic.version = 11 : i64} {
  func.func @_mm_kernel(%arg0: i32, %arg1: i32, %arg2: i32, %arg3: memref<256x256xbf16, #tpu.memory_space<vmem>>, %arg4: memref<256x128xbf16, #tpu.memory_space<vmem>>, %arg5: memref<1x128xf32, #tpu.memory_space<vmem>>, %arg6: memref<256x128xbf16, #tpu.memory_space<vmem>>, %arg7: memref<256x128xf32, #tpu.memory_space<vmem>>) attributes {dimension_semantics = [#tpu.dimension_semantics<parallel>, #tpu.dimension_semantics<parallel>, #tpu.dimension_semantics<arbitrary>], iteration_bounds = array<i64: 2, 1, 1>, scalar_prefetch = 0 : i64, scratch_operands = 1 : i64, tpu.core_type = #tpu.core_type<tc>, window_params = [{transform_indices = @transform_0, window_bounds = array<i64: 256, 256>}, {transform_indices = @transform_1, window_bounds = array<i64: 256, 128>}, {transform_indices = @transform_2, window_bounds = array<i64: 1, 128>}, {transform_indices = @transform_3, window_bounds = array<i64: 256, 128>}]} {
    %c0_i32 = arith.constant 0 : i32
    %0 = arith.cmpi eq, %arg2, %c0_i32 : i32
    %1 = arith.extui %0 : i1 to i32
    %c0_i32_0 = arith.constant 0 : i32
    %2 = arith.cmpi ne, %1, %c0_i32_0 : i32
    scf.if %2 {
      %cst_10 = arith.constant 0.000000e+00 : f32
      %12 = vector.broadcast %cst_10 : f32 to vector<256x128xf32>
      %c0_11 = arith.constant 0 : index
      %c0_12 = arith.constant 0 : index
      %13 = vector.load %arg7[%c0_11, %c0_12] : memref<256x128xf32, #tpu.memory_space<vmem>>, vector<256x128xf32>
      tpu.vector_store %arg7[%c0_11, %c0_12], %12 {strides = array<i32>} : memref<256x128xf32, #tpu.memory_space<vmem>>, vector<256x128xf32>,
    } else {
    }
    %c0 = arith.constant 0 : index
    %c0_1 = arith.constant 0 : index
    %3 = vector.load %arg7[%c0, %c0_1] : memref<256x128xf32, #tpu.memory_space<vmem>>, vector<256x128xf32>
    %c0_2 = arith.constant 0 : index
    %c0_3 = arith.constant 0 : index
    %4 = vector.load %arg3[%c0_2, %c0_3] : memref<256x256xbf16, #tpu.memory_space<vmem>>, vector<256x256xbf16>
    %c0_4 = arith.constant 0 : index
    %c0_5 = arith.constant 0 : index
    %5 = vector.load %arg4[%c0_4, %c0_5] : memref<256x128xbf16, #tpu.memory_space<vmem>>, vector<256x128xbf16>
    %cst = arith.constant dense<0.000000e+00> : vector<256x128xf32>
    %6 = tpu.matmul %4, %5, %cst {dimension_numbers = #tpu.dot_dimension_numbers<[1], [0], [0], [1], [0, 0, 1, 1], [], []>} : vector<256x256xbf16>, vector<256x128xbf16>, vector<256x128xf32> -> vector<256x128xf32>
    %7 = arith.addf %3, %6 : vector<256x128xf32>
    %c0_6 = arith.constant 0 : index
    %c0_7 = arith.constant 0 : index
    %8 = vector.load %arg7[%c0_6, %c0_7] : memref<256x128xf32, #tpu.memory_space<vmem>>, vector<256x128xf32>
    tpu.vector_store %arg7[%c0_6, %c0_7], %7 {strides = array<i32>} : memref<256x128xf32, #tpu.memory_space<vmem>>, vector<256x128xf32>,
    %c0_i32_8 = arith.constant 0 : i32
    %9 = arith.cmpi eq, %arg2, %c0_i32_8 : i32
    %10 = arith.extui %9 : i1 to i32
    %c0_i32_9 = arith.constant 0 : i32
    %11 = arith.cmpi ne, %10, %c0_i32_9 : i32
    scf.if %11 {
      %c0_10 = arith.constant 0 : index
      %c0_11 = arith.constant 0 : index
      %12 = vector.load %arg7[%c0_10, %c0_11] : memref<256x128xf32, #tpu.memory_space<vmem>>, vector<256x128xf32>
      %c0_12 = arith.constant 0 : index
      %c0_13 = arith.constant 0 : index
      %13 = vector.load %arg5[%c0_12, %c0_13] : memref<1x128xf32, #tpu.memory_space<vmem>>, vector<1x128xf32>
      %14 = vector.broadcast %13 : vector<1x128xf32> to vector<256x128xf32>
      %15 = arith.addf %12, %14 : vector<256x128xf32>
      %cst_14 = arith.constant 0.000000e+00 : f32
      %16 = vector.broadcast %cst_14 : f32 to vector<256x128xf32>
      %17 = arith.maximumf %15, %16 : vector<256x128xf32>
      %18 = arith.truncf %17 : vector<256x128xf32> to vector<256x128xbf16>
      %c0_15 = arith.constant 0 : index
      %c0_16 = arith.constant 0 : index
      %19 = vector.load %arg6[%c0_15, %c0_16] : memref<256x128xbf16, #tpu.memory_space<vmem>>, vector<256x128xbf16>
      tpu.vector_store %arg6[%c0_15, %c0_16], %18 {strides = array<i32>} : memref<256x128xbf16, #tpu.memory_space<vmem>>, vector<256x128xbf16>,
    } else {
    }
    return
  }
  func.func @transform_0(%arg0: i32, %arg1: i32, %arg2: i32) -> (i32, i32) {
    %c0_i32 = arith.constant 0 : i32
    return %arg0, %arg2 : i32, i32
  }
  func.func @transform_1(%arg0: i32, %arg1: i32, %arg2: i32) -> (i32, i32) {
    %c0_i32 = arith.constant 0 : i32
    return %arg2, %arg1 : i32, i32
  }
  func.func @transform_2(%arg0: i32, %arg1: i32, %arg2: i32) -> (i32, i32) {
    %c0_i32 = arith.constant 0 : i32
    %c0_i32_0 = arith.constant 0 : i32
    return %c0_i32, %arg1 : i32, i32
  }
  func.func @transform_3(%arg0: i32, %arg1: i32, %arg2: i32) -> (i32, i32) {
    %c0_i32 = arith.constant 0 : i32
    return %arg0, %arg1 : i32, i32
  }
}

module attributes {stable_mosaic.version = 11 : i64} {
  func.func @_mm_res_kernel(%arg0: i32, %arg1: i32, %arg2: i32, %arg3: memref<256x128xbf16, #tpu.memory_space<vmem>>, %arg4: memref<128x128xbf16, #tpu.memory_space<vmem>>, %arg5: memref<1x128xf32, #tpu.memory_space<vmem>>, %arg6: memref<256x128xf32, #tpu.memory_space<vmem>>, %arg7: memref<256x128xf32, #tpu.memory_space<vmem>>, %arg8: memref<256x128xf32, #tpu.memory_space<vmem>>) attributes {dimension_semantics = [#tpu.dimension_semantics<parallel>, #tpu.dimension_semantics<parallel>, #tpu.dimension_semantics<arbitrary>], iteration_bounds = array<i64: 2, 1, 1>, scalar_prefetch = 0 : i64, scratch_operands = 1 : i64, tpu.core_type = #tpu.core_type<tc>, window_params = [{transform_indices = @transform_0, window_bounds = array<i64: 256, 128>}, {transform_indices = @transform_1, window_bounds = array<i64: 128, 128>}, {transform_indices = @transform_2, window_bounds = array<i64: 1, 128>}, {transform_indices = @transform_3, window_bounds = array<i64: 256, 128>}, {transform_indices = @transform_4, window_bounds = array<i64: 256, 128>}]} {
    %c0_i32 = arith.constant 0 : i32
    %0 = arith.cmpi eq, %arg2, %c0_i32 : i32
    %1 = arith.extui %0 : i1 to i32
    %c0_i32_0 = arith.constant 0 : i32
    %2 = arith.cmpi ne, %1, %c0_i32_0 : i32
    scf.if %2 {
      %cst_10 = arith.constant 0.000000e+00 : f32
      %12 = vector.broadcast %cst_10 : f32 to vector<256x128xf32>
      %c0_11 = arith.constant 0 : index
      %c0_12 = arith.constant 0 : index
      %13 = vector.load %arg8[%c0_11, %c0_12] : memref<256x128xf32, #tpu.memory_space<vmem>>, vector<256x128xf32>
      tpu.vector_store %arg8[%c0_11, %c0_12], %12 {strides = array<i32>} : memref<256x128xf32, #tpu.memory_space<vmem>>, vector<256x128xf32>,
    } else {
    }
    %c0 = arith.constant 0 : index
    %c0_1 = arith.constant 0 : index
    %3 = vector.load %arg8[%c0, %c0_1] : memref<256x128xf32, #tpu.memory_space<vmem>>, vector<256x128xf32>
    %c0_2 = arith.constant 0 : index
    %c0_3 = arith.constant 0 : index
    %4 = vector.load %arg3[%c0_2, %c0_3] : memref<256x128xbf16, #tpu.memory_space<vmem>>, vector<256x128xbf16>
    %c0_4 = arith.constant 0 : index
    %c0_5 = arith.constant 0 : index
    %5 = vector.load %arg4[%c0_4, %c0_5] : memref<128x128xbf16, #tpu.memory_space<vmem>>, vector<128x128xbf16>
    %cst = arith.constant dense<0.000000e+00> : vector<256x128xf32>
    %6 = tpu.matmul %4, %5, %cst {dimension_numbers = #tpu.dot_dimension_numbers<[1], [0], [0], [1], [0, 0, 1, 1], [], []>} : vector<256x128xbf16>, vector<128x128xbf16>, vector<256x128xf32> -> vector<256x128xf32>
    %7 = arith.addf %3, %6 : vector<256x128xf32>
    %c0_6 = arith.constant 0 : index
    %c0_7 = arith.constant 0 : index
    %8 = vector.load %arg8[%c0_6, %c0_7] : memref<256x128xf32, #tpu.memory_space<vmem>>, vector<256x128xf32>
    tpu.vector_store %arg8[%c0_6, %c0_7], %7 {strides = array<i32>} : memref<256x128xf32, #tpu.memory_space<vmem>>, vector<256x128xf32>,
    %c0_i32_8 = arith.constant 0 : i32
    %9 = arith.cmpi eq, %arg2, %c0_i32_8 : i32
    %10 = arith.extui %9 : i1 to i32
    %c0_i32_9 = arith.constant 0 : i32
    %11 = arith.cmpi ne, %10, %c0_i32_9 : i32
    scf.if %11 {
      %c0_10 = arith.constant 0 : index
      %c0_11 = arith.constant 0 : index
      %12 = vector.load %arg8[%c0_10, %c0_11] : memref<256x128xf32, #tpu.memory_space<vmem>>, vector<256x128xf32>
      %c0_12 = arith.constant 0 : index
      %c0_13 = arith.constant 0 : index
      %13 = vector.load %arg5[%c0_12, %c0_13] : memref<1x128xf32, #tpu.memory_space<vmem>>, vector<1x128xf32>
      %14 = vector.broadcast %13 : vector<1x128xf32> to vector<256x128xf32>
      %15 = arith.addf %12, %14 : vector<256x128xf32>
      %c0_14 = arith.constant 0 : index
      %c0_15 = arith.constant 0 : index
      %16 = vector.load %arg6[%c0_14, %c0_15] : memref<256x128xf32, #tpu.memory_space<vmem>>, vector<256x128xf32>
      %17 = arith.addf %15, %16 : vector<256x128xf32>
      %cst_16 = arith.constant 0.000000e+00 : f32
      %18 = vector.broadcast %cst_16 : f32 to vector<256x128xf32>
      %19 = arith.maximumf %17, %18 : vector<256x128xf32>
      %c0_17 = arith.constant 0 : index
      %c0_18 = arith.constant 0 : index
      %20 = vector.load %arg7[%c0_17, %c0_18] : memref<256x128xf32, #tpu.memory_space<vmem>>, vector<256x128xf32>
      tpu.vector_store %arg7[%c0_17, %c0_18], %19 {strides = array<i32>} : memref<256x128xf32, #tpu.memory_space<vmem>>, vector<256x128xf32>,
    } else {
    }
    return
  }
  func.func @transform_0(%arg0: i32, %arg1: i32, %arg2: i32) -> (i32, i32) {
    %c0_i32 = arith.constant 0 : i32
    return %arg0, %arg2 : i32, i32
  }
  func.func @transform_1(%arg0: i32, %arg1: i32, %arg2: i32) -> (i32, i32) {
    %c0_i32 = arith.constant 0 : i32
    return %arg2, %arg1 : i32, i32
  }
  func.func @transform_2(%arg0: i32, %arg1: i32, %arg2: i32) -> (i32, i32) {
    %c0_i32 = arith.constant 0 : i32
    %c0_i32_0 = arith.constant 0 : i32
    return %c0_i32, %arg1 : i32, i32
  }
  func.func @transform_3(%arg0: i32, %arg1: i32, %arg2: i32) -> (i32, i32) {
    %c0_i32 = arith.constant 0 : i32
    return %arg0, %arg1 : i32, i32
  }
  func.func @transform_4(%arg0: i32, %arg1: i32, %arg2: i32) -> (i32, i32) {
    %c0_i32 = arith.constant 0 : i32
    return %arg0, %arg1 : i32, i32
  }
}

</mosaic_0001>

<llo_original>
// kernel: bottleneck_forward.3
$region0: #{bottleneck_forward.3}
  #allocation0 [shape = 'u32[]', space=smem, size = 0x4, offset = 0x4, fixed_abs, tag = 'smem constant byte address 0x4 - core index']
  #allocation1 [shape = 'u32[144,128]{1,0:T(1,128)}', space=vmem, size = 0x12000, scoped, tag = 'internal scratch']
  #allocation2 [shape = 'f32[256,128]{1,0:T(8,128)}', space=vmem, size = 0x20000, scoped, tag = 'scratch operand']
  %s0 = inlined_call_operand.vmem [shape: bf16[512,128], index: 0, kind: input, shape index: {}]
  %s1 = inlined_call_operand.vmem [shape: bf16[128,128], index: 1, kind: input, shape index: {}]
  %s2 = inlined_call_operand.vmem [shape: f32[1,128], index: 2, kind: input, shape index: {}]
  %s3 = inlined_call_operand.vmem [shape: bf16[512,128], index: 3, kind: output, shape index: {}]
  %s4 = sld [smem:[#allocation0]]
  $region53: #{bottleneck_forward.3} parent=0
    _
  %s6 = ssub.s32 1, %s4
  %s7 = scalar_select 0, %s6, %s4
  loop: start=0, step=1, limit=4
  $region2: #{bottleneck_forward.3} parent=0 // loop_pre_header
    _
  $region3: #{bottleneck_forward.3} parent=0 // loop_header
    %s9 = sphi 0, %s13
    %p10 = scmp.ge.s32.totalorder %s9, 4
    %s16 = sphi 0, %s35
    %s17 = sphi 0, %s31
    %s18 = sphi 0, %s27
    %s19 = sphi 0, %s16
    %s20 = sphi 0, %s17
    %s21 = sphi 0, %s18
    %s22 = sphi 0, %s19
    %s23 = sphi 0, %s20
    %s24 = sphi 0, %s21
    %s40 = sphi 0, %s42
    %s43 = sphi 0, %s40
    %s44 = sphi 0, %s43
    %s60 = sphi 0, %s44
    %s68 = sphi 0, %s70
    %s71 = sphi 0, %s68
    %s72 = sphi 0, %s71
    %s88 = sphi 0, %s72
    %s94 = sphi 0, %s96
    %s97 = sphi 0, %s94
    %s98 = sphi 0, %s97
    %s114 = sphi 0, %s98
    %s122 = sphi 0, %s124
    %s125 = sphi 0, %s122
    %s126 = sphi 0, %s125
    %s142 = sphi 0, %s126
  $region4: #{bottleneck_forward.3} parent=0 // loop_header_branch
    %12 = sbr.rel (%p10) target = $region8
  $region5: #{bottleneck_forward.3} parent=0 // loop_body
    %s14 = ssub.s32 %s9, 1
    %s15 = ssub.s32 %s9, 2
    %s25 = sadd.s32 1, %s18
    %p26 = scmp.ge.s32.totalorder %s25, 1
    %s27 = scalar_select %p26, 0, %s25
    %s28 = sadd.s32 1, %s17
    %s29 = scalar_select %p26, %s28, %s17
    %p30 = scmp.ge.s32.totalorder %s29, 1
    %s31 = scalar_select %p30, 0, %s29
    %s32 = sadd.s32 1, %s16
    %s33 = scalar_select %p30, %s32, %s16
    %p34 = scmp.ge.s32.totalorder %s33, 2
    %s35 = scalar_select %p34, 0, %s33
    %s36 = ssub.s32 %s16, %s35
    %s37 = ssub.s32 %s18, %s27
    %s38 = sor.u32 %s36, %s37
    %p39 = scmp.eq.s32.totalorder %s38, 0
    %s41 = sadd.s32 %s40, 1
    %s42 = scalar_select %p39, %s40, %s41
    %p45 = pneg %p39
    %p46 = scmp.eq.s32.totalorder %s9, 1
    %p47 = por %p45, %p46
    %p48 = scmp.ne.s32.totalorder %s40, %s43
    %p49 = scmp.eq.s32.totalorder %s9, 0
    %p50 = por %p48, %p49
    %p51 = scmp.ne.s32.totalorder %s40, %s43
    %p52 = scmp.eq.s32.totalorder %s14, 1
    %p53 = por %p51, %p52
    %p54 = scmp.ne.s32.totalorder %s43, %s44
    %p55 = scmp.eq.s32.totalorder %s14, 0
    %p56 = por %p54, %p55
    %p57 = scmp.ne.s32.totalorder %s43, %s44
    %p58 = scmp.eq.s32.totalorder %s15, 1
    %p59 = por %p57, %p58
    %p61 = scmp.ne.s32.totalorder %s44, %s60
    %p62 = scmp.eq.s32.totalorder %s15, 0
    %p63 = por %p61, %p62
    %s64 = ssub.s32 %s18, %s27
    %s65 = ssub.s32 %s17, %s31
    %s66 = sor.u32 %s64, %s65
    %p67 = scmp.eq.s32.totalorder %s66, 0
    %s69 = sadd.s32 %s68, 1
    %s70 = scalar_select %p67, %s68, %s69
    %p73 = pneg %p67
    %p74 = scmp.eq.s32.totalorder %s9, 1
    %p75 = por %p73, %p74
    %p76 = scmp.ne.s32.totalorder %s68, %s71
    %p77 = scmp.eq.s32.totalorder %s9, 0
    %p78 = por %p76, %p77
    %p79 = scmp.ne.s32.totalorder %s68, %s71
    %p80 = scmp.eq.s32.totalorder %s14, 1
    %p81 = por %p79, %p80
    %p82 = scmp.ne.s32.totalorder %s71, %s72
    %p83 = scmp.eq.s32.totalorder %s14, 0
    %p84 = por %p82, %p83
    %p85 = scmp.ne.s32.totalorder %s71, %s72
    %p86 = scmp.eq.s32.totalorder %s15, 1
    %p87 = por %p85, %p86
    %p89 = scmp.ne.s32.totalorder %s72, %s88
    %p90 = scmp.eq.s32.totalorder %s15, 0
    %p91 = por %p89, %p90
    %s92 = ssub.s32 %s17, %s31
    %p93 = scmp.eq.s32.totalorder %s92, 0
    %s95 = sadd.s32 %s94, 1
    %s96 = scalar_select %p93, %s94, %s95
    %p99 = pneg %p93
    %p100 = scmp.eq.s32.totalorder %s9, 1
    %p101 = por %p99, %p100
    %p102 = scmp.ne.s32.totalorder %s94, %s97
    %p103 = scmp.eq.s32.totalorder %s9, 0
    %p104 = por %p102, %p103
    %p105 = scmp.ne.s32.totalorder %s94, %s97
    %p106 = scmp.eq.s32.totalorder %s14, 1
    %p107 = por %p105, %p106
    %p108 = scmp.ne.s32.totalorder %s97, %s98
    %p109 = scmp.eq.s32.totalorder %s14, 0
    %p110 = por %p108, %p109
    %p111 = scmp.ne.s32.totalorder %s97, %s98
    %p112 = scmp.eq.s32.totalorder %s15, 1
    %p113 = por %p111, %p112
    %p115 = scmp.ne.s32.totalorder %s98, %s114
    %p116 = scmp.eq.s32.totalorder %s15, 0
    %p117 = por %p115, %p116
    %s118 = ssub.s32 %s16, %s35
    %s119 = ssub.s32 %s17, %s31
    %s120 = sor.u32 %s118, %s119
    %p121 = scmp.eq.s32.totalorder %s120, 0
    %s123 = sadd.s32 %s122, 1
    %s124 = scalar_select %p121, %s122, %s123
    %p127 = pneg %p121
    %p128 = scmp.eq.s32.totalorder %s9, 1
    %p129 = por %p127, %p128
    %p130 = scmp.ne.s32.totalorder %s122, %s125
    %p131 = scmp.eq.s32.totalorder %s9, 0
    %p132 = por %p130, %p131
    %p133 = scmp.ne.s32.totalorder %s122, %s125
    %p134 = scmp.eq.s32.totalorder %s14, 1
    %p135 = por %p133, %p134
    %p136 = scmp.ne.s32.totalorder %s125, %s126
    %p137 = scmp.eq.s32.totalorder %s14, 0
    %p138 = por %p136, %p137
    %p139 = scmp.ne.s32.totalorder %s125, %s126
    %p140 = scmp.eq.s32.totalorder %s15, 1
    %p141 = por %p139, %p140
    %p143 = scmp.ne.s32.totalorder %s126, %s142
    %p144 = scmp.eq.s32.totalorder %s15, 0
    %p145 = por %p143, %p144
    %p146 = scmp.le.s32.totalorder 1, %s9
    %p147 = scmp.lt.s32.totalorder %s9, 3
    %p148 = pnand %p146, %p147
    %p149 = pneg %p148
    // Predicated region
    $region9: #{bottleneck_forward.3} parent=5 // pred_check
      _
    $region10: #{bottleneck_forward.3} parent=5 // pred_check_branch
      %151 = sbr.rel (%p148) target = $region12
    $region11: #{bottleneck_forward.3} parent=5 // pred_region
      %s152 = ssub.s32 %s9, 1
      // Predicated region
      $region13: #{bottleneck_forward.3} parent=11 // pred_check
        %p153 = pneg %p84
      $region14: #{bottleneck_forward.3} parent=11 // pred_check_branch
        %155 = sbr.rel (%p153) target = $region16
      $region15: #{bottleneck_forward.3} parent=11 // pred_region
        %s156 = smul.u32 16, %s21
        %p157 = scmp.lt.s32.totalorder %s156, 15
        %s158 = scalar_select %p157, %s156, 15
        %p159 = scmp.lt.s32.totalorder %s20, 0
        %s160 = scalar_select %p159, %s20, 0
        %s161 = sadd.s32 %s160, %s158
        %s162 = smul.addr %s161, 4
        %s163 = scalar_lea.vmem %s1, %s162
        %s164 = smul.u32 16, %s21
      $region16: #{bottleneck_forward.3} parent=11 // pred_fallthru
        _
      // Predicated region
      $region17: #{bottleneck_forward.3} parent=11 // pred_check
        %p165 = pneg %p110
      $region18: #{bottleneck_forward.3} parent=11 // pred_check_branch
        %167 = sbr.rel (%p165) target = $region20
      $region19: #{bottleneck_forward.3} parent=11 // pred_region
        %p168 = scmp.lt.s32.totalorder %s20, 0
        %s169 = scalar_select %p168, %s20, 0
        %s170 = scalar_lea.vmem %s2, %s169
      $region20: #{bottleneck_forward.3} parent=11 // pred_fallthru
        _
    $region12: #{bottleneck_forward.3} parent=5 // pred_fallthru
      _
    %p171 = scmp.lt.s32.totalorder %s9, 2
    // Predicated region
    $region21: #{bottleneck_forward.3} parent=5 // pred_check
      %p172 = pneg %p171
    $region22: #{bottleneck_forward.3} parent=5 // pred_check_branch
      %174 = sbr.rel (%p172) target = $region24
    $region23: #{bottleneck_forward.3} parent=5 // pred_region
      // Predicated region
      $region25: #{bottleneck_forward.3} parent=23 // pred_check
        %p175 = pneg %p50
      $region26: #{bottleneck_forward.3} parent=23 // pred_check_branch
        %177 = sbr.rel (%p175) target = $region28
      $region27: #{bottleneck_forward.3} parent=23 // pred_region
        %s178 = smul.u32 32, %s16
        %p179 = scmp.lt.s32.totalorder %s178, 63
        %s180 = scalar_select %p179, %s178, 63
        %p181 = scmp.lt.s32.totalorder %s18, 0
        %s182 = scalar_select %p181, %s18, 0
        %s183 = sadd.s32 %s182, %s180
        %s184 = smul.addr %s183, 4
        %s185 = scalar_lea.vmem %s0, %s184
        %s186 = smul.u32 32, %s16
      $region28: #{bottleneck_forward.3} parent=23 // pred_fallthru
        _
    $region24: #{bottleneck_forward.3} parent=5 // pred_fallthru
      _
    %p187 = scmp.le.s32.totalorder 1, %s9
    %p188 = scmp.lt.s32.totalorder %s9, 3
    %p189 = pnand %p187, %p188
    %p190 = pneg %p189
    // Predicated region
    $region29: #{bottleneck_forward.3} parent=5 // pred_check
      _
    $region30: #{bottleneck_forward.3} parent=5 // pred_check_branch
      %192 = sbr.rel (%p189) target = $region32
    $region31: #{bottleneck_forward.3} parent=5 // pred_region
      %s193 = ssub.s32 %s9, 1
      %s194 = smul.u32 32, %s19
      %p195 = scmp.lt.s32.totalorder %s194, 63
      %s196 = scalar_select %p195, %s194, 63
      %p197 = scmp.lt.s32.totalorder %s21, 0
      %s198 = scalar_select %p197, %s21, 0
      %s199 = sadd.s32 %s198, %s196
      %s200 = smul.addr %s199, 4
      %s201 = scalar_lea.vmem %s0, %s200
      %p202 = pneg %p56
      %p203 = pneg %p53
      %s204 = smul.u32 16, %s21
      %p205 = scmp.lt.s32.totalorder %s204, 15
      %s206 = scalar_select %p205, %s204, 15
      %p207 = scmp.lt.s32.totalorder %s20, 0
      %s208 = scalar_select %p207, %s20, 0
      %s209 = sadd.s32 %s208, %s206
      %s210 = smul.addr %s209, 4
      %s211 = scalar_lea.vmem %s1, %s210
      %p212 = pneg %p84
      %p213 = pneg %p81
      %p214 = scmp.lt.s32.totalorder %s20, 0
      %s215 = scalar_select %p214, %s20, 0
      %s216 = scalar_lea.vmem %s2, %s215
      %p217 = pneg %p110
      %p218 = pneg %p107
      %p219 = pneg %p138
      %p220 = pneg %p135
      %s221 = smul.u32 32, %s19
      %p222 = scmp.lt.s32.totalorder %s221, 63
      %s223 = scalar_select %p222, %s221, 63
      %p224 = scmp.lt.s32.totalorder %s20, 0
      %s225 = scalar_select %p224, %s20, 0
      %s226 = sadd.s32 %s225, %s223
      %s227 = smul.addr %s226, 4
      %s228 = scalar_lea.vmem %s3, %s227
      %s229 = smul.u32 32, %s19
      %p230 = scmp.lt.s32.totalorder %s229, 63
      %s231 = scalar_select %p230, %s229, 63
      %p232 = scmp.lt.s32.totalorder %s21, 0
      %s233 = scalar_select %p232, %s21, 0
      %s234 = sadd.s32 %s233, %s231
      %s235 = smul.addr %s234, 4
      %s236 = scalar_lea.vmem %s0, %s235
      %s237 = smul.u32 32, %s19
      %s238 = smul.u32 16, %s21
      %p239 = scmp.lt.s32.totalorder %s238, 15
      %s240 = scalar_select %p239, %s238, 15
      %p241 = scmp.lt.s32.totalorder %s20, 0
      %s242 = scalar_select %p241, %s20, 0
      %s243 = sadd.s32 %s242, %s240
      %s244 = smul.addr %s243, 4
      %s245 = scalar_lea.vmem %s1, %s244
      %s246 = smul.u32 16, %s21
      %p247 = scmp.lt.s32.totalorder %s20, 0
      %s248 = scalar_select %p247, %s20, 0
      %s249 = scalar_lea.vmem %s2, %s248
      %s250 = smul.u32 32, %s19
      %p251 = scmp.lt.s32.totalorder %s250, 63
      %s252 = scalar_select %p251, %s250, 63
      %p253 = scmp.lt.s32.totalorder %s20, 0
      %s254 = scalar_select %p253, %s20, 0
      %s255 = sadd.s32 %s254, %s252
      %s256 = smul.addr %s255, 4
      %s257 = scalar_lea.vmem %s3, %s256
      %s258 = smul.u32 32, %s19
      %p260 = scmp.eq.s32.totalorder %s21, 0
      // Predicated region
      $region33: #{bottleneck_forward.3} parent=31 // pred_check
        %p261 = pneg %p260
      $region34: #{bottleneck_forward.3} parent=31 // pred_check_branch
        %263 = sbr.rel (%p261) target = $region36
      $region35: #{bottleneck_forward.3} parent=31 // pred_region
        %264 = vst [vmem:[#allocation2] sm:$0xff] 0.0
        %265 = vst [vmem:[#allocation2 + $0x8] sm:$0xff] 0.0
        %266 = vst [vmem:[#allocation2 + $0x10] sm:$0xff] 0.0
        %267 = vst [vmem:[#allocation2 + $0x18] sm:$0xff] 0.0
        %268 = vst [vmem:[#allocation2 + $0x20] sm:$0xff] 0.0
        %269 = vst [vmem:[#allocation2 + $0x28] sm:$0xff] 0.0
        %270 = vst [vmem:[#allocation2 + $0x30] sm:$0xff] 0.0
        %271 = vst [vmem:[#allocation2 + $0x38] sm:$0xff] 0.0
        %272 = vst [vmem:[#allocation2 + $0x40] sm:$0xff] 0.0
        %273 = vst [vmem:[#allocation2 + $0x48] sm:$0xff] 0.0
        %274 = vst [vmem:[#allocation2 + $0x50] sm:$0xff] 0.0
        %275 = vst [vmem:[#allocation2 + $0x58] sm:$0xff] 0.0
        %276 = vst [vmem:[#allocation2 + $0x60] sm:$0xff] 0.0
        %277 = vst [vmem:[#allocation2 + $0x68] sm:$0xff] 0.0
        %278 = vst [vmem:[#allocation2 + $0x70] sm:$0xff] 0.0
        %279 = vst [vmem:[#allocation2 + $0x78] sm:$0xff] 0.0
        %280 = vst [vmem:[#allocation2 + $0x80] sm:$0xff] 0.0
        %281 = vst [vmem:[#allocation2 + $0x88] sm:$0xff] 0.0
        %282 = vst [vmem:[#allocation2 + $0x90] sm:$0xff] 0.0
        %283 = vst [vmem:[#allocation2 + $0x98] sm:$0xff] 0.0
        %284 = vst [vmem:[#allocation2 + $0xa0] sm:$0xff] 0.0
        %285 = vst [vmem:[#allocation2 + $0xa8] sm:$0xff] 0.0
        %286 = vst [vmem:[#allocation2 + $0xb0] sm:$0xff] 0.0
        %287 = vst [vmem:[#allocation2 + $0xb8] sm:$0xff] 0.0
        %288 = vst [vmem:[#allocation2 + $0xc0] sm:$0xff] 0.0
        %289 = vst [vmem:[#allocation2 + $0xc8] sm:$0xff] 0.0
        %290 = vst [vmem:[#allocation2 + $0xd0] sm:$0xff] 0.0
        %291 = vst [vmem:[#allocation2 + $0xd8] sm:$0xff] 0.0
        %292 = vst [vmem:[#allocation2 + $0xe0] sm:$0xff] 0.0
        %293 = vst [vmem:[#allocation2 + $0xe8] sm:$0xff] 0.0
        %294 = vst [vmem:[#allocation2 + $0xf0] sm:$0xff] 0.0
        %295 = vst [vmem:[#allocation2 + $0xf8] sm:$0xff] 0.0
      $region36: #{bottleneck_forward.3} parent=31 // pred_fallthru
        _
      %v296 = vld [vmem:[#allocation2] sm:$0xff]
      %v297 = vld [vmem:[#allocation2 + $0x8] sm:$0xff]
      %v298 = vld [vmem:[#allocation2 + $0x10] sm:$0xff]
      %v299 = vld [vmem:[#allocation2 + $0x18] sm:$0xff]
      %v300 = vld [vmem:[#allocation2 + $0x20] sm:$0xff]
      %v301 = vld [vmem:[#allocation2 + $0x28] sm:$0xff]
      %v302 = vld [vmem:[#allocation2 + $0x30] sm:$0xff]
      %v303 = vld [vmem:[#allocation2 + $0x38] sm:$0xff]
      %v304 = vld [vmem:[#allocation2 + $0x40] sm:$0xff]
      %v305 = vld [vmem:[#allocation2 + $0x48] sm:$0xff]
      %v306 = vld [vmem:[#allocation2 + $0x50] sm:$0xff]
      %v307 = vld [vmem:[#allocation2 + $0x58] sm:$0xff]
      %v308 = vld [vmem:[#allocation2 + $0x60] sm:$0xff]
      %v309 = vld [vmem:[#allocation2 + $0x68] sm:$0xff]
      %v310 = vld [vmem:[#allocation2 + $0x70] sm:$0xff]
      %v311 = vld [vmem:[#allocation2 + $0x78] sm:$0xff]
      %v312 = vld [vmem:[#allocation2 + $0x80] sm:$0xff]
      %v313 = vld [vmem:[#allocation2 + $0x88] sm:$0xff]
      %v314 = vld [vmem:[#allocation2 + $0x90] sm:$0xff]
      %v315 = vld [vmem:[#allocation2 + $0x98] sm:$0xff]
      %v316 = vld [vmem:[#allocation2 + $0xa0] sm:$0xff]
      %v317 = vld [vmem:[#allocation2 + $0xa8] sm:$0xff]
      %v318 = vld [vmem:[#allocation2 + $0xb0] sm:$0xff]
      %v319 = vld [vmem:[#allocation2 + $0xb8] sm:$0xff]
      %v320 = vld [vmem:[#allocation2 + $0xc0] sm:$0xff]
      %v321 = vld [vmem:[#allocation2 + $0xc8] sm:$0xff]
      %v322 = vld [vmem:[#allocation2 + $0xd0] sm:$0xff]
      %v323 = vld [vmem:[#allocation2 + $0xd8] sm:$0xff]
      %v324 = vld [vmem:[#allocation2 + $0xe0] sm:$0xff]
      %v325 = vld [vmem:[#allocation2 + $0xe8] sm:$0xff]
      %v326 = vld [vmem:[#allocation2 + $0xf0] sm:$0xff]
      %v327 = vld [vmem:[#allocation2 + $0xf8] sm:$0xff]
      %v328 = vld [vmem:[%s236] sm:$0xf]
      %v329 = vld [vmem:[%s236 + $0x4] sm:$0xf]
      %v330 = vld [vmem:[%s236 + $0x8] sm:$0xf]
      %v331 = vld [vmem:[%s236 + $0xc] sm:$0xf]
      %v332 = vld [vmem:[%s236 + $0x10] sm:$0xf]
      %v333 = vld [vmem:[%s236 + $0x14] sm:$0xf]
      %v334 = vld [vmem:[%s236 + $0x18] sm:$0xf]
      %v335 = vld [vmem:[%s236 + $0x1c] sm:$0xf]
      %v336 = vld [vmem:[%s236 + $0x20] sm:$0xf]
      %v337 = vld [vmem:[%s236 + $0x24] sm:$0xf]
      %v338 = vld [vmem:[%s236 + $0x28] sm:$0xf]
      %v339 = vld [vmem:[%s236 + $0x2c] sm:$0xf]
      %v340 = vld [vmem:[%s236 + $0x30] sm:$0xf]
      %v341 = vld [vmem:[%s236 + $0x34] sm:$0xf]
      %v342 = vld [vmem:[%s236 + $0x38] sm:$0xf]
      %v343 = vld [vmem:[%s236 + $0x3c] sm:$0xf]
      %v344 = vld [vmem:[%s236 + $0x40] sm:$0xf]
      %v345 = vld [vmem:[%s236 + $0x44] sm:$0xf]
      %v346 = vld [vmem:[%s236 + $0x48] sm:$0xf]
      %v347 = vld [vmem:[%s236 + $0x4c] sm:$0xf]
      %v348 = vld [vmem:[%s236 + $0x50] sm:$0xf]
      %v349 = vld [vmem:[%s236 + $0x54] sm:$0xf]
      %v350 = vld [vmem:[%s236 + $0x58] sm:$0xf]
      %v351 = vld [vmem:[%s236 + $0x5c] sm:$0xf]
      %v352 = vld [vmem:[%s236 + $0x60] sm:$0xf]
      %v353 = vld [vmem:[%s236 + $0x64] sm:$0xf]
      %v354 = vld [vmem:[%s236 + $0x68] sm:$0xf]
      %v355 = vld [vmem:[%s236 + $0x6c] sm:$0xf]
      %v356 = vld [vmem:[%s236 + $0x70] sm:$0xf]
      %v357 = vld [vmem:[%s236 + $0x74] sm:$0xf]
      %v358 = vld [vmem:[%s236 + $0x78] sm:$0xf]
      %v359 = vld [vmem:[%s236 + $0x7c] sm:$0xf]
      %v360 = vld [vmem:[%s245] sm:$0xf]
      %v361 = vld [vmem:[%s245 + $0x4] sm:$0xf]
      %v362 = vld [vmem:[%s245 + $0x8] sm:$0xf]
      %v363 = vld [vmem:[%s245 + $0xc] sm:$0xf]
      %v364 = vld [vmem:[%s245 + $0x10] sm:$0xf]
      %v365 = vld [vmem:[%s245 + $0x14] sm:$0xf]
      %v366 = vld [vmem:[%s245 + $0x18] sm:$0xf]
      %v367 = vld [vmem:[%s245 + $0x1c] sm:$0xf]
      %v368 = vld [vmem:[%s245 + $0x20] sm:$0xf]
      %v369 = vld [vmem:[%s245 + $0x24] sm:$0xf]
      %v370 = vld [vmem:[%s245 + $0x28] sm:$0xf]
      %v371 = vld [vmem:[%s245 + $0x2c] sm:$0xf]
      %v372 = vld [vmem:[%s245 + $0x30] sm:$0xf]
      %v373 = vld [vmem:[%s245 + $0x34] sm:$0xf]
      %v374 = vld [vmem:[%s245 + $0x38] sm:$0xf]
      %v375 = vld [vmem:[%s245 + $0x3c] sm:$0xf]
      %v408 = vunpack.c.l.b16 %v328
      %v409 = vunpack.c.l.b16 %v329
      %v410 = vunpack.c.l.b16 %v330
      %v411 = vunpack.c.l.b16 %v331
      %v412 = vunpack.c.l.b16 %v332
      %v413 = vunpack.c.l.b16 %v333
      %v414 = vunpack.c.l.b16 %v334
      %v415 = vunpack.c.l.b16 %v335
      %v416 = vunpack.c.l.b16 %v336
      %v417 = vunpack.c.l.b16 %v337
      %v418 = vunpack.c.l.b16 %v338
      %v419 = vunpack.c.l.b16 %v339
      %v420 = vunpack.c.l.b16 %v340
      %v421 = vunpack.c.l.b16 %v341
      %v422 = vunpack.c.l.b16 %v342
      %v423 = vunpack.c.l.b16 %v343
      %v424 = vunpack.c.l.b16 %v344
      %v425 = vunpack.c.l.b16 %v345
      %v426 = vunpack.c.l.b16 %v346
      %v427 = vunpack.c.l.b16 %v347
      %v428 = vunpack.c.l.b16 %v348
      %v429 = vunpack.c.l.b16 %v349
      %v430 = vunpack.c.l.b16 %v350
      %v431 = vunpack.c.l.b16 %v351
      %v432 = vunpack.c.l.b16 %v352
      %v433 = vunpack.c.l.b16 %v353
      %v434 = vunpack.c.l.b16 %v354
      %v435 = vunpack.c.l.b16 %v355
      %v436 = vunpack.c.l.b16 %v356
      %v437 = vunpack.c.l.b16 %v357
      %v438 = vunpack.c.l.b16 %v358
      %v439 = vunpack.c.l.b16 %v359
      %v440 = vpack.c.b16 %v409, %v408
      %v441 = vpack.c.b16 %v411, %v410
      %v442 = vpack.c.b16 %v413, %v412
      %v443 = vpack.c.b16 %v415, %v414
      %v444 = vpack.c.b16 %v417, %v416
      %v445 = vpack.c.b16 %v419, %v418
      %v446 = vpack.c.b16 %v421, %v420
      %v447 = vpack.c.b16 %v423, %v422
      %v448 = vpack.c.b16 %v425, %v424
      %v449 = vpack.c.b16 %v427, %v426
      %v450 = vpack.c.b16 %v429, %v428
      %v451 = vpack.c.b16 %v431, %v430
      %v452 = vpack.c.b16 %v433, %v432
      %v453 = vpack.c.b16 %v435, %v434
      %v454 = vpack.c.b16 %v437, %v436
      %v455 = vpack.c.b16 %v439, %v438
      %v488 = vunpack.c.l.b16 %v360
      %v489 = vunpack.c.l.b16 %v361
      %v490 = vunpack.c.l.b16 %v362
      %v491 = vunpack.c.l.b16 %v363
      %v492 = vunpack.c.l.b16 %v364
      %v493 = vunpack.c.l.b16 %v365
      %v494 = vunpack.c.l.b16 %v366
      %v495 = vunpack.c.l.b16 %v367
      %v496 = vunpack.c.l.b16 %v368
      %v497 = vunpack.c.l.b16 %v369
      %v498 = vunpack.c.l.b16 %v370
      %v499 = vunpack.c.l.b16 %v371
      %v500 = vunpack.c.l.b16 %v372
      %v501 = vunpack.c.l.b16 %v373
      %v502 = vunpack.c.l.b16 %v374
      %v503 = vunpack.c.l.b16 %v375
      %v504 = vpack.c.b16 %v489, %v488
      %v505 = vpack.c.b16 %v491, %v490
      %v506 = vpack.c.b16 %v493, %v492
      %v507 = vpack.c.b16 %v495, %v494
      %v508 = vpack.c.b16 %v497, %v496
      %v509 = vpack.c.b16 %v499, %v498
      %v510 = vpack.c.b16 %v501, %v500
      %v511 = vpack.c.b16 %v503, %v502
      %520 = vmatprep.subr.bf16.mxu0 0
      %521 = vmatpush1.bf16.msra.mxu0 %v504
      %522 = vmatprep.subr.bf16.mxu0 0
      %523 = vmatpush1.bf16.msra.mxu0 %v505
      %524 = vmatprep.subr.bf16.mxu0 0
      %525 = vmatpush1.bf16.msra.mxu0 %v506
      %526 = vmatprep.subr.bf16.mxu0 0
      %527 = vmatpush1.bf16.msra.mxu0 %v507
      %528 = vmatprep.subr.bf16.mxu0 0
      %529 = vmatpush1.bf16.msra.mxu0 %v508
      %530 = vmatprep.subr.bf16.mxu0 0
      %531 = vmatpush1.bf16.msra.mxu0 %v509
      %532 = vmatprep.subr.bf16.mxu0 0
      %533 = vmatpush1.bf16.msra.mxu0 %v510
      %534 = vmatprep.subr.bf16.mxu0 0
      %535 = vmatpush1.bf16.msra.mxu0 %v511
      %536 = vmatprep.subr.bf16.mxu0 0
      %537 = vmatpush1.bf16.msra.mxu0 0
      %538 = vmatprep.subr.bf16.mxu0 0
      %539 = vmatpush1.bf16.msra.mxu0 0
      %540 = vmatprep.subr.bf16.mxu0 0
      %541 = vmatpush1.bf16.msra.mxu0 0
      %542 = vmatprep.subr.bf16.mxu0 0
      %543 = vmatpush1.bf16.msra.mxu0 0
      %544 = vmatprep.subr.bf16.mxu0 0
      %545 = vmatpush1.bf16.msra.mxu0 0
      %546 = vmatprep.subr.bf16.mxu0 0
      %547 = vmatpush1.bf16.msra.mxu0 0
      %548 = vmatprep.subr.bf16.mxu0 0
      %549 = vmatpush1.bf16.msra.mxu0 0
      %550 = vmatprep.subr.bf16.mxu0 0
      %551 = vmatpush1.bf16.msra.mxu0 0
      %552 = vmatprep.mubr.bf16.mxu0 0
      %553 = vmatmul.mubr.bf16.gmra.mrb[0].mxu0 %v440
      %v554 = vpop.f32.mrb[0].mxu0
      %v555 = vadd.f32 0.0, %v554
      %v556 = vpop.f32.mrb[0].mxu0
      %v557 = vpop.f32.mrb[0].mxu0
      %v558 = vadd.f32 0.0, %v557
      %v559 = vpop.f32.mrb[0].mxu0
      %560 = vmatprep.mubr.bf16.mxu0 0
      %561 = vmatmul.mubr.bf16.gmra.mrb[0].mxu0 %v441
      %v562 = vpop.f32.mrb[0].mxu0
      %v563 = vadd.f32 0.0, %v562
      %v564 = vpop.f32.mrb[0].mxu0
      %v565 = vpop.f32.mrb[0].mxu0
      %v566 = vadd.f32 0.0, %v565
      %v567 = vpop.f32.mrb[0].mxu0
      %568 = vmatprep.mubr.bf16.mxu0 0
      %569 = vmatmul.mubr.bf16.gmra.mrb[0].mxu0 %v442
      %v570 = vpop.f32.mrb[0].mxu0
      %v571 = vadd.f32 0.0, %v570
      %v572 = vpop.f32.mrb[0].mxu0
      %v573 = vpop.f32.mrb[0].mxu0
      %v574 = vadd.f32 0.0, %v573
      %v575 = vpop.f32.mrb[0].mxu0
      %576 = vmatprep.mubr.bf16.mxu0 0
      %577 = vmatmul.mubr.bf16.gmra.mrb[0].mxu0 %v443
      %v578 = vpop.f32.mrb[0].mxu0
      %v579 = vadd.f32 0.0, %v578
      %v580 = vpop.f32.mrb[0].mxu0
      %v581 = vpop.f32.mrb[0].mxu0
      %v582 = vadd.f32 0.0, %v581
      %v583 = vpop.f32.mrb[0].mxu0
      %584 = vmatprep.mubr.bf16.mxu0 0
      %585 = vmatmul.mubr.bf16.gmra.mrb[0].mxu0 %v444
      %v586 = vpop.f32.mrb[0].mxu0
      %v587 = vadd.f32 0.0, %v586
      %v588 = vpop.f32.mrb[0].mxu0
      %v589 = vpop.f32.mrb[0].mxu0
      %v590 = vadd.f32 0.0, %v589
      %v591 = vpop.f32.mrb[0].mxu0
      %592 = vmatprep.mubr.bf16.mxu0 0
      %593 = vmatmul.mubr.bf16.gmra.mrb[0].mxu0 %v445
      %v594 = vpop.f32.mrb[0].mxu0
      %v595 = vadd.f32 0.0, %v594
      %v596 = vpop.f32.mrb[0].mxu0
      %v597 = vpop.f32.mrb[0].mxu0
      %v598 = vadd.f32 0.0, %v597
      %v599 = vpop.f32.mrb[0].mxu0
      %600 = vmatprep.mubr.bf16.mxu0 0
      %601 = vmatmul.mubr.bf16.gmra.mrb[0].mxu0 %v446
      %v602 = vpop.f32.mrb[0].mxu0
      %v603 = vadd.f32 0.0, %v602
      %v604 = vpop.f32.mrb[0].mxu0
      %v605 = vpop.f32.mrb[0].mxu0
      %v606 = vadd.f32 0.0, %v605
      %v607 = vpop.f32.mrb[0].mxu0
      %608 = vmatprep.mubr.bf16.mxu0 0
      %609 = vmatmul.mubr.bf16.gmra.mrb[0].mxu0 %v447
      %v610 = vpop.f32.mrb[0].mxu0
      %v611 = vadd.f32 0.0, %v610
      %v612 = vpop.f32.mrb[0].mxu0
      %v613 = vpop.f32.mrb[0].mxu0
      %v614 = vadd.f32 0.0, %v613
      %v615 = vpop.f32.mrb[0].mxu0
      %616 = vmatprep.mubr.bf16.mxu0 0
      %617 = vmatmul.mubr.bf16.gmra.mrb[0].mxu0 %v448
      %v618 = vpop.f32.mrb[0].mxu0
      %v619 = vadd.f32 0.0, %v618
      %v620 = vpop.f32.mrb[0].mxu0
      %v621 = vpop.f32.mrb[0].mxu0
      %v622 = vadd.f32 0.0, %v621
      %v623 = vpop.f32.mrb[0].mxu0
      %624 = vmatprep.mubr.bf16.mxu0 0
      %625 = vmatmul.mubr.bf16.gmra.mrb[0].mxu0 %v449
      %v626 = vpop.f32.mrb[0].mxu0
      %v627 = vadd.f32 0.0, %v626
      %v628 = vpop.f32.mrb[0].mxu0
      %v629 = vpop.f32.mrb[0].mxu0
      %v630 = vadd.f32 0.0, %v629
      %v631 = vpop.f32.mrb[0].mxu0
      %632 = vmatprep.mubr.bf16.mxu0 0
      %633 = vmatmul.mubr.bf16.gmra.mrb[0].mxu0 %v450
      %v634 = vpop.f32.mrb[0].mxu0
      %v635 = vadd.f32 0.0, %v634
      %v636 = vpop.f32.mrb[0].mxu0
      %v637 = vpop.f32.mrb[0].mxu0
      %v638 = vadd.f32 0.0, %v637
      %v639 = vpop.f32.mrb[0].mxu0
      %640 = vmatprep.mubr.bf16.mxu0 0
      %641 = vmatmul.mubr.bf16.gmra.mrb[0].mxu0 %v451
      %v642 = vpop.f32.mrb[0].mxu0
      %v643 = vadd.f32 0.0, %v642
      %v644 = vpop.f32.mrb[0].mxu0
      %v645 = vpop.f32.mrb[0].mxu0
      %v646 = vadd.f32 0.0, %v645
      %v647 = vpop.f32.mrb[0].mxu0
      %648 = vmatprep.mubr.bf16.mxu0 0
      %649 = vmatmul.mubr.bf16.gmra.mrb[0].mxu0 %v452
      %v650 = vpop.f32.mrb[0].mxu0
      %v651 = vadd.f32 0.0, %v650
      %v652 = vpop.f32.mrb[0].mxu0
      %v653 = vpop.f32.mrb[0].mxu0
      %v654 = vadd.f32 0.0, %v653
      %v655 = vpop.f32.mrb[0].mxu0
      %656 = vmatprep.mubr.bf16.mxu0 0
      %657 = vmatmul.mubr.bf16.gmra.mrb[0].mxu0 %v453
      %v658 = vpop.f32.mrb[0].mxu0
      %v659 = vadd.f32 0.0, %v658
      %v660 = vpop.f32.mrb[0].mxu0
      %v661 = vpop.f32.mrb[0].mxu0
      %v662 = vadd.f32 0.0, %v661
      %v663 = vpop.f32.mrb[0].mxu0
      %664 = vmatprep.mubr.bf16.mxu0 0
      %665 = vmatmul.mubr.bf16.gmra.mrb[0].mxu0 %v454
      %v666 = vpop.f32.mrb[0].mxu0
      %v667 = vadd.f32 0.0, %v666
      %v668 = vpop.f32.mrb[0].mxu0
      %v669 = vpop.f32.mrb[0].mxu0
      %v670 = vadd.f32 0.0, %v669
      %v671 = vpop.f32.mrb[0].mxu0
      %672 = vmatprep.mubr.bf16.mxu0 0
      %673 = vmatmul.mubr.bf16.gmra.mrb[0].mxu0 %v455
      %v674 = vpop.f32.mrb[0].mxu0
      %v675 = vadd.f32 0.0, %v674
      %v676 = vpop.f32.mrb[0].mxu0
      %v677 = vpop.f32.mrb[0].mxu0
      %v678 = vadd.f32 0.0, %v677
      %v679 = vpop.f32.mrb[0].mxu0
      %680 = vdwg.mxu0
      %v681 = vadd.f32 %v296, %v555
      %v682 = vadd.f32 %v297, %v558
      %v683 = vadd.f32 %v298, %v563
      %v684 = vadd.f32 %v299, %v566
      %v685 = vadd.f32 %v300, %v571
      %v686 = vadd.f32 %v301, %v574
      %v687 = vadd.f32 %v302, %v579
      %v688 = vadd.f32 %v303, %v582
      %v689 = vadd.f32 %v304, %v587
      %v690 = vadd.f32 %v305, %v590
      %v691 = vadd.f32 %v306, %v595
      %v692 = vadd.f32 %v307, %v598
      %v693 = vadd.f32 %v308, %v603
      %v694 = vadd.f32 %v309, %v606
      %v695 = vadd.f32 %v310, %v611
      %v696 = vadd.f32 %v311, %v614
      %v697 = vadd.f32 %v312, %v619
      %v698 = vadd.f32 %v313, %v622
      %v699 = vadd.f32 %v314, %v627
      %v700 = vadd.f32 %v315, %v630
      %v701 = vadd.f32 %v316, %v635
      %v702 = vadd.f32 %v317, %v638
      %v703 = vadd.f32 %v318, %v643
      %v704 = vadd.f32 %v319, %v646
      %v705 = vadd.f32 %v320, %v651
      %v706 = vadd.f32 %v321, %v654
      %v707 = vadd.f32 %v322, %v659
      %v708 = vadd.f32 %v323, %v662
      %v709 = vadd.f32 %v324, %v667
      %v710 = vadd.f32 %v325, %v670
      %v711 = vadd.f32 %v326, %v675
      %v712 = vadd.f32 %v327, %v678
      %713 = vst [vmem:[#allocation2] sm:$0xff] %v681
      %714 = vst [vmem:[#allocation2 + $0x8] sm:$0xff] %v682
      %715 = vst [vmem:[#allocation2 + $0x10] sm:$0xff] %v683
      %716 = vst [vmem:[#allocation2 + $0x18] sm:$0xff] %v684
      %717 = vst [vmem:[#allocation2 + $0x20] sm:$0xff] %v685
      %718 = vst [vmem:[#allocation2 + $0x28] sm:$0xff] %v686
      %719 = vst [vmem:[#allocation2 + $0x30] sm:$0xff] %v687
      %720 = vst [vmem:[#allocation2 + $0x38] sm:$0xff] %v688
      %721 = vst [vmem:[#allocation2 + $0x40] sm:$0xff] %v689
      %722 = vst [vmem:[#allocation2 + $0x48] sm:$0xff] %v690
      %723 = vst [vmem:[#allocation2 + $0x50] sm:$0xff] %v691
      %724 = vst [vmem:[#allocation2 + $0x58] sm:$0xff] %v692
      %725 = vst [vmem:[#allocation2 + $0x60] sm:$0xff] %v693
      %726 = vst [vmem:[#allocation2 + $0x68] sm:$0xff] %v694
      %727 = vst [vmem:[#allocation2 + $0x70] sm:$0xff] %v695
      %728 = vst [vmem:[#allocation2 + $0x78] sm:$0xff] %v696
      %729 = vst [vmem:[#allocation2 + $0x80] sm:$0xff] %v697
      %730 = vst [vmem:[#allocation2 + $0x88] sm:$0xff] %v698
      %731 = vst [vmem:[#allocation2 + $0x90] sm:$0xff] %v699
      %732 = vst [vmem:[#allocation2 + $0x98] sm:$0xff] %v700
      %733 = vst [vmem:[#allocation2 + $0xa0] sm:$0xff] %v701
      %734 = vst [vmem:[#allocation2 + $0xa8] sm:$0xff] %v702
      %735 = vst [vmem:[#allocation2 + $0xb0] sm:$0xff] %v703
      %736 = vst [vmem:[#allocation2 + $0xb8] sm:$0xff] %v704
      %737 = vst [vmem:[#allocation2 + $0xc0] sm:$0xff] %v705
      %738 = vst [vmem:[#allocation2 + $0xc8] sm:$0xff] %v706
      %739 = vst [vmem:[#allocation2 + $0xd0] sm:$0xff] %v707
      %740 = vst [vmem:[#allocation2 + $0xd8] sm:$0xff] %v708
      %741 = vst [vmem:[#allocation2 + $0xe0] sm:$0xff] %v709
      %742 = vst [vmem:[#allocation2 + $0xe8] sm:$0xff] %v710
      %743 = vst [vmem:[#allocation2 + $0xf0] sm:$0xff] %v711
      %744 = vst [vmem:[#allocation2 + $0xf8] sm:$0xff] %v712
      // Predicated region
      $region37: #{bottleneck_forward.3} parent=31 // pred_check
        %p745 = pneg %p260
      $region38: #{bottleneck_forward.3} parent=31 // pred_check_branch
        %747 = sbr.rel (%p745) target = $region40
      $region39: #{bottleneck_forward.3} parent=31 // pred_region
        %v748 = vld [vmem:[#allocation2] sm:$0xff]
        %v749 = vld [vmem:[#allocation2 + $0x8] sm:$0xff]
        %v750 = vld [vmem:[#allocation2 + $0x10] sm:$0xff]
        %v751 = vld [vmem:[#allocation2 + $0x18] sm:$0xff]
        %v752 = vld [vmem:[#allocation2 + $0x20] sm:$0xff]
        %v753 = vld [vmem:[#allocation2 + $0x28] sm:$0xff]
        %v754 = vld [vmem:[#allocation2 + $0x30] sm:$0xff]
        %v755 = vld [vmem:[#allocation2 + $0x38] sm:$0xff]
        %v756 = vld [vmem:[#allocation2 + $0x40] sm:$0xff]
        %v757 = vld [vmem:[#allocation2 + $0x48] sm:$0xff]
        %v758 = vld [vmem:[#allocation2 + $0x50] sm:$0xff]
        %v759 = vld [vmem:[#allocation2 + $0x58] sm:$0xff]
        %v760 = vld [vmem:[#allocation2 + $0x60] sm:$0xff]
        %v761 = vld [vmem:[#allocation2 + $0x68] sm:$0xff]
        %v762 = vld [vmem:[#allocation2 + $0x70] sm:$0xff]
        %v763 = vld [vmem:[#allocation2 + $0x78] sm:$0xff]
        %v764 = vld [vmem:[#allocation2 + $0x80] sm:$0xff]
        %v765 = vld [vmem:[#allocation2 + $0x88] sm:$0xff]
        %v766 = vld [vmem:[#allocation2 + $0x90] sm:$0xff]
        %v767 = vld [vmem:[#allocation2 + $0x98] sm:$0xff]
        %v768 = vld [vmem:[#allocation2 + $0xa0] sm:$0xff]
        %v769 = vld [vmem:[#allocation2 + $0xa8] sm:$0xff]
        %v770 = vld [vmem:[#allocation2 + $0xb0] sm:$0xff]
        %v771 = vld [vmem:[#allocation2 + $0xb8] sm:$0xff]
        %v772 = vld [vmem:[#allocation2 + $0xc0] sm:$0xff]
        %v773 = vld [vmem:[#allocation2 + $0xc8] sm:$0xff]
        %v774 = vld [vmem:[#allocation2 + $0xd0] sm:$0xff]
        %v775 = vld [vmem:[#allocation2 + $0xd8] sm:$0xff]
        %v776 = vld [vmem:[#allocation2 + $0xe0] sm:$0xff]
        %v777 = vld [vmem:[#allocation2 + $0xe8] sm:$0xff]
        %v778 = vld [vmem:[#allocation2 + $0xf0] sm:$0xff]
        %v779 = vld [vmem:[#allocation2 + $0xf8] sm:$0xff]
        %v780 = vld [vmem:[%s249] sm:$0x1]
        %v782 = vlaneseq
        %v783 = vshrl.u32 %v782, 7
        %v784 = vsub.s32 0, %v783
        %v785 = vrot.slane %v780, %v784
        %v787 = vadd.f32 %v748, %v785
        %v788 = vadd.f32 %v749, %v785
        %v789 = vadd.f32 %v750, %v785
        %v790 = vadd.f32 %v751, %v785
        %v791 = vadd.f32 %v752, %v785
        %v792 = vadd.f32 %v753, %v785
        %v793 = vadd.f32 %v754, %v785
        %v794 = vadd.f32 %v755, %v785
        %v795 = vadd.f32 %v756, %v785
        %v796 = vadd.f32 %v757, %v785
        %v797 = vadd.f32 %v758, %v785
        %v798 = vadd.f32 %v759, %v785
        %v799 = vadd.f32 %v760, %v785
        %v800 = vadd.f32 %v761, %v785
        %v801 = vadd.f32 %v762, %v785
        %v802 = vadd.f32 %v763, %v785
        %v803 = vadd.f32 %v764, %v785
        %v804 = vadd.f32 %v765, %v785
        %v805 = vadd.f32 %v766, %v785
        %v806 = vadd.f32 %v767, %v785
        %v807 = vadd.f32 %v768, %v785
        %v808 = vadd.f32 %v769, %v785
        %v809 = vadd.f32 %v770, %v785
        %v810 = vadd.f32 %v771, %v785
        %v811 = vadd.f32 %v772, %v785
        %v812 = vadd.f32 %v773, %v785
        %v813 = vadd.f32 %v774, %v785
        %v814 = vadd.f32 %v775, %v785
        %v815 = vadd.f32 %v776, %v785
        %v816 = vadd.f32 %v777, %v785
        %v817 = vadd.f32 %v778, %v785
        %v818 = vadd.f32 %v779, %v785
        %v819 = vmax.f32 %v787, 0.0
        %v820 = vmax.f32 %v788, 0.0
        %v821 = vmax.f32 %v789, 0.0
        %v822 = vmax.f32 %v790, 0.0
        %v823 = vmax.f32 %v791, 0.0
        %v824 = vmax.f32 %v792, 0.0
        %v825 = vmax.f32 %v793, 0.0
        %v826 = vmax.f32 %v794, 0.0
        %v827 = vmax.f32 %v795, 0.0
        %v828 = vmax.f32 %v796, 0.0
        %v829 = vmax.f32 %v797, 0.0
        %v830 = vmax.f32 %v798, 0.0
        %v831 = vmax.f32 %v799, 0.0
        %v832 = vmax.f32 %v800, 0.0
        %v833 = vmax.f32 %v801, 0.0
        %v834 = vmax.f32 %v802, 0.0
        %v835 = vmax.f32 %v803, 0.0
        %v836 = vmax.f32 %v804, 0.0
        %v837 = vmax.f32 %v805, 0.0
        %v838 = vmax.f32 %v806, 0.0
        %v839 = vmax.f32 %v807, 0.0
        %v840 = vmax.f32 %v808, 0.0
        %v841 = vmax.f32 %v809, 0.0
        %v842 = vmax.f32 %v810, 0.0
        %v843 = vmax.f32 %v811, 0.0
        %v844 = vmax.f32 %v812, 0.0
        %v845 = vmax.f32 %v813, 0.0
        %v846 = vmax.f32 %v814, 0.0
        %v847 = vmax.f32 %v815, 0.0
        %v848 = vmax.f32 %v816, 0.0
        %v849 = vmax.f32 %v817, 0.0
        %v850 = vmax.f32 %v818, 0.0
        %v851 = vpack.c.bf16 %v820, %v819
        %v852 = vpack.c.bf16 %v822, %v821
        %v853 = vpack.c.bf16 %v824, %v823
        %v854 = vpack.c.bf16 %v826, %v825
        %v855 = vpack.c.bf16 %v828, %v827
        %v856 = vpack.c.bf16 %v830, %v829
        %v857 = vpack.c.bf16 %v832, %v831
        %v858 = vpack.c.bf16 %v834, %v833
        %v859 = vpack.c.bf16 %v836, %v835
        %v860 = vpack.c.bf16 %v838, %v837
        %v861 = vpack.c.bf16 %v840, %v839
        %v862 = vpack.c.bf16 %v842, %v841
        %v863 = vpack.c.bf16 %v844, %v843
        %v864 = vpack.c.bf16 %v846, %v845
        %v865 = vpack.c.bf16 %v848, %v847
        %v866 = vpack.c.bf16 %v850, %v849
        %v883 = vunpack.c.l.b16 %v851
        %v884 = vunpack.c.h.b16 %v851
        %v885 = vunpack.c.l.b16 %v852
        %v886 = vunpack.c.h.b16 %v852
        %v887 = vunpack.c.l.b16 %v853
        %v888 = vunpack.c.h.b16 %v853
        %v889 = vunpack.c.l.b16 %v854
        %v890 = vunpack.c.h.b16 %v854
        %v891 = vunpack.c.l.b16 %v855
        %v892 = vunpack.c.h.b16 %v855
        %v893 = vunpack.c.l.b16 %v856
        %v894 = vunpack.c.h.b16 %v856
        %v895 = vunpack.c.l.b16 %v857
        %v896 = vunpack.c.h.b16 %v857
        %v897 = vunpack.c.l.b16 %v858
        %v898 = vunpack.c.h.b16 %v858
        %v899 = vunpack.c.l.b16 %v859
        %v900 = vunpack.c.h.b16 %v859
        %v901 = vunpack.c.l.b16 %v860
        %v902 = vunpack.c.h.b16 %v860
        %v903 = vunpack.c.l.b16 %v861
        %v904 = vunpack.c.h.b16 %v861
        %v905 = vunpack.c.l.b16 %v862
        %v906 = vunpack.c.h.b16 %v862
        %v907 = vunpack.c.l.b16 %v863
        %v908 = vunpack.c.h.b16 %v863
        %v909 = vunpack.c.l.b16 %v864
        %v910 = vunpack.c.h.b16 %v864
        %v911 = vunpack.c.l.b16 %v865
        %v912 = vunpack.c.h.b16 %v865
        %v913 = vunpack.c.l.b16 %v866
        %v914 = vunpack.c.h.b16 %v866
        %v915 = vpack.c.b16 %v883, %v883
        %v916 = vpack.c.b16 %v884, %v884
        %v917 = vpack.c.b16 %v885, %v885
        %v918 = vpack.c.b16 %v886, %v886
        %v919 = vpack.c.b16 %v887, %v887
        %v920 = vpack.c.b16 %v888, %v888
        %v921 = vpack.c.b16 %v889, %v889
        %v922 = vpack.c.b16 %v890, %v890
        %v923 = vpack.c.b16 %v891, %v891
        %v924 = vpack.c.b16 %v892, %v892
        %v925 = vpack.c.b16 %v893, %v893
        %v926 = vpack.c.b16 %v894, %v894
        %v927 = vpack.c.b16 %v895, %v895
        %v928 = vpack.c.b16 %v896, %v896
        %v929 = vpack.c.b16 %v897, %v897
        %v930 = vpack.c.b16 %v898, %v898
        %v931 = vpack.c.b16 %v899, %v899
        %v932 = vpack.c.b16 %v900, %v900
        %v933 = vpack.c.b16 %v901, %v901
        %v934 = vpack.c.b16 %v902, %v902
        %v935 = vpack.c.b16 %v903, %v903
        %v936 = vpack.c.b16 %v904, %v904
        %v937 = vpack.c.b16 %v905, %v905
        %v938 = vpack.c.b16 %v906, %v906
        %v939 = vpack.c.b16 %v907, %v907
        %v940 = vpack.c.b16 %v908, %v908
        %v941 = vpack.c.b16 %v909, %v909
        %v942 = vpack.c.b16 %v910, %v910
        %v943 = vpack.c.b16 %v911, %v911
        %v944 = vpack.c.b16 %v912, %v912
        %v945 = vpack.c.b16 %v913, %v913
        %v946 = vpack.c.b16 %v914, %v914
        %979 = vst [vmem:[%s257] sm:$0xf] %v915
        %980 = vst [vmem:[%s257 + $0x4] sm:$0xf] %v916
        %981 = vst [vmem:[%s257 + $0x8] sm:$0xf] %v917
        %982 = vst [vmem:[%s257 + $0xc] sm:$0xf] %v918
        %983 = vst [vmem:[%s257 + $0x10] sm:$0xf] %v919
        %984 = vst [vmem:[%s257 + $0x14] sm:$0xf] %v920
        %985 = vst [vmem:[%s257 + $0x18] sm:$0xf] %v921
        %986 = vst [vmem:[%s257 + $0x1c] sm:$0xf] %v922
        %987 = vst [vmem:[%s257 + $0x20] sm:$0xf] %v923
        %988 = vst [vmem:[%s257 + $0x24] sm:$0xf] %v924
        %989 = vst [vmem:[%s257 + $0x28] sm:$0xf] %v925
        %990 = vst [vmem:[%s257 + $0x2c] sm:$0xf] %v926
        %991 = vst [vmem:[%s257 + $0x30] sm:$0xf] %v927
        %992 = vst [vmem:[%s257 + $0x34] sm:$0xf] %v928
        %993 = vst [vmem:[%s257 + $0x38] sm:$0xf] %v929
        %994 = vst [vmem:[%s257 + $0x3c] sm:$0xf] %v930
        %995 = vst [vmem:[%s257 + $0x40] sm:$0xf] %v931
        %996 = vst [vmem:[%s257 + $0x44] sm:$0xf] %v932
        %997 = vst [vmem:[%s257 + $0x48] sm:$0xf] %v933
        %998 = vst [vmem:[%s257 + $0x4c] sm:$0xf] %v934
        %999 = vst [vmem:[%s257 + $0x50] sm:$0xf] %v935
        %1000 = vst [vmem:[%s257 + $0x54] sm:$0xf] %v936
        %1001 = vst [vmem:[%s257 + $0x58] sm:$0xf] %v937
        %1002 = vst [vmem:[%s257 + $0x5c] sm:$0xf] %v938
        %1003 = vst [vmem:[%s257 + $0x60] sm:$0xf] %v939
        %1004 = vst [vmem:[%s257 + $0x64] sm:$0xf] %v940
        %1005 = vst [vmem:[%s257 + $0x68] sm:$0xf] %v941
        %1006 = vst [vmem:[%s257 + $0x6c] sm:$0xf] %v942
        %1007 = vst [vmem:[%s257 + $0x70] sm:$0xf] %v943
        %1008 = vst [vmem:[%s257 + $0x74] sm:$0xf] %v944
        %1009 = vst [vmem:[%s257 + $0x78] sm:$0xf] %v945
        %1010 = vst [vmem:[%s257 + $0x7c] sm:$0xf] %v946
      $region40: #{bottleneck_forward.3} parent=31 // pred_fallthru
        _
      %s1011 = smul.u32 32, %s19
      %p1012 = scmp.lt.s32.totalorder %s1011, 63
      %s1013 = scalar_select %p1012, %s1011, 63
      %p1014 = scmp.lt.s32.totalorder %s20, 0
      %s1015 = scalar_select %p1014, %s20, 0
      %s1016 = sadd.s32 %s1015, %s1013
      %s1017 = smul.addr %s1016, 4
      %s1018 = scalar_lea.vmem %s3, %s1017
      // Predicated region
      $region41: #{bottleneck_forward.3} parent=31 // pred_check
        %p1019 = pneg %p135
      $region42: #{bottleneck_forward.3} parent=31 // pred_check_branch
        %1021 = sbr.rel (%p1019) target = $region44
      $region43: #{bottleneck_forward.3} parent=31 // pred_region
        %s1022 = smul.u32 32, %s19
      $region44: #{bottleneck_forward.3} parent=31 // pred_fallthru
        _
    $region32: #{bottleneck_forward.3} parent=5 // pred_fallthru
      _
    %p1023 = scmp.le.s32.totalorder 2, %s9
    // Predicated region
    $region45: #{bottleneck_forward.3} parent=5 // pred_check
      %p1024 = pneg %p1023
    $region46: #{bottleneck_forward.3} parent=5 // pred_check_branch
      %1026 = sbr.rel (%p1024) target = $region48
    $region47: #{bottleneck_forward.3} parent=5 // pred_region
      %s1027 = ssub.s32 %s9, 2
      // Predicated region
      $region49: #{bottleneck_forward.3} parent=47 // pred_check
        %p1028 = pneg %p141
      $region50: #{bottleneck_forward.3} parent=47 // pred_check_branch
        %1030 = sbr.rel (%p1028) target = $region52
      $region51: #{bottleneck_forward.3} parent=47 // pred_region
        %s1031 = smul.u32 32, %s22
        %p1032 = scmp.lt.s32.totalorder %s1031, 63
        %s1033 = scalar_select %p1032, %s1031, 63
        %p1034 = scmp.lt.s32.totalorder %s23, 0
        %s1035 = scalar_select %p1034, %s23, 0
        %s1036 = sadd.s32 %s1035, %s1033
        %s1037 = smul.addr %s1036, 4
        %s1038 = scalar_lea.vmem %s3, %s1037
      $region52: #{bottleneck_forward.3} parent=47 // pred_fallthru
        _
    $region48: #{bottleneck_forward.3} parent=5 // pred_fallthru
      _
  $region6: #{bottleneck_forward.3} parent=0 // loop_footer
    %s13 = sadd.s32 1, %s9
  $region7: #{bottleneck_forward.3} parent=0 // loop_footer_branch
    %8 = sbr.rel target = $region3
  $region8: #{bottleneck_forward.3} parent=0 // loop_exit
    _

// kernel: bottleneck_forward.4
$region0: #{bottleneck_forward.4}
  #allocation0 [shape = 'u32[]', space=smem, size = 0x4, offset = 0x4, fixed_abs, tag = 'smem constant byte address 0x4 - core index']
  #allocation1 [shape = 'u32[144,128]{1,0:T(1,128)}', space=vmem, size = 0x12000, scoped, tag = 'internal scratch']
  #allocation2 [shape = 'f32[256,128]{1,0:T(8,128)}', space=vmem, size = 0x20000, scoped, tag = 'scratch operand']
  %s0 = inlined_call_operand.vmem [shape: bf16[512,256], index: 0, kind: input, shape index: {}]
  %s1 = inlined_call_operand.vmem [shape: bf16[256,128], index: 1, kind: input, shape index: {}]
  %s2 = inlined_call_operand.vmem [shape: f32[1,128], index: 2, kind: input, shape index: {}]
  %s3 = inlined_call_operand.vmem [shape: bf16[512,128], index: 3, kind: output, shape index: {}]
  %s4 = sld [smem:[#allocation0]]
  $region53: #{bottleneck_forward.4} parent=0
    _
  %s6 = ssub.s32 1, %s4
  %s7 = scalar_select 0, %s6, %s4
  loop: start=0, step=1, limit=4
  $region2: #{bottleneck_forward.4} parent=0 // loop_pre_header
    _
  $region3: #{bottleneck_forward.4} parent=0 // loop_header
    %s9 = sphi 0, %s13
    %p10 = scmp.ge.s32.totalorder %s9, 4
    %s16 = sphi 0, %s35
    %s17 = sphi 0, %s31
    %s18 = sphi 0, %s27
    %s19 = sphi 0, %s16
    %s20 = sphi 0, %s17
    %s21 = sphi 0, %s18
    %s22 = sphi 0, %s19
    %s23 = sphi 0, %s20
    %s24 = sphi 0, %s21
    %s40 = sphi 0, %s42
    %s43 = sphi 0, %s40
    %s44 = sphi 0, %s43
    %s60 = sphi 0, %s44
    %s68 = sphi 0, %s70
    %s71 = sphi 0, %s68
    %s72 = sphi 0, %s71
    %s88 = sphi 0, %s72
    %s94 = sphi 0, %s96
    %s97 = sphi 0, %s94
    %s98 = sphi 0, %s97
    %s114 = sphi 0, %s98
    %s122 = sphi 0, %s124
    %s125 = sphi 0, %s122
    %s126 = sphi 0, %s125
    %s142 = sphi 0, %s126
  $region4: #{bottleneck_forward.4} parent=0 // loop_header_branch
    %12 = sbr.rel (%p10) target = $region8
  $region5: #{bottleneck_forward.4} parent=0 // loop_body
    %s14 = ssub.s32 %s9, 1
    %s15 = ssub.s32 %s9, 2
    %s25 = sadd.s32 1, %s18
    %p26 = scmp.ge.s32.totalorder %s25, 1
    %s27 = scalar_select %p26, 0, %s25
    %s28 = sadd.s32 1, %s17
    %s29 = scalar_select %p26, %s28, %s17
    %p30 = scmp.ge.s32.totalorder %s29, 1
    %s31 = scalar_select %p30, 0, %s29
    %s32 = sadd.s32 1, %s16
    %s33 = scalar_select %p30, %s32, %s16
    %p34 = scmp.ge.s32.totalorder %s33, 2
    %s35 = scalar_select %p34, 0, %s33
    %s36 = ssub.s32 %s16, %s35
    %s37 = ssub.s32 %s18, %s27
    %s38 = sor.u32 %s36, %s37
    %p39 = scmp.eq.s32.totalorder %s38, 0
    %s41 = sadd.s32 %s40, 1
    %s42 = scalar_select %p39, %s40, %s41
    %p45 = pneg %p39
    %p46 = scmp.eq.s32.totalorder %s9, 1
    %p47 = por %p45, %p46
    %p48 = scmp.ne.s32.totalorder %s40, %s43
    %p49 = scmp.eq.s32.totalorder %s9, 0
    %p50 = por %p48, %p49
    %p51 = scmp.ne.s32.totalorder %s40, %s43
    %p52 = scmp.eq.s32.totalorder %s14, 1
    %p53 = por %p51, %p52
    %p54 = scmp.ne.s32.totalorder %s43, %s44
    %p55 = scmp.eq.s32.totalorder %s14, 0
    %p56 = por %p54, %p55
    %p57 = scmp.ne.s32.totalorder %s43, %s44
    %p58 = scmp.eq.s32.totalorder %s15, 1
    %p59 = por %p57, %p58
    %p61 = scmp.ne.s32.totalorder %s44, %s60
    %p62 = scmp.eq.s32.totalorder %s15, 0
    %p63 = por %p61, %p62
    %s64 = ssub.s32 %s18, %s27
    %s65 = ssub.s32 %s17, %s31
    %s66 = sor.u32 %s64, %s65
    %p67 = scmp.eq.s32.totalorder %s66, 0
    %s69 = sadd.s32 %s68, 1
    %s70 = scalar_select %p67, %s68, %s69
    %p73 = pneg %p67
    %p74 = scmp.eq.s32.totalorder %s9, 1
    %p75 = por %p73, %p74
    %p76 = scmp.ne.s32.totalorder %s68, %s71
    %p77 = scmp.eq.s32.totalorder %s9, 0
    %p78 = por %p76, %p77
    %p79 = scmp.ne.s32.totalorder %s68, %s71
    %p80 = scmp.eq.s32.totalorder %s14, 1
    %p81 = por %p79, %p80
    %p82 = scmp.ne.s32.totalorder %s71, %s72
    %p83 = scmp.eq.s32.totalorder %s14, 0
    %p84 = por %p82, %p83
    %p85 = scmp.ne.s32.totalorder %s71, %s72
    %p86 = scmp.eq.s32.totalorder %s15, 1
    %p87 = por %p85, %p86
    %p89 = scmp.ne.s32.totalorder %s72, %s88
    %p90 = scmp.eq.s32.totalorder %s15, 0
    %p91 = por %p89, %p90
    %s92 = ssub.s32 %s17, %s31
    %p93 = scmp.eq.s32.totalorder %s92, 0
    %s95 = sadd.s32 %s94, 1
    %s96 = scalar_select %p93, %s94, %s95
    %p99 = pneg %p93
    %p100 = scmp.eq.s32.totalorder %s9, 1
    %p101 = por %p99, %p100
    %p102 = scmp.ne.s32.totalorder %s94, %s97
    %p103 = scmp.eq.s32.totalorder %s9, 0
    %p104 = por %p102, %p103
    %p105 = scmp.ne.s32.totalorder %s94, %s97
    %p106 = scmp.eq.s32.totalorder %s14, 1
    %p107 = por %p105, %p106
    %p108 = scmp.ne.s32.totalorder %s97, %s98
    %p109 = scmp.eq.s32.totalorder %s14, 0
    %p110 = por %p108, %p109
    %p111 = scmp.ne.s32.totalorder %s97, %s98
    %p112 = scmp.eq.s32.totalorder %s15, 1
    %p113 = por %p111, %p112
    %p115 = scmp.ne.s32.totalorder %s98, %s114
    %p116 = scmp.eq.s32.totalorder %s15, 0
    %p117 = por %p115, %p116
    %s118 = ssub.s32 %s16, %s35
    %s119 = ssub.s32 %s17, %s31
    %s120 = sor.u32 %s118, %s119
    %p121 = scmp.eq.s32.totalorder %s120, 0
    %s123 = sadd.s32 %s122, 1
    %s124 = scalar_select %p121, %s122, %s123
    %p127 = pneg %p121
    %p128 = scmp.eq.s32.totalorder %s9, 1
    %p129 = por %p127, %p128
    %p130 = scmp.ne.s32.totalorder %s122, %s125
    %p131 = scmp.eq.s32.totalorder %s9, 0
    %p132 = por %p130, %p131
    %p133 = scmp.ne.s32.totalorder %s122, %s125
    %p134 = scmp.eq.s32.totalorder %s14, 1
    %p135 = por %p133, %p134
    %p136 = scmp.ne.s32.totalorder %s125, %s126
    %p137 = scmp.eq.s32.totalorder %s14, 0
    %p138 = por %p136, %p137
    %p139 = scmp.ne.s32.totalorder %s125, %s126
    %p140 = scmp.eq.s32.totalorder %s15, 1
    %p141 = por %p139, %p140
    %p143 = scmp.ne.s32.totalorder %s126, %s142
    %p144 = scmp.eq.s32.totalorder %s15, 0
    %p145 = por %p143, %p144
    %p146 = scmp.le.s32.totalorder 1, %s9
    %p147 = scmp.lt.s32.totalorder %s9, 3
    %p148 = pnand %p146, %p147
    %p149 = pneg %p148
    // Predicated region
    $region9: #{bottleneck_forward.4} parent=5 // pred_check
      _
    $region10: #{bottleneck_forward.4} parent=5 // pred_check_branch
      %151 = sbr.rel (%p148) target = $region12
    $region11: #{bottleneck_forward.4} parent=5 // pred_region
      %s152 = ssub.s32 %s9, 1
      // Predicated region
      $region13: #{bottleneck_forward.4} parent=11 // pred_check
        %p153 = pneg %p84
      $region14: #{bottleneck_forward.4} parent=11 // pred_check_branch
        %155 = sbr.rel (%p153) target = $region16
      $region15: #{bottleneck_forward.4} parent=11 // pred_region
        %s156 = smul.u32 32, %s21
        %p157 = scmp.lt.s32.totalorder %s156, 31
        %s158 = scalar_select %p157, %s156, 31
        %p159 = scmp.lt.s32.totalorder %s20, 0
        %s160 = scalar_select %p159, %s20, 0
        %s161 = sadd.s32 %s160, %s158
        %s162 = smul.addr %s161, 4
        %s163 = scalar_lea.vmem %s1, %s162
        %s164 = smul.u32 32, %s21
      $region16: #{bottleneck_forward.4} parent=11 // pred_fallthru
        _
      // Predicated region
      $region17: #{bottleneck_forward.4} parent=11 // pred_check
        %p165 = pneg %p110
      $region18: #{bottleneck_forward.4} parent=11 // pred_check_branch
        %167 = sbr.rel (%p165) target = $region20
      $region19: #{bottleneck_forward.4} parent=11 // pred_region
        %p168 = scmp.lt.s32.totalorder %s20, 0
        %s169 = scalar_select %p168, %s20, 0
        %s170 = scalar_lea.vmem %s2, %s169
      $region20: #{bottleneck_forward.4} parent=11 // pred_fallthru
        _
    $region12: #{bottleneck_forward.4} parent=5 // pred_fallthru
      _
    %p171 = scmp.lt.s32.totalorder %s9, 2
    // Predicated region
    $region21: #{bottleneck_forward.4} parent=5 // pred_check
      %p172 = pneg %p171
    $region22: #{bottleneck_forward.4} parent=5 // pred_check_branch
      %174 = sbr.rel (%p172) target = $region24
    $region23: #{bottleneck_forward.4} parent=5 // pred_region
      // Predicated region
      $region25: #{bottleneck_forward.4} parent=23 // pred_check
        %p175 = pneg %p50
      $region26: #{bottleneck_forward.4} parent=23 // pred_check_branch
        %177 = sbr.rel (%p175) target = $region28
      $region27: #{bottleneck_forward.4} parent=23 // pred_region
        %s178 = smul.u32 32, %s16
        %s179 = smul.u32 2, %s18
        %p180 = scmp.lt.s32.totalorder %s178, 63
        %s181 = scalar_select %p180, %s178, 63
        %p182 = scmp.lt.s32.totalorder %s179, 1
        %s183 = scalar_select %p182, %s179, 1
        %s184 = smul.addr %s181, 2
        %s185 = sadd.s32 %s183, %s184
        %s186 = smul.addr %s185, 4
        %s187 = scalar_lea.vmem %s0, %s186
        %s188 = smul.u32 32, %s16
        %s189 = smul.u32 2, %s18
      $region28: #{bottleneck_forward.4} parent=23 // pred_fallthru
        _
    $region24: #{bottleneck_forward.4} parent=5 // pred_fallthru
      _
    %p190 = scmp.le.s32.totalorder 1, %s9
    %p191 = scmp.lt.s32.totalorder %s9, 3
    %p192 = pnand %p190, %p191
    %p193 = pneg %p192
    // Predicated region
    $region29: #{bottleneck_forward.4} parent=5 // pred_check
      _
    $region30: #{bottleneck_forward.4} parent=5 // pred_check_branch
      %195 = sbr.rel (%p192) target = $region32
    $region31: #{bottleneck_forward.4} parent=5 // pred_region
      %s196 = ssub.s32 %s9, 1
      %s197 = smul.u32 32, %s19
      %s198 = smul.u32 2, %s21
      %p199 = scmp.lt.s32.totalorder %s197, 63
      %s200 = scalar_select %p199, %s197, 63
      %p201 = scmp.lt.s32.totalorder %s198, 1
      %s202 = scalar_select %p201, %s198, 1
      %s203 = smul.addr %s200, 2
      %s204 = sadd.s32 %s202, %s203
      %s205 = smul.addr %s204, 4
      %s206 = scalar_lea.vmem %s0, %s205
      %p207 = pneg %p56
      %p208 = pneg %p53
      %s209 = smul.u32 32, %s21
      %p210 = scmp.lt.s32.totalorder %s209, 31
      %s211 = scalar_select %p210, %s209, 31
      %p212 = scmp.lt.s32.totalorder %s20, 0
      %s213 = scalar_select %p212, %s20, 0
      %s214 = sadd.s32 %s213, %s211
      %s215 = smul.addr %s214, 4
      %s216 = scalar_lea.vmem %s1, %s215
      %p217 = pneg %p84
      %p218 = pneg %p81
      %p219 = scmp.lt.s32.totalorder %s20, 0
      %s220 = scalar_select %p219, %s20, 0
      %s221 = scalar_lea.vmem %s2, %s220
      %p222 = pneg %p110
      %p223 = pneg %p107
      %p224 = pneg %p138
      %p225 = pneg %p135
      %s226 = smul.u32 32, %s19
      %p227 = scmp.lt.s32.totalorder %s226, 63
      %s228 = scalar_select %p227, %s226, 63
      %p229 = scmp.lt.s32.totalorder %s20, 0
      %s230 = scalar_select %p229, %s20, 0
      %s231 = sadd.s32 %s230, %s228
      %s232 = smul.addr %s231, 4
      %s233 = scalar_lea.vmem %s3, %s232
      %s234 = smul.u32 32, %s19
      %s235 = smul.u32 2, %s21
      %p236 = scmp.lt.s32.totalorder %s234, 63
      %s237 = scalar_select %p236, %s234, 63
      %p238 = scmp.lt.s32.totalorder %s235, 1
      %s239 = scalar_select %p238, %s235, 1
      %s240 = smul.addr %s237, 2
      %s241 = sadd.s32 %s239, %s240
      %s242 = smul.addr %s241, 4
      %s243 = scalar_lea.vmem %s0, %s242
      %s244 = smul.u32 32, %s19
      %s245 = smul.u32 2, %s21
      %s246 = smul.u32 32, %s21
      %p247 = scmp.lt.s32.totalorder %s246, 31
      %s248 = scalar_select %p247, %s246, 31
      %p249 = scmp.lt.s32.totalorder %s20, 0
      %s250 = scalar_select %p249, %s20, 0
      %s251 = sadd.s32 %s250, %s248
      %s252 = smul.addr %s251, 4
      %s253 = scalar_lea.vmem %s1, %s252
      %s254 = smul.u32 32, %s21
      %p255 = scmp.lt.s32.totalorder %s20, 0
      %s256 = scalar_select %p255, %s20, 0
      %s257 = scalar_lea.vmem %s2, %s256
      %s258 = smul.u32 32, %s19
      %p259 = scmp.lt.s32.totalorder %s258, 63
      %s260 = scalar_select %p259, %s258, 63
      %p261 = scmp.lt.s32.totalorder %s20, 0
      %s262 = scalar_select %p261, %s20, 0
      %s263 = sadd.s32 %s262, %s260
      %s264 = smul.addr %s263, 4
      %s265 = scalar_lea.vmem %s3, %s264
      %s266 = smul.u32 32, %s19
      %p268 = scmp.eq.s32.totalorder %s21, 0
      // Predicated region
      $region33: #{bottleneck_forward.4} parent=31 // pred_check
        %p269 = pneg %p268
      $region34: #{bottleneck_forward.4} parent=31 // pred_check_branch
        %271 = sbr.rel (%p269) target = $region36
      $region35: #{bottleneck_forward.4} parent=31 // pred_region
        %272 = vst [vmem:[#allocation2] sm:$0xff] 0.0
        %273 = vst [vmem:[#allocation2 + $0x8] sm:$0xff] 0.0
        %274 = vst [vmem:[#allocation2 + $0x10] sm:$0xff] 0.0
        %275 = vst [vmem:[#allocation2 + $0x18] sm:$0xff] 0.0
        %276 = vst [vmem:[#allocation2 + $0x20] sm:$0xff] 0.0
        %277 = vst [vmem:[#allocation2 + $0x28] sm:$0xff] 0.0
        %278 = vst [vmem:[#allocation2 + $0x30] sm:$0xff] 0.0
        %279 = vst [vmem:[#allocation2 + $0x38] sm:$0xff] 0.0
        %280 = vst [vmem:[#allocation2 + $0x40] sm:$0xff] 0.0
        %281 = vst [vmem:[#allocation2 + $0x48] sm:$0xff] 0.0
        %282 = vst [vmem:[#allocation2 + $0x50] sm:$0xff] 0.0
        %283 = vst [vmem:[#allocation2 + $0x58] sm:$0xff] 0.0
        %284 = vst [vmem:[#allocation2 + $0x60] sm:$0xff] 0.0
        %285 = vst [vmem:[#allocation2 + $0x68] sm:$0xff] 0.0
        %286 = vst [vmem:[#allocation2 + $0x70] sm:$0xff] 0.0
        %287 = vst [vmem:[#allocation2 + $0x78] sm:$0xff] 0.0
        %288 = vst [vmem:[#allocation2 + $0x80] sm:$0xff] 0.0
        %289 = vst [vmem:[#allocation2 + $0x88] sm:$0xff] 0.0
        %290 = vst [vmem:[#allocation2 + $0x90] sm:$0xff] 0.0
        %291 = vst [vmem:[#allocation2 + $0x98] sm:$0xff] 0.0
        %292 = vst [vmem:[#allocation2 + $0xa0] sm:$0xff] 0.0
        %293 = vst [vmem:[#allocation2 + $0xa8] sm:$0xff] 0.0
        %294 = vst [vmem:[#allocation2 + $0xb0] sm:$0xff] 0.0
        %295 = vst [vmem:[#allocation2 + $0xb8] sm:$0xff] 0.0
        %296 = vst [vmem:[#allocation2 + $0xc0] sm:$0xff] 0.0
        %297 = vst [vmem:[#allocation2 + $0xc8] sm:$0xff] 0.0
        %298 = vst [vmem:[#allocation2 + $0xd0] sm:$0xff] 0.0
        %299 = vst [vmem:[#allocation2 + $0xd8] sm:$0xff] 0.0
        %300 = vst [vmem:[#allocation2 + $0xe0] sm:$0xff] 0.0
        %301 = vst [vmem:[#allocation2 + $0xe8] sm:$0xff] 0.0
        %302 = vst [vmem:[#allocation2 + $0xf0] sm:$0xff] 0.0
        %303 = vst [vmem:[#allocation2 + $0xf8] sm:$0xff] 0.0
      $region36: #{bottleneck_forward.4} parent=31 // pred_fallthru
        _
      %v304 = vld [vmem:[#allocation2] sm:$0xff]
      %v305 = vld [vmem:[#allocation2 + $0x8] sm:$0xff]
      %v306 = vld [vmem:[#allocation2 + $0x10] sm:$0xff]
      %v307 = vld [vmem:[#allocation2 + $0x18] sm:$0xff]
      %v308 = vld [vmem:[#allocation2 + $0x20] sm:$0xff]
      %v309 = vld [vmem:[#allocation2 + $0x28] sm:$0xff]
      %v310 = vld [vmem:[#allocation2 + $0x30] sm:$0xff]
      %v311 = vld [vmem:[#allocation2 + $0x38] sm:$0xff]
      %v312 = vld [vmem:[#allocation2 + $0x40] sm:$0xff]
      %v313 = vld [vmem:[#allocation2 + $0x48] sm:$0xff]
      %v314 = vld [vmem:[#allocation2 + $0x50] sm:$0xff]
      %v315 = vld [vmem:[#allocation2 + $0x58] sm:$0xff]
      %v316 = vld [vmem:[#allocation2 + $0x60] sm:$0xff]
      %v317 = vld [vmem:[#allocation2 + $0x68] sm:$0xff]
      %v318 = vld [vmem:[#allocation2 + $0x70] sm:$0xff]
      %v319 = vld [vmem:[#allocation2 + $0x78] sm:$0xff]
      %v320 = vld [vmem:[#allocation2 + $0x80] sm:$0xff]
      %v321 = vld [vmem:[#allocation2 + $0x88] sm:$0xff]
      %v322 = vld [vmem:[#allocation2 + $0x90] sm:$0xff]
      %v323 = vld [vmem:[#allocation2 + $0x98] sm:$0xff]
      %v324 = vld [vmem:[#allocation2 + $0xa0] sm:$0xff]
      %v325 = vld [vmem:[#allocation2 + $0xa8] sm:$0xff]
      %v326 = vld [vmem:[#allocation2 + $0xb0] sm:$0xff]
      %v327 = vld [vmem:[#allocation2 + $0xb8] sm:$0xff]
      %v328 = vld [vmem:[#allocation2 + $0xc0] sm:$0xff]
      %v329 = vld [vmem:[#allocation2 + $0xc8] sm:$0xff]
      %v330 = vld [vmem:[#allocation2 + $0xd0] sm:$0xff]
      %v331 = vld [vmem:[#allocation2 + $0xd8] sm:$0xff]
      %v332 = vld [vmem:[#allocation2 + $0xe0] sm:$0xff]
      %v333 = vld [vmem:[#allocation2 + $0xe8] sm:$0xff]
      %v334 = vld [vmem:[#allocation2 + $0xf0] sm:$0xff]
      %v335 = vld [vmem:[#allocation2 + $0xf8] sm:$0xff]
      %v336 = vld [vmem:[%s243] sm:$0xff]
      %v337 = vld [vmem:[%s243 + $0x8] sm:$0xff]
      %v338 = vld [vmem:[%s243 + $0x10] sm:$0xff]
      %v339 = vld [vmem:[%s243 + $0x18] sm:$0xff]
      %v340 = vld [vmem:[%s243 + $0x20] sm:$0xff]
      %v341 = vld [vmem:[%s243 + $0x28] sm:$0xff]
      %v342 = vld [vmem:[%s243 + $0x30] sm:$0xff]
      %v343 = vld [vmem:[%s243 + $0x38] sm:$0xff]
      %v344 = vld [vmem:[%s243 + $0x40] sm:$0xff]
      %v345 = vld [vmem:[%s243 + $0x48] sm:$0xff]
      %v346 = vld [vmem:[%s243 + $0x50] sm:$0xff]
      %v347 = vld [vmem:[%s243 + $0x58] sm:$0xff]
      %v348 = vld [vmem:[%s243 + $0x60] sm:$0xff]
      %v349 = vld [vmem:[%s243 + $0x68] sm:$0xff]
      %v350 = vld [vmem:[%s243 + $0x70] sm:$0xff]
      %v351 = vld [vmem:[%s243 + $0x78] sm:$0xff]
      %v352 = vld [vmem:[%s243 + $0x80] sm:$0xff]
      %v353 = vld [vmem:[%s243 + $0x88] sm:$0xff]
      %v354 = vld [vmem:[%s243 + $0x90] sm:$0xff]
      %v355 = vld [vmem:[%s243 + $0x98] sm:$0xff]
      %v356 = vld [vmem:[%s243 + $0xa0] sm:$0xff]
      %v357 = vld [vmem:[%s243 + $0xa8] sm:$0xff]
      %v358 = vld [vmem:[%s243 + $0xb0] sm:$0xff]
      %v359 = vld [vmem:[%s243 + $0xb8] sm:$0xff]
      %v360 = vld [vmem:[%s243 + $0xc0] sm:$0xff]
      %v361 = vld [vmem:[%s243 + $0xc8] sm:$0xff]
      %v362 = vld [vmem:[%s243 + $0xd0] sm:$0xff]
      %v363 = vld [vmem:[%s243 + $0xd8] sm:$0xff]
      %v364 = vld [vmem:[%s243 + $0xe0] sm:$0xff]
      %v365 = vld [vmem:[%s243 + $0xe8] sm:$0xff]
      %v366 = vld [vmem:[%s243 + $0xf0] sm:$0xff]
      %v367 = vld [vmem:[%s243 + $0xf8] sm:$0xff]
      %v368 = vld [vmem:[%s253] sm:$0xf]
      %v369 = vld [vmem:[%s253 + $0x4] sm:$0xf]
      %v370 = vld [vmem:[%s253 + $0x8] sm:$0xf]
      %v371 = vld [vmem:[%s253 + $0xc] sm:$0xf]
      %v372 = vld [vmem:[%s253 + $0x10] sm:$0xf]
      %v373 = vld [vmem:[%s253 + $0x14] sm:$0xf]
      %v374 = vld [vmem:[%s253 + $0x18] sm:$0xf]
      %v375 = vld [vmem:[%s253 + $0x1c] sm:$0xf]
      %v376 = vld [vmem:[%s253 + $0x20] sm:$0xf]
      %v377 = vld [vmem:[%s253 + $0x24] sm:$0xf]
      %v378 = vld [vmem:[%s253 + $0x28] sm:$0xf]
      %v379 = vld [vmem:[%s253 + $0x2c] sm:$0xf]
      %v380 = vld [vmem:[%s253 + $0x30] sm:$0xf]
      %v381 = vld [vmem:[%s253 + $0x34] sm:$0xf]
      %v382 = vld [vmem:[%s253 + $0x38] sm:$0xf]
      %v383 = vld [vmem:[%s253 + $0x3c] sm:$0xf]
      %v384 = vld [vmem:[%s253 + $0x40] sm:$0xf]
      %v385 = vld [vmem:[%s253 + $0x44] sm:$0xf]
      %v386 = vld [vmem:[%s253 + $0x48] sm:$0xf]
      %v387 = vld [vmem:[%s253 + $0x4c] sm:$0xf]
      %v388 = vld [vmem:[%s253 + $0x50] sm:$0xf]
      %v389 = vld [vmem:[%s253 + $0x54] sm:$0xf]
      %v390 = vld [vmem:[%s253 + $0x58] sm:$0xf]
      %v391 = vld [vmem:[%s253 + $0x5c] sm:$0xf]
      %v392 = vld [vmem:[%s253 + $0x60] sm:$0xf]
      %v393 = vld [vmem:[%s253 + $0x64] sm:$0xf]
      %v394 = vld [vmem:[%s253 + $0x68] sm:$0xf]
      %v395 = vld [vmem:[%s253 + $0x6c] sm:$0xf]
      %v396 = vld [vmem:[%s253 + $0x70] sm:$0xf]
      %v397 = vld [vmem:[%s253 + $0x74] sm:$0xf]
      %v398 = vld [vmem:[%s253 + $0x78] sm:$0xf]
      %v399 = vld [vmem:[%s253 + $0x7c] sm:$0xf]
      %v432 = vunpack.c.l.b16 %v336
      %v433 = vunpack.c.h.b16 %v336
      %v434 = vunpack.c.l.b16 %v337
      %v435 = vunpack.c.h.b16 %v337
      %v436 = vunpack.c.l.b16 %v338
      %v437 = vunpack.c.h.b16 %v338
      %v438 = vunpack.c.l.b16 %v339
      %v439 = vunpack.c.h.b16 %v339
      %v440 = vunpack.c.l.b16 %v340
      %v441 = vunpack.c.h.b16 %v340
      %v442 = vunpack.c.l.b16 %v341
      %v443 = vunpack.c.h.b16 %v341
      %v444 = vunpack.c.l.b16 %v342
      %v445 = vunpack.c.h.b16 %v342
      %v446 = vunpack.c.l.b16 %v343
      %v447 = vunpack.c.h.b16 %v343
      %v448 = vunpack.c.l.b16 %v344
      %v449 = vunpack.c.h.b16 %v344
      %v450 = vunpack.c.l.b16 %v345
      %v451 = vunpack.c.h.b16 %v345
      %v452 = vunpack.c.l.b16 %v346
      %v453 = vunpack.c.h.b16 %v346
      %v454 = vunpack.c.l.b16 %v347
      %v455 = vunpack.c.h.b16 %v347
      %v456 = vunpack.c.l.b16 %v348
      %v457 = vunpack.c.h.b16 %v348
      %v458 = vunpack.c.l.b16 %v349
      %v459 = vunpack.c.h.b16 %v349
      %v460 = vunpack.c.l.b16 %v350
      %v461 = vunpack.c.h.b16 %v350
      %v462 = vunpack.c.l.b16 %v351
      %v463 = vunpack.c.h.b16 %v351
      %v464 = vunpack.c.l.b16 %v352
      %v465 = vunpack.c.h.b16 %v352
      %v466 = vunpack.c.l.b16 %v353
      %v467 = vunpack.c.h.b16 %v353
      %v468 = vunpack.c.l.b16 %v354
      %v469 = vunpack.c.h.b16 %v354
      %v470 = vunpack.c.l.b16 %v355
      %v471 = vunpack.c.h.b16 %v355
      %v472 = vunpack.c.l.b16 %v356
      %v473 = vunpack.c.h.b16 %v356
      %v474 = vunpack.c.l.b16 %v357
      %v475 = vunpack.c.h.b16 %v357
      %v476 = vunpack.c.l.b16 %v358
      %v477 = vunpack.c.h.b16 %v358
      %v478 = vunpack.c.l.b16 %v359
      %v479 = vunpack.c.h.b16 %v359
      %v480 = vunpack.c.l.b16 %v360
      %v481 = vunpack.c.h.b16 %v360
      %v482 = vunpack.c.l.b16 %v361
      %v483 = vunpack.c.h.b16 %v361
      %v484 = vunpack.c.l.b16 %v362
      %v485 = vunpack.c.h.b16 %v362
      %v486 = vunpack.c.l.b16 %v363
      %v487 = vunpack.c.h.b16 %v363
      %v488 = vunpack.c.l.b16 %v364
      %v489 = vunpack.c.h.b16 %v364
      %v490 = vunpack.c.l.b16 %v365
      %v491 = vunpack.c.h.b16 %v365
      %v492 = vunpack.c.l.b16 %v366
      %v493 = vunpack.c.h.b16 %v366
      %v494 = vunpack.c.l.b16 %v367
      %v495 = vunpack.c.h.b16 %v367
      %v496 = vpack.c.b16 %v434, %v432
      %v497 = vpack.c.b16 %v435, %v433
      %v498 = vpack.c.b16 %v438, %v436
      %v499 = vpack.c.b16 %v439, %v437
      %v500 = vpack.c.b16 %v442, %v440
      %v501 = vpack.c.b16 %v443, %v441
      %v502 = vpack.c.b16 %v446, %v444
      %v503 = vpack.c.b16 %v447, %v445
      %v504 = vpack.c.b16 %v450, %v448
      %v505 = vpack.c.b16 %v451, %v449
      %v506 = vpack.c.b16 %v454, %v452
      %v507 = vpack.c.b16 %v455, %v453
      %v508 = vpack.c.b16 %v458, %v456
      %v509 = vpack.c.b16 %v459, %v457
      %v510 = vpack.c.b16 %v462, %v460
      %v511 = vpack.c.b16 %v463, %v461
      %v512 = vpack.c.b16 %v466, %v464
      %v513 = vpack.c.b16 %v467, %v465
      %v514 = vpack.c.b16 %v470, %v468
      %v515 = vpack.c.b16 %v471, %v469
      %v516 = vpack.c.b16 %v474, %v472
      %v517 = vpack.c.b16 %v475, %v473
      %v518 = vpack.c.b16 %v478, %v476
      %v519 = vpack.c.b16 %v479, %v477
      %v520 = vpack.c.b16 %v482, %v480
      %v521 = vpack.c.b16 %v483, %v481
      %v522 = vpack.c.b16 %v486, %v484
      %v523 = vpack.c.b16 %v487, %v485
      %v524 = vpack.c.b16 %v490, %v488
      %v525 = vpack.c.b16 %v491, %v489
      %v526 = vpack.c.b16 %v494, %v492
      %v527 = vpack.c.b16 %v495, %v493
      %v592 = vunpack.c.l.b16 %v368
      %v593 = vunpack.c.l.b16 %v369
      %v594 = vunpack.c.l.b16 %v370
      %v595 = vunpack.c.l.b16 %v371
      %v596 = vunpack.c.l.b16 %v372
      %v597 = vunpack.c.l.b16 %v373
      %v598 = vunpack.c.l.b16 %v374
      %v599 = vunpack.c.l.b16 %v375
      %v600 = vunpack.c.l.b16 %v376
      %v601 = vunpack.c.l.b16 %v377
      %v602 = vunpack.c.l.b16 %v378
      %v603 = vunpack.c.l.b16 %v379
      %v604 = vunpack.c.l.b16 %v380
      %v605 = vunpack.c.l.b16 %v381
      %v606 = vunpack.c.l.b16 %v382
      %v607 = vunpack.c.l.b16 %v383
      %v608 = vunpack.c.l.b16 %v384
      %v609 = vunpack.c.l.b16 %v385
      %v610 = vunpack.c.l.b16 %v386
      %v611 = vunpack.c.l.b16 %v387
      %v612 = vunpack.c.l.b16 %v388
      %v613 = vunpack.c.l.b16 %v389
      %v614 = vunpack.c.l.b16 %v390
      %v615 = vunpack.c.l.b16 %v391
      %v616 = vunpack.c.l.b16 %v392
      %v617 = vunpack.c.l.b16 %v393
      %v618 = vunpack.c.l.b16 %v394
      %v619 = vunpack.c.l.b16 %v395
      %v620 = vunpack.c.l.b16 %v396
      %v621 = vunpack.c.l.b16 %v397
      %v622 = vunpack.c.l.b16 %v398
      %v623 = vunpack.c.l.b16 %v399
      %v624 = vpack.c.b16 %v593, %v592
      %v625 = vpack.c.b16 %v595, %v594
      %v626 = vpack.c.b16 %v597, %v596
      %v627 = vpack.c.b16 %v599, %v598
      %v628 = vpack.c.b16 %v601, %v600
      %v629 = vpack.c.b16 %v603, %v602
      %v630 = vpack.c.b16 %v605, %v604
      %v631 = vpack.c.b16 %v607, %v606
      %v632 = vpack.c.b16 %v609, %v608
      %v633 = vpack.c.b16 %v611, %v610
      %v634 = vpack.c.b16 %v613, %v612
      %v635 = vpack.c.b16 %v615, %v614
      %v636 = vpack.c.b16 %v617, %v616
      %v637 = vpack.c.b16 %v619, %v618
      %v638 = vpack.c.b16 %v621, %v620
      %v639 = vpack.c.b16 %v623, %v622
      %656 = vmatprep.subr.bf16.mxu0 0
      %657 = vmatpush1.bf16.msra.mxu0 %v624
      %658 = vmatprep.subr.bf16.mxu0 0
      %659 = vmatpush1.bf16.msra.mxu0 %v625
      %660 = vmatprep.subr.bf16.mxu0 0
      %661 = vmatpush1.bf16.msra.mxu0 %v626
      %662 = vmatprep.subr.bf16.mxu0 0
      %663 = vmatpush1.bf16.msra.mxu0 %v627
      %664 = vmatprep.subr.bf16.mxu0 0
      %665 = vmatpush1.bf16.msra.mxu0 %v628
      %666 = vmatprep.subr.bf16.mxu0 0
      %667 = vmatpush1.bf16.msra.mxu0 %v629
      %668 = vmatprep.subr.bf16.mxu0 0
      %669 = vmatpush1.bf16.msra.mxu0 %v630
      %670 = vmatprep.subr.bf16.mxu0 0
      %671 = vmatpush1.bf16.msra.mxu0 %v631
      %672 = vmatprep.subr.bf16.mxu0 0
      %673 = vmatpush1.bf16.msra.mxu0 %v632
      %674 = vmatprep.subr.bf16.mxu0 0
      %675 = vmatpush1.bf16.msra.mxu0 %v633
      %676 = vmatprep.subr.bf16.mxu0 0
      %677 = vmatpush1.bf16.msra.mxu0 %v634
      %678 = vmatprep.subr.bf16.mxu0 0
      %679 = vmatpush1.bf16.msra.mxu0 %v635
      %680 = vmatprep.subr.bf16.mxu0 0
      %681 = vmatpush1.bf16.msra.mxu0 %v636
      %682 = vmatprep.subr.bf16.mxu0 0
      %683 = vmatpush1.bf16.msra.mxu0 %v637
      %684 = vmatprep.subr.bf16.mxu0 0
      %685 = vmatpush1.bf16.msra.mxu0 %v638
      %686 = vmatprep.subr.bf16.mxu0 0
      %687 = vmatpush1.bf16.msra.mxu0 %v639
      %688 = vmatprep.mubr.bf16.mxu0 %v497
      %689 = vmatmul.mubr.bf16.gmra.mrb[0].mxu0 %v496
      %v690 = vpop.f32.mrb[0].mxu0
      %v691 = vadd.f32 0.0, %v690
      %v692 = vpop.f32.mrb[0].mxu0
      %v693 = vpop.f32.mrb[0].mxu0
      %v694 = vadd.f32 0.0, %v693
      %v695 = vpop.f32.mrb[0].mxu0
      %696 = vmatprep.mubr.bf16.mxu0 %v499
      %697 = vmatmul.mubr.bf16.gmra.mrb[0].mxu0 %v498
      %v698 = vpop.f32.mrb[0].mxu0
      %v699 = vadd.f32 0.0, %v698
      %v700 = vpop.f32.mrb[0].mxu0
      %v701 = vpop.f32.mrb[0].mxu0
      %v702 = vadd.f32 0.0, %v701
      %v703 = vpop.f32.mrb[0].mxu0
      %704 = vmatprep.mubr.bf16.mxu0 %v501
      %705 = vmatmul.mubr.bf16.gmra.mrb[0].mxu0 %v500
      %v706 = vpop.f32.mrb[0].mxu0
      %v707 = vadd.f32 0.0, %v706
      %v708 = vpop.f32.mrb[0].mxu0
      %v709 = vpop.f32.mrb[0].mxu0
      %v710 = vadd.f32 0.0, %v709
      %v711 = vpop.f32.mrb[0].mxu0
      %712 = vmatprep.mubr.bf16.mxu0 %v503
      %713 = vmatmul.mubr.bf16.gmra.mrb[0].mxu0 %v502
      %v714 = vpop.f32.mrb[0].mxu0
      %v715 = vadd.f32 0.0, %v714
      %v716 = vpop.f32.mrb[0].mxu0
      %v717 = vpop.f32.mrb[0].mxu0
      %v718 = vadd.f32 0.0, %v717
      %v719 = vpop.f32.mrb[0].mxu0
      %720 = vmatprep.mubr.bf16.mxu0 %v505
      %721 = vmatmul.mubr.bf16.gmra.mrb[0].mxu0 %v504
      %v722 = vpop.f32.mrb[0].mxu0
      %v723 = vadd.f32 0.0, %v722
      %v724 = vpop.f32.mrb[0].mxu0
      %v725 = vpop.f32.mrb[0].mxu0
      %v726 = vadd.f32 0.0, %v725
      %v727 = vpop.f32.mrb[0].mxu0
      %728 = vmatprep.mubr.bf16.mxu0 %v507
      %729 = vmatmul.mubr.bf16.gmra.mrb[0].mxu0 %v506
      %v730 = vpop.f32.mrb[0].mxu0
      %v731 = vadd.f32 0.0, %v730
      %v732 = vpop.f32.mrb[0].mxu0
      %v733 = vpop.f32.mrb[0].mxu0
      %v734 = vadd.f32 0.0, %v733
      %v735 = vpop.f32.mrb[0].mxu0
      %736 = vmatprep.mubr.bf16.mxu0 %v509
      %737 = vmatmul.mubr.bf16.gmra.mrb[0].mxu0 %v508
      %v738 = vpop.f32.mrb[0].mxu0
      %v739 = vadd.f32 0.0, %v738
      %v740 = vpop.f32.mrb[0].mxu0
      %v741 = vpop.f32.mrb[0].mxu0
      %v742 = vadd.f32 0.0, %v741
      %v743 = vpop.f32.mrb[0].mxu0
      %744 = vmatprep.mubr.bf16.mxu0 %v511
      %745 = vmatmul.mubr.bf16.gmra.mrb[0].mxu0 %v510
      %v746 = vpop.f32.mrb[0].mxu0
      %v747 = vadd.f32 0.0, %v746
      %v748 = vpop.f32.mrb[0].mxu0
      %v749 = vpop.f32.mrb[0].mxu0
      %v750 = vadd.f32 0.0, %v749
      %v751 = vpop.f32.mrb[0].mxu0
      %752 = vmatprep.mubr.bf16.mxu0 %v513
      %753 = vmatmul.mubr.bf16.gmra.mrb[0].mxu0 %v512
      %v754 = vpop.f32.mrb[0].mxu0
      %v755 = vadd.f32 0.0, %v754
      %v756 = vpop.f32.mrb[0].mxu0
      %v757 = vpop.f32.mrb[0].mxu0
      %v758 = vadd.f32 0.0, %v757
      %v759 = vpop.f32.mrb[0].mxu0
      %760 = vmatprep.mubr.bf16.mxu0 %v515
      %761 = vmatmul.mubr.bf16.gmra.mrb[0].mxu0 %v514
      %v762 = vpop.f32.mrb[0].mxu0
      %v763 = vadd.f32 0.0, %v762
      %v764 = vpop.f32.mrb[0].mxu0
      %v765 = vpop.f32.mrb[0].mxu0
      %v766 = vadd.f32 0.0, %v765
      %v767 = vpop.f32.mrb[0].mxu0
      %768 = vmatprep.mubr.bf16.mxu0 %v517
      %769 = vmatmul.mubr.bf16.gmra.mrb[0].mxu0 %v516
      %v770 = vpop.f32.mrb[0].mxu0
      %v771 = vadd.f32 0.0, %v770
      %v772 = vpop.f32.mrb[0].mxu0
      %v773 = vpop.f32.mrb[0].mxu0
      %v774 = vadd.f32 0.0, %v773
      %v775 = vpop.f32.mrb[0].mxu0
      %776 = vmatprep.mubr.bf16.mxu0 %v519
      %777 = vmatmul.mubr.bf16.gmra.mrb[0].mxu0 %v518
      %v778 = vpop.f32.mrb[0].mxu0
      %v779 = vadd.f32 0.0, %v778
      %v780 = vpop.f32.mrb[0].mxu0
      %v781 = vpop.f32.mrb[0].mxu0
      %v782 = vadd.f32 0.0, %v781
      %v783 = vpop.f32.mrb[0].mxu0
      %784 = vmatprep.mubr.bf16.mxu0 %v521
      %785 = vmatmul.mubr.bf16.gmra.mrb[0].mxu0 %v520
      %v786 = vpop.f32.mrb[0].mxu0
      %v787 = vadd.f32 0.0, %v786
      %v788 = vpop.f32.mrb[0].mxu0
      %v789 = vpop.f32.mrb[0].mxu0
      %v790 = vadd.f32 0.0, %v789
      %v791 = vpop.f32.mrb[0].mxu0
      %792 = vmatprep.mubr.bf16.mxu0 %v523
      %793 = vmatmul.mubr.bf16.gmra.mrb[0].mxu0 %v522
      %v794 = vpop.f32.mrb[0].mxu0
      %v795 = vadd.f32 0.0, %v794
      %v796 = vpop.f32.mrb[0].mxu0
      %v797 = vpop.f32.mrb[0].mxu0
      %v798 = vadd.f32 0.0, %v797
      %v799 = vpop.f32.mrb[0].mxu0
      %800 = vmatprep.mubr.bf16.mxu0 %v525
      %801 = vmatmul.mubr.bf16.gmra.mrb[0].mxu0 %v524
      %v802 = vpop.f32.mrb[0].mxu0
      %v803 = vadd.f32 0.0, %v802
      %v804 = vpop.f32.mrb[0].mxu0
      %v805 = vpop.f32.mrb[0].mxu0
      %v806 = vadd.f32 0.0, %v805
      %v807 = vpop.f32.mrb[0].mxu0
      %808 = vmatprep.mubr.bf16.mxu0 %v527
      %809 = vmatmul.mubr.bf16.gmra.mrb[0].mxu0 %v526
      %v810 = vpop.f32.mrb[0].mxu0
      %v811 = vadd.f32 0.0, %v810
      %v812 = vpop.f32.mrb[0].mxu0
      %v813 = vpop.f32.mrb[0].mxu0
      %v814 = vadd.f32 0.0, %v813
      %v815 = vpop.f32.mrb[0].mxu0
      %816 = vdwg.mxu0
      %v817 = vadd.f32 %v304, %v691
      %v818 = vadd.f32 %v305, %v694
      %v819 = vadd.f32 %v306, %v699
      %v820 = vadd.f32 %v307, %v702
      %v821 = vadd.f32 %v308, %v707
      %v822 = vadd.f32 %v309, %v710
      %v823 = vadd.f32 %v310, %v715
      %v824 = vadd.f32 %v311, %v718
      %v825 = vadd.f32 %v312, %v723
      %v826 = vadd.f32 %v313, %v726
      %v827 = vadd.f32 %v314, %v731
      %v828 = vadd.f32 %v315, %v734
      %v829 = vadd.f32 %v316, %v739
      %v830 = vadd.f32 %v317, %v742
      %v831 = vadd.f32 %v318, %v747
      %v832 = vadd.f32 %v319, %v750
      %v833 = vadd.f32 %v320, %v755
      %v834 = vadd.f32 %v321, %v758
      %v835 = vadd.f32 %v322, %v763
      %v836 = vadd.f32 %v323, %v766
      %v837 = vadd.f32 %v324, %v771
      %v838 = vadd.f32 %v325, %v774
      %v839 = vadd.f32 %v326, %v779
      %v840 = vadd.f32 %v327, %v782
      %v841 = vadd.f32 %v328, %v787
      %v842 = vadd.f32 %v329, %v790
      %v843 = vadd.f32 %v330, %v795
      %v844 = vadd.f32 %v331, %v798
      %v845 = vadd.f32 %v332, %v803
      %v846 = vadd.f32 %v333, %v806
      %v847 = vadd.f32 %v334, %v811
      %v848 = vadd.f32 %v335, %v814
      %849 = vst [vmem:[#allocation2] sm:$0xff] %v817
      %850 = vst [vmem:[#allocation2 + $0x8] sm:$0xff] %v818
      %851 = vst [vmem:[#allocation2 + $0x10] sm:$0xff] %v819
      %852 = vst [vmem:[#allocation2 + $0x18] sm:$0xff] %v820
      %853 = vst [vmem:[#allocation2 + $0x20] sm:$0xff] %v821
      %854 = vst [vmem:[#allocation2 + $0x28] sm:$0xff] %v822
      %855 = vst [vmem:[#allocation2 + $0x30] sm:$0xff] %v823
      %856 = vst [vmem:[#allocation2 + $0x38] sm:$0xff] %v824
      %857 = vst [vmem:[#allocation2 + $0x40] sm:$0xff] %v825
      %858 = vst [vmem:[#allocation2 + $0x48] sm:$0xff] %v826
      %859 = vst [vmem:[#allocation2 + $0x50] sm:$0xff] %v827
      %860 = vst [vmem:[#allocation2 + $0x58] sm:$0xff] %v828
      %861 = vst [vmem:[#allocation2 + $0x60] sm:$0xff] %v829
      %862 = vst [vmem:[#allocation2 + $0x68] sm:$0xff] %v830
      %863 = vst [vmem:[#allocation2 + $0x70] sm:$0xff] %v831
      %864 = vst [vmem:[#allocation2 + $0x78] sm:$0xff] %v832
      %865 = vst [vmem:[#allocation2 + $0x80] sm:$0xff] %v833
      %866 = vst [vmem:[#allocation2 + $0x88] sm:$0xff] %v834
      %867 = vst [vmem:[#allocation2 + $0x90] sm:$0xff] %v835
      %868 = vst [vmem:[#allocation2 + $0x98] sm:$0xff] %v836
      %869 = vst [vmem:[#allocation2 + $0xa0] sm:$0xff] %v837
      %870 = vst [vmem:[#allocation2 + $0xa8] sm:$0xff] %v838
      %871 = vst [vmem:[#allocation2 + $0xb0] sm:$0xff] %v839
      %872 = vst [vmem:[#allocation2 + $0xb8] sm:$0xff] %v840
      %873 = vst [vmem:[#allocation2 + $0xc0] sm:$0xff] %v841
      %874 = vst [vmem:[#allocation2 + $0xc8] sm:$0xff] %v842
      %875 = vst [vmem:[#allocation2 + $0xd0] sm:$0xff] %v843
      %876 = vst [vmem:[#allocation2 + $0xd8] sm:$0xff] %v844
      %877 = vst [vmem:[#allocation2 + $0xe0] sm:$0xff] %v845
      %878 = vst [vmem:[#allocation2 + $0xe8] sm:$0xff] %v846
      %879 = vst [vmem:[#allocation2 + $0xf0] sm:$0xff] %v847
      %880 = vst [vmem:[#allocation2 + $0xf8] sm:$0xff] %v848
      // Predicated region
      $region37: #{bottleneck_forward.4} parent=31 // pred_check
        %p881 = pneg %p268
      $region38: #{bottleneck_forward.4} parent=31 // pred_check_branch
        %883 = sbr.rel (%p881) target = $region40
      $region39: #{bottleneck_forward.4} parent=31 // pred_region
        %v884 = vld [vmem:[#allocation2] sm:$0xff]
        %v885 = vld [vmem:[#allocation2 + $0x8] sm:$0xff]
        %v886 = vld [vmem:[#allocation2 + $0x10] sm:$0xff]
        %v887 = vld [vmem:[#allocation2 + $0x18] sm:$0xff]
        %v888 = vld [vmem:[#allocation2 + $0x20] sm:$0xff]
        %v889 = vld [vmem:[#allocation2 + $0x28] sm:$0xff]
        %v890 = vld [vmem:[#allocation2 + $0x30] sm:$0xff]
        %v891 = vld [vmem:[#allocation2 + $0x38] sm:$0xff]
        %v892 = vld [vmem:[#allocation2 + $0x40] sm:$0xff]
        %v893 = vld [vmem:[#allocation2 + $0x48] sm:$0xff]
        %v894 = vld [vmem:[#allocation2 + $0x50] sm:$0xff]
        %v895 = vld [vmem:[#allocation2 + $0x58] sm:$0xff]
        %v896 = vld [vmem:[#allocation2 + $0x60] sm:$0xff]
        %v897 = vld [vmem:[#allocation2 + $0x68] sm:$0xff]
        %v898 = vld [vmem:[#allocation2 + $0x70] sm:$0xff]
        %v899 = vld [vmem:[#allocation2 + $0x78] sm:$0xff]
        %v900 = vld [vmem:[#allocation2 + $0x80] sm:$0xff]
        %v901 = vld [vmem:[#allocation2 + $0x88] sm:$0xff]
        %v902 = vld [vmem:[#allocation2 + $0x90] sm:$0xff]
        %v903 = vld [vmem:[#allocation2 + $0x98] sm:$0xff]
        %v904 = vld [vmem:[#allocation2 + $0xa0] sm:$0xff]
        %v905 = vld [vmem:[#allocation2 + $0xa8] sm:$0xff]
        %v906 = vld [vmem:[#allocation2 + $0xb0] sm:$0xff]
        %v907 = vld [vmem:[#allocation2 + $0xb8] sm:$0xff]
        %v908 = vld [vmem:[#allocation2 + $0xc0] sm:$0xff]
        %v909 = vld [vmem:[#allocation2 + $0xc8] sm:$0xff]
        %v910 = vld [vmem:[#allocation2 + $0xd0] sm:$0xff]
        %v911 = vld [vmem:[#allocation2 + $0xd8] sm:$0xff]
        %v912 = vld [vmem:[#allocation2 + $0xe0] sm:$0xff]
        %v913 = vld [vmem:[#allocation2 + $0xe8] sm:$0xff]
        %v914 = vld [vmem:[#allocation2 + $0xf0] sm:$0xff]
        %v915 = vld [vmem:[#allocation2 + $0xf8] sm:$0xff]
        %v916 = vld [vmem:[%s257] sm:$0x1]
        %v918 = vlaneseq
        %v919 = vshrl.u32 %v918, 7
        %v920 = vsub.s32 0, %v919
        %v921 = vrot.slane %v916, %v920
        %v923 = vadd.f32 %v884, %v921
        %v924 = vadd.f32 %v885, %v921
        %v925 = vadd.f32 %v886, %v921
        %v926 = vadd.f32 %v887, %v921
        %v927 = vadd.f32 %v888, %v921
        %v928 = vadd.f32 %v889, %v921
        %v929 = vadd.f32 %v890, %v921
        %v930 = vadd.f32 %v891, %v921
        %v931 = vadd.f32 %v892, %v921
        %v932 = vadd.f32 %v893, %v921
        %v933 = vadd.f32 %v894, %v921
        %v934 = vadd.f32 %v895, %v921
        %v935 = vadd.f32 %v896, %v921
        %v936 = vadd.f32 %v897, %v921
        %v937 = vadd.f32 %v898, %v921
        %v938 = vadd.f32 %v899, %v921
        %v939 = vadd.f32 %v900, %v921
        %v940 = vadd.f32 %v901, %v921
        %v941 = vadd.f32 %v902, %v921
        %v942 = vadd.f32 %v903, %v921
        %v943 = vadd.f32 %v904, %v921
        %v944 = vadd.f32 %v905, %v921
        %v945 = vadd.f32 %v906, %v921
        %v946 = vadd.f32 %v907, %v921
        %v947 = vadd.f32 %v908, %v921
        %v948 = vadd.f32 %v909, %v921
        %v949 = vadd.f32 %v910, %v921
        %v950 = vadd.f32 %v911, %v921
        %v951 = vadd.f32 %v912, %v921
        %v952 = vadd.f32 %v913, %v921
        %v953 = vadd.f32 %v914, %v921
        %v954 = vadd.f32 %v915, %v921
        %v955 = vmax.f32 %v923, 0.0
        %v956 = vmax.f32 %v924, 0.0
        %v957 = vmax.f32 %v925, 0.0
        %v958 = vmax.f32 %v926, 0.0
        %v959 = vmax.f32 %v927, 0.0
        %v960 = vmax.f32 %v928, 0.0
        %v961 = vmax.f32 %v929, 0.0
        %v962 = vmax.f32 %v930, 0.0
        %v963 = vmax.f32 %v931, 0.0
        %v964 = vmax.f32 %v932, 0.0
        %v965 = vmax.f32 %v933, 0.0
        %v966 = vmax.f32 %v934, 0.0
        %v967 = vmax.f32 %v935, 0.0
        %v968 = vmax.f32 %v936, 0.0
        %v969 = vmax.f32 %v937, 0.0
        %v970 = vmax.f32 %v938, 0.0
        %v971 = vmax.f32 %v939, 0.0
        %v972 = vmax.f32 %v940, 0.0
        %v973 = vmax.f32 %v941, 0.0
        %v974 = vmax.f32 %v942, 0.0
        %v975 = vmax.f32 %v943, 0.0
        %v976 = vmax.f32 %v944, 0.0
        %v977 = vmax.f32 %v945, 0.0
        %v978 = vmax.f32 %v946, 0.0
        %v979 = vmax.f32 %v947, 0.0
        %v980 = vmax.f32 %v948, 0.0
        %v981 = vmax.f32 %v949, 0.0
        %v982 = vmax.f32 %v950, 0.0
        %v983 = vmax.f32 %v951, 0.0
        %v984 = vmax.f32 %v952, 0.0
        %v985 = vmax.f32 %v953, 0.0
        %v986 = vmax.f32 %v954, 0.0
        %v987 = vpack.c.bf16 %v956, %v955
        %v988 = vpack.c.bf16 %v958, %v957
        %v989 = vpack.c.bf16 %v960, %v959
        %v990 = vpack.c.bf16 %v962, %v961
        %v991 = vpack.c.bf16 %v964, %v963
        %v992 = vpack.c.bf16 %v966, %v965
        %v993 = vpack.c.bf16 %v968, %v967
        %v994 = vpack.c.bf16 %v970, %v969
        %v995 = vpack.c.bf16 %v972, %v971
        %v996 = vpack.c.bf16 %v974, %v973
        %v997 = vpack.c.bf16 %v976, %v975
        %v998 = vpack.c.bf16 %v978, %v977
        %v999 = vpack.c.bf16 %v980, %v979
        %v1000 = vpack.c.bf16 %v982, %v981
        %v1001 = vpack.c.bf16 %v984, %v983
        %v1002 = vpack.c.bf16 %v986, %v985
        %v1019 = vunpack.c.l.b16 %v987
        %v1020 = vunpack.c.h.b16 %v987
        %v1021 = vunpack.c.l.b16 %v988
        %v1022 = vunpack.c.h.b16 %v988
        %v1023 = vunpack.c.l.b16 %v989
        %v1024 = vunpack.c.h.b16 %v989
        %v1025 = vunpack.c.l.b16 %v990
        %v1026 = vunpack.c.h.b16 %v990
        %v1027 = vunpack.c.l.b16 %v991
        %v1028 = vunpack.c.h.b16 %v991
        %v1029 = vunpack.c.l.b16 %v992
        %v1030 = vunpack.c.h.b16 %v992
        %v1031 = vunpack.c.l.b16 %v993
        %v1032 = vunpack.c.h.b16 %v993
        %v1033 = vunpack.c.l.b16 %v994
        %v1034 = vunpack.c.h.b16 %v994
        %v1035 = vunpack.c.l.b16 %v995
        %v1036 = vunpack.c.h.b16 %v995
        %v1037 = vunpack.c.l.b16 %v996
        %v1038 = vunpack.c.h.b16 %v996
        %v1039 = vunpack.c.l.b16 %v997
        %v1040 = vunpack.c.h.b16 %v997
        %v1041 = vunpack.c.l.b16 %v998
        %v1042 = vunpack.c.h.b16 %v998
        %v1043 = vunpack.c.l.b16 %v999
        %v1044 = vunpack.c.h.b16 %v999
        %v1045 = vunpack.c.l.b16 %v1000
        %v1046 = vunpack.c.h.b16 %v1000
        %v1047 = vunpack.c.l.b16 %v1001
        %v1048 = vunpack.c.h.b16 %v1001
        %v1049 = vunpack.c.l.b16 %v1002
        %v1050 = vunpack.c.h.b16 %v1002
        %v1051 = vpack.c.b16 %v1019, %v1019
        %v1052 = vpack.c.b16 %v1020, %v1020
        %v1053 = vpack.c.b16 %v1021, %v1021
        %v1054 = vpack.c.b16 %v1022, %v1022
        %v1055 = vpack.c.b16 %v1023, %v1023
        %v1056 = vpack.c.b16 %v1024, %v1024
        %v1057 = vpack.c.b16 %v1025, %v1025
        %v1058 = vpack.c.b16 %v1026, %v1026
        %v1059 = vpack.c.b16 %v1027, %v1027
        %v1060 = vpack.c.b16 %v1028, %v1028
        %v1061 = vpack.c.b16 %v1029, %v1029
        %v1062 = vpack.c.b16 %v1030, %v1030
        %v1063 = vpack.c.b16 %v1031, %v1031
        %v1064 = vpack.c.b16 %v1032, %v1032
        %v1065 = vpack.c.b16 %v1033, %v1033
        %v1066 = vpack.c.b16 %v1034, %v1034
        %v1067 = vpack.c.b16 %v1035, %v1035
        %v1068 = vpack.c.b16 %v1036, %v1036
        %v1069 = vpack.c.b16 %v1037, %v1037
        %v1070 = vpack.c.b16 %v1038, %v1038
        %v1071 = vpack.c.b16 %v1039, %v1039
        %v1072 = vpack.c.b16 %v1040, %v1040
        %v1073 = vpack.c.b16 %v1041, %v1041
        %v1074 = vpack.c.b16 %v1042, %v1042
        %v1075 = vpack.c.b16 %v1043, %v1043
        %v1076 = vpack.c.b16 %v1044, %v1044
        %v1077 = vpack.c.b16 %v1045, %v1045
        %v1078 = vpack.c.b16 %v1046, %v1046
        %v1079 = vpack.c.b16 %v1047, %v1047
        %v1080 = vpack.c.b16 %v1048, %v1048
        %v1081 = vpack.c.b16 %v1049, %v1049
        %v1082 = vpack.c.b16 %v1050, %v1050
        %1115 = vst [vmem:[%s265] sm:$0xf] %v1051
        %1116 = vst [vmem:[%s265 + $0x4] sm:$0xf] %v1052
        %1117 = vst [vmem:[%s265 + $0x8] sm:$0xf] %v1053
        %1118 = vst [vmem:[%s265 + $0xc] sm:$0xf] %v1054
        %1119 = vst [vmem:[%s265 + $0x10] sm:$0xf] %v1055
        %1120 = vst [vmem:[%s265 + $0x14] sm:$0xf] %v1056
        %1121 = vst [vmem:[%s265 + $0x18] sm:$0xf] %v1057
        %1122 = vst [vmem:[%s265 + $0x1c] sm:$0xf] %v1058
        %1123 = vst [vmem:[%s265 + $0x20] sm:$0xf] %v1059
        %1124 = vst [vmem:[%s265 + $0x24] sm:$0xf] %v1060
        %1125 = vst [vmem:[%s265 + $0x28] sm:$0xf] %v1061
        %1126 = vst [vmem:[%s265 + $0x2c] sm:$0xf] %v1062
        %1127 = vst [vmem:[%s265 + $0x30] sm:$0xf] %v1063
        %1128 = vst [vmem:[%s265 + $0x34] sm:$0xf] %v1064
        %1129 = vst [vmem:[%s265 + $0x38] sm:$0xf] %v1065
        %1130 = vst [vmem:[%s265 + $0x3c] sm:$0xf] %v1066
        %1131 = vst [vmem:[%s265 + $0x40] sm:$0xf] %v1067
        %1132 = vst [vmem:[%s265 + $0x44] sm:$0xf] %v1068
        %1133 = vst [vmem:[%s265 + $0x48] sm:$0xf] %v1069
        %1134 = vst [vmem:[%s265 + $0x4c] sm:$0xf] %v1070
        %1135 = vst [vmem:[%s265 + $0x50] sm:$0xf] %v1071
        %1136 = vst [vmem:[%s265 + $0x54] sm:$0xf] %v1072
        %1137 = vst [vmem:[%s265 + $0x58] sm:$0xf] %v1073
        %1138 = vst [vmem:[%s265 + $0x5c] sm:$0xf] %v1074
        %1139 = vst [vmem:[%s265 + $0x60] sm:$0xf] %v1075
        %1140 = vst [vmem:[%s265 + $0x64] sm:$0xf] %v1076
        %1141 = vst [vmem:[%s265 + $0x68] sm:$0xf] %v1077
        %1142 = vst [vmem:[%s265 + $0x6c] sm:$0xf] %v1078
        %1143 = vst [vmem:[%s265 + $0x70] sm:$0xf] %v1079
        %1144 = vst [vmem:[%s265 + $0x74] sm:$0xf] %v1080
        %1145 = vst [vmem:[%s265 + $0x78] sm:$0xf] %v1081
        %1146 = vst [vmem:[%s265 + $0x7c] sm:$0xf] %v1082
      $region40: #{bottleneck_forward.4} parent=31 // pred_fallthru
        _
      %s1147 = smul.u32 32, %s19
      %p1148 = scmp.lt.s32.totalorder %s1147, 63
      %s1149 = scalar_select %p1148, %s1147, 63
      %p1150 = scmp.lt.s32.totalorder %s20, 0
      %s1151 = scalar_select %p1150, %s20, 0
      %s1152 = sadd.s32 %s1151, %s1149
      %s1153 = smul.addr %s1152, 4
      %s1154 = scalar_lea.vmem %s3, %s1153
      // Predicated region
      $region41: #{bottleneck_forward.4} parent=31 // pred_check
        %p1155 = pneg %p135
      $region42: #{bottleneck_forward.4} parent=31 // pred_check_branch
        %1157 = sbr.rel (%p1155) target = $region44
      $region43: #{bottleneck_forward.4} parent=31 // pred_region
        %s1158 = smul.u32 32, %s19
      $region44: #{bottleneck_forward.4} parent=31 // pred_fallthru
        _
    $region32: #{bottleneck_forward.4} parent=5 // pred_fallthru
      _
    %p1159 = scmp.le.s32.totalorder 2, %s9
    // Predicated region
    $region45: #{bottleneck_forward.4} parent=5 // pred_check
      %p1160 = pneg %p1159
    $region46: #{bottleneck_forward.4} parent=5 // pred_check_branch
      %1162 = sbr.rel (%p1160) target = $region48
    $region47: #{bottleneck_forward.4} parent=5 // pred_region
      %s1163 = ssub.s32 %s9, 2
      // Predicated region
      $region49: #{bottleneck_forward.4} parent=47 // pred_check
        %p1164 = pneg %p141
      $region50: #{bottleneck_forward.4} parent=47 // pred_check_branch
        %1166 = sbr.rel (%p1164) target = $region52
      $region51: #{bottleneck_forward.4} parent=47 // pred_region
        %s1167 = smul.u32 32, %s22
        %p1168 = scmp.lt.s32.totalorder %s1167, 63
        %s1169 = scalar_select %p1168, %s1167, 63
        %p1170 = scmp.lt.s32.totalorder %s23, 0
        %s1171 = scalar_select %p1170, %s23, 0
        %s1172 = sadd.s32 %s1171, %s1169
        %s1173 = smul.addr %s1172, 4
        %s1174 = scalar_lea.vmem %s3, %s1173
      $region52: #{bottleneck_forward.4} parent=47 // pred_fallthru
        _
    $region48: #{bottleneck_forward.4} parent=5 // pred_fallthru
      _
  $region6: #{bottleneck_forward.4} parent=0 // loop_footer
    %s13 = sadd.s32 1, %s9
  $region7: #{bottleneck_forward.4} parent=0 // loop_footer_branch
    %8 = sbr.rel target = $region3
  $region8: #{bottleneck_forward.4} parent=0 // loop_exit
    _

// kernel: bottleneck_forward.5
$region0: #{bottleneck_forward.5}
  #allocation0 [shape = 'u32[]', space=smem, size = 0x4, offset = 0x4, fixed_abs, tag = 'smem constant byte address 0x4 - core index']
  #allocation1 [shape = 'u32[144,128]{1,0:T(1,128)}', space=vmem, size = 0x12000, scoped, tag = 'internal scratch']
  #allocation2 [shape = 'f32[256,128]{1,0:T(8,128)}', space=vmem, size = 0x20000, scoped, tag = 'scratch operand']
  %s0 = inlined_call_operand.vmem [shape: bf16[512,128], index: 0, kind: input, shape index: {}]
  %s1 = inlined_call_operand.vmem [shape: bf16[128,128], index: 1, kind: input, shape index: {}]
  %s2 = inlined_call_operand.vmem [shape: f32[1,128], index: 2, kind: input, shape index: {}]
  %s3 = inlined_call_operand.vmem [shape: f32[512,128], index: 3, kind: input, shape index: {}]
  %s4 = inlined_call_operand.hbm [shape: f32[512,128], index: 4, kind: output, shape index: {}]
  %s5 = sld [smem:[#allocation0]]
  $region57: #{bottleneck_forward.5} parent=0
    _
  %s7 = ssub.s32 1, %s5
  %s8 = scalar_select 0, %s7, %s5
  $region1: #{bottleneck_forward.5} parent=0
    #allocation3 [shape = 'u8[262144]{0}', space=vmem, size = 0x40000, scoped, tag = 'output window, operand 0']
    #allocation4 [shape = 's32[2]{0}', space=sflag, size = 0x8, scoped, tag = 'scoped memory for bottleneck_forward.5']
    %9 = vsyncpa [#allocation4], 0
    %s10 = scalar_lea.sflag [#allocation4], 1
    %11 = vsyncpa %s10, 0
    loop: start=0, step=1, limit=4
    $region2: #{bottleneck_forward.5} parent=1 // loop_pre_header
      _
    $region3: #{bottleneck_forward.5} parent=1 // loop_header
      %s13 = sphi 0, %s17
      %p14 = scmp.ge.s32.totalorder %s13, 4
      %s20 = sphi 0, %s39
      %s21 = sphi 0, %s35
      %s22 = sphi 0, %s31
      %s23 = sphi 0, %s20
      %s24 = sphi 0, %s21
      %s25 = sphi 0, %s22
      %s26 = sphi 0, %s23
      %s27 = sphi 0, %s24
      %s28 = sphi 0, %s25
      %s44 = sphi 0, %s46
      %s47 = sphi 0, %s44
      %s48 = sphi 0, %s47
      %s64 = sphi 0, %s48
      %s72 = sphi 0, %s74
      %s75 = sphi 0, %s72
      %s76 = sphi 0, %s75
      %s92 = sphi 0, %s76
      %s98 = sphi 0, %s100
      %s101 = sphi 0, %s98
      %s102 = sphi 0, %s101
      %s118 = sphi 0, %s102
      %s126 = sphi 0, %s128
      %s129 = sphi 0, %s126
      %s130 = sphi 0, %s129
      %s146 = sphi 0, %s130
      %s154 = sphi 0, %s156
      %s157 = sphi 0, %s154
      %s158 = sphi 0, %s157
      %s174 = sphi 0, %s158
    $region4: #{bottleneck_forward.5} parent=1 // loop_header_branch
      %16 = sbr.rel (%p14) target = $region8
    $region5: #{bottleneck_forward.5} parent=1 // loop_body
      %s18 = ssub.s32 %s13, 1
      %s19 = ssub.s32 %s13, 2
      %s29 = sadd.s32 1, %s22
      %p30 = scmp.ge.s32.totalorder %s29, 1
      %s31 = scalar_select %p30, 0, %s29
      %s32 = sadd.s32 1, %s21
      %s33 = scalar_select %p30, %s32, %s21
      %p34 = scmp.ge.s32.totalorder %s33, 1
      %s35 = scalar_select %p34, 0, %s33
      %s36 = sadd.s32 1, %s20
      %s37 = scalar_select %p34, %s36, %s20
      %p38 = scmp.ge.s32.totalorder %s37, 2
      %s39 = scalar_select %p38, 0, %s37
      %s40 = ssub.s32 %s20, %s39
      %s41 = ssub.s32 %s22, %s31
      %s42 = sor.u32 %s40, %s41
      %p43 = scmp.eq.s32.totalorder %s42, 0
      %s45 = sadd.s32 %s44, 1
      %s46 = scalar_select %p43, %s44, %s45
      %p49 = pneg %p43
      %p50 = scmp.eq.s32.totalorder %s13, 1
      %p51 = por %p49, %p50
      %p52 = scmp.ne.s32.totalorder %s44, %s47
      %p53 = scmp.eq.s32.totalorder %s13, 0
      %p54 = por %p52, %p53
      %p55 = scmp.ne.s32.totalorder %s44, %s47
      %p56 = scmp.eq.s32.totalorder %s18, 1
      %p57 = por %p55, %p56
      %p58 = scmp.ne.s32.totalorder %s47, %s48
      %p59 = scmp.eq.s32.totalorder %s18, 0
      %p60 = por %p58, %p59
      %p61 = scmp.ne.s32.totalorder %s47, %s48
      %p62 = scmp.eq.s32.totalorder %s19, 1
      %p63 = por %p61, %p62
      %p65 = scmp.ne.s32.totalorder %s48, %s64
      %p66 = scmp.eq.s32.totalorder %s19, 0
      %p67 = por %p65, %p66
      %s68 = ssub.s32 %s22, %s31
      %s69 = ssub.s32 %s21, %s35
      %s70 = sor.u32 %s68, %s69
      %p71 = scmp.eq.s32.totalorder %s70, 0
      %s73 = sadd.s32 %s72, 1
      %s74 = scalar_select %p71, %s72, %s73
      %p77 = pneg %p71
      %p78 = scmp.eq.s32.totalorder %s13, 1
      %p79 = por %p77, %p78
      %p80 = scmp.ne.s32.totalorder %s72, %s75
      %p81 = scmp.eq.s32.totalorder %s13, 0
      %p82 = por %p80, %p81
      %p83 = scmp.ne.s32.totalorder %s72, %s75
      %p84 = scmp.eq.s32.totalorder %s18, 1
      %p85 = por %p83, %p84
      %p86 = scmp.ne.s32.totalorder %s75, %s76
      %p87 = scmp.eq.s32.totalorder %s18, 0
      %p88 = por %p86, %p87
      %p89 = scmp.ne.s32.totalorder %s75, %s76
      %p90 = scmp.eq.s32.totalorder %s19, 1
      %p91 = por %p89, %p90
      %p93 = scmp.ne.s32.totalorder %s76, %s92
      %p94 = scmp.eq.s32.totalorder %s19, 0
      %p95 = por %p93, %p94
      %s96 = ssub.s32 %s21, %s35
      %p97 = scmp.eq.s32.totalorder %s96, 0
      %s99 = sadd.s32 %s98, 1
      %s100 = scalar_select %p97, %s98, %s99
      %p103 = pneg %p97
      %p104 = scmp.eq.s32.totalorder %s13, 1
      %p105 = por %p103, %p104
      %p106 = scmp.ne.s32.totalorder %s98, %s101
      %p107 = scmp.eq.s32.totalorder %s13, 0
      %p108 = por %p106, %p107
      %p109 = scmp.ne.s32.totalorder %s98, %s101
      %p110 = scmp.eq.s32.totalorder %s18, 1
      %p111 = por %p109, %p110
      %p112 = scmp.ne.s32.totalorder %s101, %s102
      %p113 = scmp.eq.s32.totalorder %s18, 0
      %p114 = por %p112, %p113
      %p115 = scmp.ne.s32.totalorder %s101, %s102
      %p116 = scmp.eq.s32.totalorder %s19, 1
      %p117 = por %p115, %p116
      %p119 = scmp.ne.s32.totalorder %s102, %s118
      %p120 = scmp.eq.s32.totalorder %s19, 0
      %p121 = por %p119, %p120
      %s122 = ssub.s32 %s20, %s39
      %s123 = ssub.s32 %s21, %s35
      %s124 = sor.u32 %s122, %s123
      %p125 = scmp.eq.s32.totalorder %s124, 0
      %s127 = sadd.s32 %s126, 1
      %s128 = scalar_select %p125, %s126, %s127
      %p131 = pneg %p125
      %p132 = scmp.eq.s32.totalorder %s13, 1
      %p133 = por %p131, %p132
      %p134 = scmp.ne.s32.totalorder %s126, %s129
      %p135 = scmp.eq.s32.totalorder %s13, 0
      %p136 = por %p134, %p135
      %p137 = scmp.ne.s32.totalorder %s126, %s129
      %p138 = scmp.eq.s32.totalorder %s18, 1
      %p139 = por %p137, %p138
      %p140 = scmp.ne.s32.totalorder %s129, %s130
      %p141 = scmp.eq.s32.totalorder %s18, 0
      %p142 = por %p140, %p141
      %p143 = scmp.ne.s32.totalorder %s129, %s130
      %p144 = scmp.eq.s32.totalorder %s19, 1
      %p145 = por %p143, %p144
      %p147 = scmp.ne.s32.totalorder %s130, %s146
      %p148 = scmp.eq.s32.totalorder %s19, 0
      %p149 = por %p147, %p148
      %s150 = ssub.s32 %s20, %s39
      %s151 = ssub.s32 %s21, %s35
      %s152 = sor.u32 %s150, %s151
      %p153 = scmp.eq.s32.totalorder %s152, 0
      %s155 = sadd.s32 %s154, 1
      %s156 = scalar_select %p153, %s154, %s155
      %p159 = pneg %p153
      %p160 = scmp.eq.s32.totalorder %s13, 1
      %p161 = por %p159, %p160
      %p162 = scmp.ne.s32.totalorder %s154, %s157
      %p163 = scmp.eq.s32.totalorder %s13, 0
      %p164 = por %p162, %p163
      %p165 = scmp.ne.s32.totalorder %s154, %s157
      %p166 = scmp.eq.s32.totalorder %s18, 1
      %p167 = por %p165, %p166
      %p168 = scmp.ne.s32.totalorder %s157, %s158
      %p169 = scmp.eq.s32.totalorder %s18, 0
      %p170 = por %p168, %p169
      %p171 = scmp.ne.s32.totalorder %s157, %s158
      %p172 = scmp.eq.s32.totalorder %s19, 1
      %p173 = por %p171, %p172
      %p175 = scmp.ne.s32.totalorder %s158, %s174
      %p176 = scmp.eq.s32.totalorder %s19, 0
      %p177 = por %p175, %p176
      %p178 = scmp.le.s32.totalorder 1, %s13
      %p179 = scmp.lt.s32.totalorder %s13, 3
      %p180 = pnand %p178, %p179
      %p181 = pneg %p180
      // Predicated region
      $region9: #{bottleneck_forward.5} parent=5 // pred_check
        _
      $region10: #{bottleneck_forward.5} parent=5 // pred_check_branch
        %183 = sbr.rel (%p180) target = $region12
      $region11: #{bottleneck_forward.5} parent=5 // pred_region
        %s184 = ssub.s32 %s13, 1
        // Predicated region
        $region13: #{bottleneck_forward.5} parent=11 // pred_check
          %p185 = pneg %p88
        $region14: #{bottleneck_forward.5} parent=11 // pred_check_branch
          %187 = sbr.rel (%p185) target = $region16
        $region15: #{bottleneck_forward.5} parent=11 // pred_region
          %s188 = smul.u32 16, %s25
          %p189 = scmp.lt.s32.totalorder %s188, 15
          %s190 = scalar_select %p189, %s188, 15
          %p191 = scmp.lt.s32.totalorder %s24, 0
          %s192 = scalar_select %p191, %s24, 0
          %s193 = sadd.s32 %s192, %s190
          %s194 = smul.addr %s193, 4
          %s195 = scalar_lea.vmem %s1, %s194
          %s196 = smul.u32 16, %s25
        $region16: #{bottleneck_forward.5} parent=11 // pred_fallthru
          _
        // Predicated region
        $region17: #{bottleneck_forward.5} parent=11 // pred_check
          %p197 = pneg %p114
        $region18: #{bottleneck_forward.5} parent=11 // pred_check_branch
          %199 = sbr.rel (%p197) target = $region20
        $region19: #{bottleneck_forward.5} parent=11 // pred_region
          %p200 = scmp.lt.s32.totalorder %s24, 0
          %s201 = scalar_select %p200, %s24, 0
          %s202 = scalar_lea.vmem %s2, %s201
        $region20: #{bottleneck_forward.5} parent=11 // pred_fallthru
          _
      $region12: #{bottleneck_forward.5} parent=5 // pred_fallthru
        _
      %p203 = scmp.lt.s32.totalorder %s13, 2
      // Predicated region
      $region21: #{bottleneck_forward.5} parent=5 // pred_check
        %p204 = pneg %p203
      $region22: #{bottleneck_forward.5} parent=5 // pred_check_branch
        %206 = sbr.rel (%p204) target = $region24
      $region23: #{bottleneck_forward.5} parent=5 // pred_region
        // Predicated region
        $region25: #{bottleneck_forward.5} parent=23 // pred_check
          %p207 = pneg %p54
        $region26: #{bottleneck_forward.5} parent=23 // pred_check_branch
          %209 = sbr.rel (%p207) target = $region28
        $region27: #{bottleneck_forward.5} parent=23 // pred_region
          %s210 = smul.u32 32, %s20
          %p211 = scmp.lt.s32.totalorder %s210, 63
          %s212 = scalar_select %p211, %s210, 63
          %p213 = scmp.lt.s32.totalorder %s22, 0
          %s214 = scalar_select %p213, %s22, 0
          %s215 = sadd.s32 %s214, %s212
          %s216 = smul.addr %s215, 4
          %s217 = scalar_lea.vmem %s0, %s216
          %s218 = smul.u32 32, %s20
        $region28: #{bottleneck_forward.5} parent=23 // pred_fallthru
          _
        // Predicated region
        $region29: #{bottleneck_forward.5} parent=23 // pred_check
          %p219 = pneg %p136
        $region30: #{bottleneck_forward.5} parent=23 // pred_check_branch
          %221 = sbr.rel (%p219) target = $region32
        $region31: #{bottleneck_forward.5} parent=23 // pred_region
          %s222 = smul.u32 32, %s20
          %p223 = scmp.lt.s32.totalorder %s222, 63
          %s224 = scalar_select %p223, %s222, 63
          %p225 = scmp.lt.s32.totalorder %s21, 0
          %s226 = scalar_select %p225, %s21, 0
          %s227 = sadd.s32 %s226, %s224
          %s228 = smul.addr %s227, 8
          %s229 = scalar_lea.vmem %s3, %s228
          %s230 = smul.u32 32, %s20
        $region32: #{bottleneck_forward.5} parent=23 // pred_fallthru
          _
      $region24: #{bottleneck_forward.5} parent=5 // pred_fallthru
        _
      %p231 = scmp.le.s32.totalorder 1, %s13
      %p232 = scmp.lt.s32.totalorder %s13, 3
      %p233 = pnand %p231, %p232
      %p234 = pneg %p233
      // Predicated region
      $region33: #{bottleneck_forward.5} parent=5 // pred_check
        _
      $region34: #{bottleneck_forward.5} parent=5 // pred_check_branch
        %236 = sbr.rel (%p233) target = $region36
      $region35: #{bottleneck_forward.5} parent=5 // pred_region
        %s237 = ssub.s32 %s13, 1
        %s238 = smul.u32 32, %s23
        %p239 = scmp.lt.s32.totalorder %s238, 63
        %s240 = scalar_select %p239, %s238, 63
        %p241 = scmp.lt.s32.totalorder %s25, 0
        %s242 = scalar_select %p241, %s25, 0
        %s243 = sadd.s32 %s242, %s240
        %s244 = smul.addr %s243, 4
        %s245 = scalar_lea.vmem %s0, %s244
        %p246 = pneg %p60
        %p247 = pneg %p57
        %s248 = smul.u32 16, %s25
        %p249 = scmp.lt.s32.totalorder %s248, 15
        %s250 = scalar_select %p249, %s248, 15
        %p251 = scmp.lt.s32.totalorder %s24, 0
        %s252 = scalar_select %p251, %s24, 0
        %s253 = sadd.s32 %s252, %s250
        %s254 = smul.addr %s253, 4
        %s255 = scalar_lea.vmem %s1, %s254
        %p256 = pneg %p88
        %p257 = pneg %p85
        %p258 = scmp.lt.s32.totalorder %s24, 0
        %s259 = scalar_select %p258, %s24, 0
        %s260 = scalar_lea.vmem %s2, %s259
        %p261 = pneg %p114
        %p262 = pneg %p111
        %s263 = smul.u32 32, %s23
        %p264 = scmp.lt.s32.totalorder %s263, 63
        %s265 = scalar_select %p264, %s263, 63
        %p266 = scmp.lt.s32.totalorder %s24, 0
        %s267 = scalar_select %p266, %s24, 0
        %s268 = sadd.s32 %s267, %s265
        %s269 = smul.addr %s268, 8
        %s270 = scalar_lea.vmem %s3, %s269
        %p271 = pneg %p142
        %p272 = pneg %p139
        %p273 = pneg %p170
        %p274 = pneg %p167
        %s275 = sand.u32 %s157, 1
        %s276 = scalar_lea.sflag [#allocation4], %s275
        %s277 = sand.u32 %s157, 1
        %s278 = smul.addr %s277, 256
        %s279 = scalar_lea.vmem [#allocation3], %s278
        %s280 = smul.u32 32, %s23
        %p281 = scmp.lt.s32.totalorder %s280, 63
        %s282 = scalar_select %p281, %s280, 63
        %p283 = scmp.lt.s32.totalorder %s25, 0
        %s284 = scalar_select %p283, %s25, 0
        %s285 = sadd.s32 %s284, %s282
        %s286 = smul.addr %s285, 4
        %s287 = scalar_lea.vmem %s0, %s286
        %s288 = smul.u32 32, %s23
        %s289 = smul.u32 16, %s25
        %p290 = scmp.lt.s32.totalorder %s289, 15
        %s291 = scalar_select %p290, %s289, 15
        %p292 = scmp.lt.s32.totalorder %s24, 0
        %s293 = scalar_select %p292, %s24, 0
        %s294 = sadd.s32 %s293, %s291
        %s295 = smul.addr %s294, 4
        %s296 = scalar_lea.vmem %s1, %s295
        %s297 = smul.u32 16, %s25
        %p298 = scmp.lt.s32.totalorder %s24, 0
        %s299 = scalar_select %p298, %s24, 0
        %s300 = scalar_lea.vmem %s2, %s299
        %s301 = smul.u32 32, %s23
        %p302 = scmp.lt.s32.totalorder %s301, 63
        %s303 = scalar_select %p302, %s301, 63
        %p304 = scmp.lt.s32.totalorder %s24, 0
        %s305 = scalar_select %p304, %s24, 0
        %s306 = sadd.s32 %s305, %s303
        %s307 = smul.addr %s306, 8
        %s308 = scalar_lea.vmem %s3, %s307
        %s309 = smul.u32 32, %s23
        %s310 = smul.u32 32, %s23
        %p312 = scmp.eq.s32.totalorder %s25, 0
        // Predicated region
        $region37: #{bottleneck_forward.5} parent=35 // pred_check
          %p313 = pneg %p312
        $region38: #{bottleneck_forward.5} parent=35 // pred_check_branch
          %315 = sbr.rel (%p313) target = $region40
        $region39: #{bottleneck_forward.5} parent=35 // pred_region
          %316 = vst [vmem:[#allocation2] sm:$0xff] 0.0
          %317 = vst [vmem:[#allocation2 + $0x8] sm:$0xff] 0.0
          %318 = vst [vmem:[#allocation2 + $0x10] sm:$0xff] 0.0
          %319 = vst [vmem:[#allocation2 + $0x18] sm:$0xff] 0.0
          %320 = vst [vmem:[#allocation2 + $0x20] sm:$0xff] 0.0
          %321 = vst [vmem:[#allocation2 + $0x28] sm:$0xff] 0.0
          %322 = vst [vmem:[#allocation2 + $0x30] sm:$0xff] 0.0
          %323 = vst [vmem:[#allocation2 + $0x38] sm:$0xff] 0.0
          %324 = vst [vmem:[#allocation2 + $0x40] sm:$0xff] 0.0
          %325 = vst [vmem:[#allocation2 + $0x48] sm:$0xff] 0.0
          %326 = vst [vmem:[#allocation2 + $0x50] sm:$0xff] 0.0
          %327 = vst [vmem:[#allocation2 + $0x58] sm:$0xff] 0.0
          %328 = vst [vmem:[#allocation2 + $0x60] sm:$0xff] 0.0
          %329 = vst [vmem:[#allocation2 + $0x68] sm:$0xff] 0.0
          %330 = vst [vmem:[#allocation2 + $0x70] sm:$0xff] 0.0
          %331 = vst [vmem:[#allocation2 + $0x78] sm:$0xff] 0.0
          %332 = vst [vmem:[#allocation2 + $0x80] sm:$0xff] 0.0
          %333 = vst [vmem:[#allocation2 + $0x88] sm:$0xff] 0.0
          %334 = vst [vmem:[#allocation2 + $0x90] sm:$0xff] 0.0
          %335 = vst [vmem:[#allocation2 + $0x98] sm:$0xff] 0.0
          %336 = vst [vmem:[#allocation2 + $0xa0] sm:$0xff] 0.0
          %337 = vst [vmem:[#allocation2 + $0xa8] sm:$0xff] 0.0
          %338 = vst [vmem:[#allocation2 + $0xb0] sm:$0xff] 0.0
          %339 = vst [vmem:[#allocation2 + $0xb8] sm:$0xff] 0.0
          %340 = vst [vmem:[#allocation2 + $0xc0] sm:$0xff] 0.0
          %341 = vst [vmem:[#allocation2 + $0xc8] sm:$0xff] 0.0
          %342 = vst [vmem:[#allocation2 + $0xd0] sm:$0xff] 0.0
          %343 = vst [vmem:[#allocation2 + $0xd8] sm:$0xff] 0.0
          %344 = vst [vmem:[#allocation2 + $0xe0] sm:$0xff] 0.0
          %345 = vst [vmem:[#allocation2 + $0xe8] sm:$0xff] 0.0
          %346 = vst [vmem:[#allocation2 + $0xf0] sm:$0xff] 0.0
          %347 = vst [vmem:[#allocation2 + $0xf8] sm:$0xff] 0.0
        $region40: #{bottleneck_forward.5} parent=35 // pred_fallthru
          _
        %v348 = vld [vmem:[#allocation2] sm:$0xff]
        %v349 = vld [vmem:[#allocation2 + $0x8] sm:$0xff]
        %v350 = vld [vmem:[#allocation2 + $0x10] sm:$0xff]
        %v351 = vld [vmem:[#allocation2 + $0x18] sm:$0xff]
        %v352 = vld [vmem:[#allocation2 + $0x20] sm:$0xff]
        %v353 = vld [vmem:[#allocation2 + $0x28] sm:$0xff]
        %v354 = vld [vmem:[#allocation2 + $0x30] sm:$0xff]
        %v355 = vld [vmem:[#allocation2 + $0x38] sm:$0xff]
        %v356 = vld [vmem:[#allocation2 + $0x40] sm:$0xff]
        %v357 = vld [vmem:[#allocation2 + $0x48] sm:$0xff]
        %v358 = vld [vmem:[#allocation2 + $0x50] sm:$0xff]
        %v359 = vld [vmem:[#allocation2 + $0x58] sm:$0xff]
        %v360 = vld [vmem:[#allocation2 + $0x60] sm:$0xff]
        %v361 = vld [vmem:[#allocation2 + $0x68] sm:$0xff]
        %v362 = vld [vmem:[#allocation2 + $0x70] sm:$0xff]
        %v363 = vld [vmem:[#allocation2 + $0x78] sm:$0xff]
        %v364 = vld [vmem:[#allocation2 + $0x80] sm:$0xff]
        %v365 = vld [vmem:[#allocation2 + $0x88] sm:$0xff]
        %v366 = vld [vmem:[#allocation2 + $0x90] sm:$0xff]
        %v367 = vld [vmem:[#allocation2 + $0x98] sm:$0xff]
        %v368 = vld [vmem:[#allocation2 + $0xa0] sm:$0xff]
        %v369 = vld [vmem:[#allocation2 + $0xa8] sm:$0xff]
        %v370 = vld [vmem:[#allocation2 + $0xb0] sm:$0xff]
        %v371 = vld [vmem:[#allocation2 + $0xb8] sm:$0xff]
        %v372 = vld [vmem:[#allocation2 + $0xc0] sm:$0xff]
        %v373 = vld [vmem:[#allocation2 + $0xc8] sm:$0xff]
        %v374 = vld [vmem:[#allocation2 + $0xd0] sm:$0xff]
        %v375 = vld [vmem:[#allocation2 + $0xd8] sm:$0xff]
        %v376 = vld [vmem:[#allocation2 + $0xe0] sm:$0xff]
        %v377 = vld [vmem:[#allocation2 + $0xe8] sm:$0xff]
        %v378 = vld [vmem:[#allocation2 + $0xf0] sm:$0xff]
        %v379 = vld [vmem:[#allocation2 + $0xf8] sm:$0xff]
        %v380 = vld [vmem:[%s287] sm:$0xf]
        %v381 = vld [vmem:[%s287 + $0x4] sm:$0xf]
        %v382 = vld [vmem:[%s287 + $0x8] sm:$0xf]
        %v383 = vld [vmem:[%s287 + $0xc] sm:$0xf]
        %v384 = vld [vmem:[%s287 + $0x10] sm:$0xf]
        %v385 = vld [vmem:[%s287 + $0x14] sm:$0xf]
        %v386 = vld [vmem:[%s287 + $0x18] sm:$0xf]
        %v387 = vld [vmem:[%s287 + $0x1c] sm:$0xf]
        %v388 = vld [vmem:[%s287 + $0x20] sm:$0xf]
        %v389 = vld [vmem:[%s287 + $0x24] sm:$0xf]
        %v390 = vld [vmem:[%s287 + $0x28] sm:$0xf]
        %v391 = vld [vmem:[%s287 + $0x2c] sm:$0xf]
        %v392 = vld [vmem:[%s287 + $0x30] sm:$0xf]
        %v393 = vld [vmem:[%s287 + $0x34] sm:$0xf]
        %v394 = vld [vmem:[%s287 + $0x38] sm:$0xf]
        %v395 = vld [vmem:[%s287 + $0x3c] sm:$0xf]
        %v396 = vld [vmem:[%s287 + $0x40] sm:$0xf]
        %v397 = vld [vmem:[%s287 + $0x44] sm:$0xf]
        %v398 = vld [vmem:[%s287 + $0x48] sm:$0xf]
        %v399 = vld [vmem:[%s287 + $0x4c] sm:$0xf]
        %v400 = vld [vmem:[%s287 + $0x50] sm:$0xf]
        %v401 = vld [vmem:[%s287 + $0x54] sm:$0xf]
        %v402 = vld [vmem:[%s287 + $0x58] sm:$0xf]
        %v403 = vld [vmem:[%s287 + $0x5c] sm:$0xf]
        %v404 = vld [vmem:[%s287 + $0x60] sm:$0xf]
        %v405 = vld [vmem:[%s287 + $0x64] sm:$0xf]
        %v406 = vld [vmem:[%s287 + $0x68] sm:$0xf]
        %v407 = vld [vmem:[%s287 + $0x6c] sm:$0xf]
        %v408 = vld [vmem:[%s287 + $0x70] sm:$0xf]
        %v409 = vld [vmem:[%s287 + $0x74] sm:$0xf]
        %v410 = vld [vmem:[%s287 + $0x78] sm:$0xf]
        %v411 = vld [vmem:[%s287 + $0x7c] sm:$0xf]
        %v412 = vld [vmem:[%s296] sm:$0xf]
        %v413 = vld [vmem:[%s296 + $0x4] sm:$0xf]
        %v414 = vld [vmem:[%s296 + $0x8] sm:$0xf]
        %v415 = vld [vmem:[%s296 + $0xc] sm:$0xf]
        %v416 = vld [vmem:[%s296 + $0x10] sm:$0xf]
        %v417 = vld [vmem:[%s296 + $0x14] sm:$0xf]
        %v418 = vld [vmem:[%s296 + $0x18] sm:$0xf]
        %v419 = vld [vmem:[%s296 + $0x1c] sm:$0xf]
        %v420 = vld [vmem:[%s296 + $0x20] sm:$0xf]
        %v421 = vld [vmem:[%s296 + $0x24] sm:$0xf]
        %v422 = vld [vmem:[%s296 + $0x28] sm:$0xf]
        %v423 = vld [vmem:[%s296 + $0x2c] sm:$0xf]
        %v424 = vld [vmem:[%s296 + $0x30] sm:$0xf]
        %v425 = vld [vmem:[%s296 + $0x34] sm:$0xf]
        %v426 = vld [vmem:[%s296 + $0x38] sm:$0xf]
        %v427 = vld [vmem:[%s296 + $0x3c] sm:$0xf]
        %v460 = vunpack.c.l.b16 %v380
        %v461 = vunpack.c.l.b16 %v381
        %v462 = vunpack.c.l.b16 %v382
        %v463 = vunpack.c.l.b16 %v383
        %v464 = vunpack.c.l.b16 %v384
        %v465 = vunpack.c.l.b16 %v385
        %v466 = vunpack.c.l.b16 %v386
        %v467 = vunpack.c.l.b16 %v387
        %v468 = vunpack.c.l.b16 %v388
        %v469 = vunpack.c.l.b16 %v389
        %v470 = vunpack.c.l.b16 %v390
        %v471 = vunpack.c.l.b16 %v391
        %v472 = vunpack.c.l.b16 %v392
        %v473 = vunpack.c.l.b16 %v393
        %v474 = vunpack.c.l.b16 %v394
        %v475 = vunpack.c.l.b16 %v395
        %v476 = vunpack.c.l.b16 %v396
        %v477 = vunpack.c.l.b16 %v397
        %v478 = vunpack.c.l.b16 %v398
        %v479 = vunpack.c.l.b16 %v399
        %v480 = vunpack.c.l.b16 %v400
        %v481 = vunpack.c.l.b16 %v401
        %v482 = vunpack.c.l.b16 %v402
        %v483 = vunpack.c.l.b16 %v403
        %v484 = vunpack.c.l.b16 %v404
        %v485 = vunpack.c.l.b16 %v405
        %v486 = vunpack.c.l.b16 %v406
        %v487 = vunpack.c.l.b16 %v407
        %v488 = vunpack.c.l.b16 %v408
        %v489 = vunpack.c.l.b16 %v409
        %v490 = vunpack.c.l.b16 %v410
        %v491 = vunpack.c.l.b16 %v411
        %v492 = vpack.c.b16 %v461, %v460
        %v493 = vpack.c.b16 %v463, %v462
        %v494 = vpack.c.b16 %v465, %v464
        %v495 = vpack.c.b16 %v467, %v466
        %v496 = vpack.c.b16 %v469, %v468
        %v497 = vpack.c.b16 %v471, %v470
        %v498 = vpack.c.b16 %v473, %v472
        %v499 = vpack.c.b16 %v475, %v474
        %v500 = vpack.c.b16 %v477, %v476
        %v501 = vpack.c.b16 %v479, %v478
        %v502 = vpack.c.b16 %v481, %v480
        %v503 = vpack.c.b16 %v483, %v482
        %v504 = vpack.c.b16 %v485, %v484
        %v505 = vpack.c.b16 %v487, %v486
        %v506 = vpack.c.b16 %v489, %v488
        %v507 = vpack.c.b16 %v491, %v490
        %v540 = vunpack.c.l.b16 %v412
        %v541 = vunpack.c.l.b16 %v413
        %v542 = vunpack.c.l.b16 %v414
        %v543 = vunpack.c.l.b16 %v415
        %v544 = vunpack.c.l.b16 %v416
        %v545 = vunpack.c.l.b16 %v417
        %v546 = vunpack.c.l.b16 %v418
        %v547 = vunpack.c.l.b16 %v419
        %v548 = vunpack.c.l.b16 %v420
        %v549 = vunpack.c.l.b16 %v421
        %v550 = vunpack.c.l.b16 %v422
        %v551 = vunpack.c.l.b16 %v423
        %v552 = vunpack.c.l.b16 %v424
        %v553 = vunpack.c.l.b16 %v425
        %v554 = vunpack.c.l.b16 %v426
        %v555 = vunpack.c.l.b16 %v427
        %v556 = vpack.c.b16 %v541, %v540
        %v557 = vpack.c.b16 %v543, %v542
        %v558 = vpack.c.b16 %v545, %v544
        %v559 = vpack.c.b16 %v547, %v546
        %v560 = vpack.c.b16 %v549, %v548
        %v561 = vpack.c.b16 %v551, %v550
        %v562 = vpack.c.b16 %v553, %v552
        %v563 = vpack.c.b16 %v555, %v554
        %572 = vmatprep.subr.bf16.mxu0 0
        %573 = vmatpush1.bf16.msra.mxu0 %v556
        %574 = vmatprep.subr.bf16.mxu0 0
        %575 = vmatpush1.bf16.msra.mxu0 %v557
        %576 = vmatprep.subr.bf16.mxu0 0
        %577 = vmatpush1.bf16.msra.mxu0 %v558
        %578 = vmatprep.subr.bf16.mxu0 0
        %579 = vmatpush1.bf16.msra.mxu0 %v559
        %580 = vmatprep.subr.bf16.mxu0 0
        %581 = vmatpush1.bf16.msra.mxu0 %v560
        %582 = vmatprep.subr.bf16.mxu0 0
        %583 = vmatpush1.bf16.msra.mxu0 %v561
        %584 = vmatprep.subr.bf16.mxu0 0
        %585 = vmatpush1.bf16.msra.mxu0 %v562
        %586 = vmatprep.subr.bf16.mxu0 0
        %587 = vmatpush1.bf16.msra.mxu0 %v563
        %588 = vmatprep.subr.bf16.mxu0 0
        %589 = vmatpush1.bf16.msra.mxu0 0
        %590 = vmatprep.subr.bf16.mxu0 0
        %591 = vmatpush1.bf16.msra.mxu0 0
        %592 = vmatprep.subr.bf16.mxu0 0
        %593 = vmatpush1.bf16.msra.mxu0 0
        %594 = vmatprep.subr.bf16.mxu0 0
        %595 = vmatpush1.bf16.msra.mxu0 0
        %596 = vmatprep.subr.bf16.mxu0 0
        %597 = vmatpush1.bf16.msra.mxu0 0
        %598 = vmatprep.subr.bf16.mxu0 0
        %599 = vmatpush1.bf16.msra.mxu0 0
        %600 = vmatprep.subr.bf16.mxu0 0
        %601 = vmatpush1.bf16.msra.mxu0 0
        %602 = vmatprep.subr.bf16.mxu0 0
        %603 = vmatpush1.bf16.msra.mxu0 0
        %604 = vmatprep.mubr.bf16.mxu0 0
        %605 = vmatmul.mubr.bf16.gmra.mrb[0].mxu0 %v492
        %v606 = vpop.f32.mrb[0].mxu0
        %v607 = vadd.f32 0.0, %v606
        %v608 = vpop.f32.mrb[0].mxu0
        %v609 = vpop.f32.mrb[0].mxu0
        %v610 = vadd.f32 0.0, %v609
        %v611 = vpop.f32.mrb[0].mxu0
        %612 = vmatprep.mubr.bf16.mxu0 0
        %613 = vmatmul.mubr.bf16.gmra.mrb[0].mxu0 %v493
        %v614 = vpop.f32.mrb[0].mxu0
        %v615 = vadd.f32 0.0, %v614
        %v616 = vpop.f32.mrb[0].mxu0
        %v617 = vpop.f32.mrb[0].mxu0
        %v618 = vadd.f32 0.0, %v617
        %v619 = vpop.f32.mrb[0].mxu0
        %620 = vmatprep.mubr.bf16.mxu0 0
        %621 = vmatmul.mubr.bf16.gmra.mrb[0].mxu0 %v494
        %v622 = vpop.f32.mrb[0].mxu0
        %v623 = vadd.f32 0.0, %v622
        %v624 = vpop.f32.mrb[0].mxu0
        %v625 = vpop.f32.mrb[0].mxu0
        %v626 = vadd.f32 0.0, %v625
        %v627 = vpop.f32.mrb[0].mxu0
        %628 = vmatprep.mubr.bf16.mxu0 0
        %629 = vmatmul.mubr.bf16.gmra.mrb[0].mxu0 %v495
        %v630 = vpop.f32.mrb[0].mxu0
        %v631 = vadd.f32 0.0, %v630
        %v632 = vpop.f32.mrb[0].mxu0
        %v633 = vpop.f32.mrb[0].mxu0
        %v634 = vadd.f32 0.0, %v633
        %v635 = vpop.f32.mrb[0].mxu0
        %636 = vmatprep.mubr.bf16.mxu0 0
        %637 = vmatmul.mubr.bf16.gmra.mrb[0].mxu0 %v496
        %v638 = vpop.f32.mrb[0].mxu0
        %v639 = vadd.f32 0.0, %v638
        %v640 = vpop.f32.mrb[0].mxu0
        %v641 = vpop.f32.mrb[0].mxu0
        %v642 = vadd.f32 0.0, %v641
        %v643 = vpop.f32.mrb[0].mxu0
        %644 = vmatprep.mubr.bf16.mxu0 0
        %645 = vmatmul.mubr.bf16.gmra.mrb[0].mxu0 %v497
        %v646 = vpop.f32.mrb[0].mxu0
        %v647 = vadd.f32 0.0, %v646
        %v648 = vpop.f32.mrb[0].mxu0
        %v649 = vpop.f32.mrb[0].mxu0
        %v650 = vadd.f32 0.0, %v649
        %v651 = vpop.f32.mrb[0].mxu0
        %652 = vmatprep.mubr.bf16.mxu0 0
        %653 = vmatmul.mubr.bf16.gmra.mrb[0].mxu0 %v498
        %v654 = vpop.f32.mrb[0].mxu0
        %v655 = vadd.f32 0.0, %v654
        %v656 = vpop.f32.mrb[0].mxu0
        %v657 = vpop.f32.mrb[0].mxu0
        %v658 = vadd.f32 0.0, %v657
        %v659 = vpop.f32.mrb[0].mxu0
        %660 = vmatprep.mubr.bf16.mxu0 0
        %661 = vmatmul.mubr.bf16.gmra.mrb[0].mxu0 %v499
        %v662 = vpop.f32.mrb[0].mxu0
        %v663 = vadd.f32 0.0, %v662
        %v664 = vpop.f32.mrb[0].mxu0
        %v665 = vpop.f32.mrb[0].mxu0
        %v666 = vadd.f32 0.0, %v665
        %v667 = vpop.f32.mrb[0].mxu0
        %668 = vmatprep.mubr.bf16.mxu0 0
        %669 = vmatmul.mubr.bf16.gmra.mrb[0].mxu0 %v500
        %v670 = vpop.f32.mrb[0].mxu0
        %v671 = vadd.f32 0.0, %v670
        %v672 = vpop.f32.mrb[0].mxu0
        %v673 = vpop.f32.mrb[0].mxu0
        %v674 = vadd.f32 0.0, %v673
        %v675 = vpop.f32.mrb[0].mxu0
        %676 = vmatprep.mubr.bf16.mxu0 0
        %677 = vmatmul.mubr.bf16.gmra.mrb[0].mxu0 %v501
        %v678 = vpop.f32.mrb[0].mxu0
        %v679 = vadd.f32 0.0, %v678
        %v680 = vpop.f32.mrb[0].mxu0
        %v681 = vpop.f32.mrb[0].mxu0
        %v682 = vadd.f32 0.0, %v681
        %v683 = vpop.f32.mrb[0].mxu0
        %684 = vmatprep.mubr.bf16.mxu0 0
        %685 = vmatmul.mubr.bf16.gmra.mrb[0].mxu0 %v502
        %v686 = vpop.f32.mrb[0].mxu0
        %v687 = vadd.f32 0.0, %v686
        %v688 = vpop.f32.mrb[0].mxu0
        %v689 = vpop.f32.mrb[0].mxu0
        %v690 = vadd.f32 0.0, %v689
        %v691 = vpop.f32.mrb[0].mxu0
        %692 = vmatprep.mubr.bf16.mxu0 0
        %693 = vmatmul.mubr.bf16.gmra.mrb[0].mxu0 %v503
        %v694 = vpop.f32.mrb[0].mxu0
        %v695 = vadd.f32 0.0, %v694
        %v696 = vpop.f32.mrb[0].mxu0
        %v697 = vpop.f32.mrb[0].mxu0
        %v698 = vadd.f32 0.0, %v697
        %v699 = vpop.f32.mrb[0].mxu0
        %700 = vmatprep.mubr.bf16.mxu0 0
        %701 = vmatmul.mubr.bf16.gmra.mrb[0].mxu0 %v504
        %v702 = vpop.f32.mrb[0].mxu0
        %v703 = vadd.f32 0.0, %v702
        %v704 = vpop.f32.mrb[0].mxu0
        %v705 = vpop.f32.mrb[0].mxu0
        %v706 = vadd.f32 0.0, %v705
        %v707 = vpop.f32.mrb[0].mxu0
        %708 = vmatprep.mubr.bf16.mxu0 0
        %709 = vmatmul.mubr.bf16.gmra.mrb[0].mxu0 %v505
        %v710 = vpop.f32.mrb[0].mxu0
        %v711 = vadd.f32 0.0, %v710
        %v712 = vpop.f32.mrb[0].mxu0
        %v713 = vpop.f32.mrb[0].mxu0
        %v714 = vadd.f32 0.0, %v713
        %v715 = vpop.f32.mrb[0].mxu0
        %716 = vmatprep.mubr.bf16.mxu0 0
        %717 = vmatmul.mubr.bf16.gmra.mrb[0].mxu0 %v506
        %v718 = vpop.f32.mrb[0].mxu0
        %v719 = vadd.f32 0.0, %v718
        %v720 = vpop.f32.mrb[0].mxu0
        %v721 = vpop.f32.mrb[0].mxu0
        %v722 = vadd.f32 0.0, %v721
        %v723 = vpop.f32.mrb[0].mxu0
        %724 = vmatprep.mubr.bf16.mxu0 0
        %725 = vmatmul.mubr.bf16.gmra.mrb[0].mxu0 %v507
        %v726 = vpop.f32.mrb[0].mxu0
        %v727 = vadd.f32 0.0, %v726
        %v728 = vpop.f32.mrb[0].mxu0
        %v729 = vpop.f32.mrb[0].mxu0
        %v730 = vadd.f32 0.0, %v729
        %v731 = vpop.f32.mrb[0].mxu0
        %732 = vdwg.mxu0
        %v733 = vadd.f32 %v348, %v607
        %v734 = vadd.f32 %v349, %v610
        %v735 = vadd.f32 %v350, %v615
        %v736 = vadd.f32 %v351, %v618
        %v737 = vadd.f32 %v352, %v623
        %v738 = vadd.f32 %v353, %v626
        %v739 = vadd.f32 %v354, %v631
        %v740 = vadd.f32 %v355, %v634
        %v741 = vadd.f32 %v356, %v639
        %v742 = vadd.f32 %v357, %v642
        %v743 = vadd.f32 %v358, %v647
        %v744 = vadd.f32 %v359, %v650
        %v745 = vadd.f32 %v360, %v655
        %v746 = vadd.f32 %v361, %v658
        %v747 = vadd.f32 %v362, %v663
        %v748 = vadd.f32 %v363, %v666
        %v749 = vadd.f32 %v364, %v671
        %v750 = vadd.f32 %v365, %v674
        %v751 = vadd.f32 %v366, %v679
        %v752 = vadd.f32 %v367, %v682
        %v753 = vadd.f32 %v368, %v687
        %v754 = vadd.f32 %v369, %v690
        %v755 = vadd.f32 %v370, %v695
        %v756 = vadd.f32 %v371, %v698
        %v757 = vadd.f32 %v372, %v703
        %v758 = vadd.f32 %v373, %v706
        %v759 = vadd.f32 %v374, %v711
        %v760 = vadd.f32 %v375, %v714
        %v761 = vadd.f32 %v376, %v719
        %v762 = vadd.f32 %v377, %v722
        %v763 = vadd.f32 %v378, %v727
        %v764 = vadd.f32 %v379, %v730
        %765 = vst [vmem:[#allocation2] sm:$0xff] %v733
        %766 = vst [vmem:[#allocation2 + $0x8] sm:$0xff] %v734
        %767 = vst [vmem:[#allocation2 + $0x10] sm:$0xff] %v735
        %768 = vst [vmem:[#allocation2 + $0x18] sm:$0xff] %v736
        %769 = vst [vmem:[#allocation2 + $0x20] sm:$0xff] %v737
        %770 = vst [vmem:[#allocation2 + $0x28] sm:$0xff] %v738
        %771 = vst [vmem:[#allocation2 + $0x30] sm:$0xff] %v739
        %772 = vst [vmem:[#allocation2 + $0x38] sm:$0xff] %v740
        %773 = vst [vmem:[#allocation2 + $0x40] sm:$0xff] %v741
        %774 = vst [vmem:[#allocation2 + $0x48] sm:$0xff] %v742
        %775 = vst [vmem:[#allocation2 + $0x50] sm:$0xff] %v743
        %776 = vst [vmem:[#allocation2 + $0x58] sm:$0xff] %v744
        %777 = vst [vmem:[#allocation2 + $0x60] sm:$0xff] %v745
        %778 = vst [vmem:[#allocation2 + $0x68] sm:$0xff] %v746
        %779 = vst [vmem:[#allocation2 + $0x70] sm:$0xff] %v747
        %780 = vst [vmem:[#allocation2 + $0x78] sm:$0xff] %v748
        %781 = vst [vmem:[#allocation2 + $0x80] sm:$0xff] %v749
        %782 = vst [vmem:[#allocation2 + $0x88] sm:$0xff] %v750
        %783 = vst [vmem:[#allocation2 + $0x90] sm:$0xff] %v751
        %784 = vst [vmem:[#allocation2 + $0x98] sm:$0xff] %v752
        %785 = vst [vmem:[#allocation2 + $0xa0] sm:$0xff] %v753
        %786 = vst [vmem:[#allocation2 + $0xa8] sm:$0xff] %v754
        %787 = vst [vmem:[#allocation2 + $0xb0] sm:$0xff] %v755
        %788 = vst [vmem:[#allocation2 + $0xb8] sm:$0xff] %v756
        %789 = vst [vmem:[#allocation2 + $0xc0] sm:$0xff] %v757
        %790 = vst [vmem:[#allocation2 + $0xc8] sm:$0xff] %v758
        %791 = vst [vmem:[#allocation2 + $0xd0] sm:$0xff] %v759
        %792 = vst [vmem:[#allocation2 + $0xd8] sm:$0xff] %v760
        %793 = vst [vmem:[#allocation2 + $0xe0] sm:$0xff] %v761
        %794 = vst [vmem:[#allocation2 + $0xe8] sm:$0xff] %v762
        %795 = vst [vmem:[#allocation2 + $0xf0] sm:$0xff] %v763
        %796 = vst [vmem:[#allocation2 + $0xf8] sm:$0xff] %v764
        // Predicated region
        $region41: #{bottleneck_forward.5} parent=35 // pred_check
          %p797 = pneg %p312
        $region42: #{bottleneck_forward.5} parent=35 // pred_check_branch
          %799 = sbr.rel (%p797) target = $region44
        $region43: #{bottleneck_forward.5} parent=35 // pred_region
          %v800 = vld [vmem:[#allocation2] sm:$0xff]
          %v801 = vld [vmem:[#allocation2 + $0x8] sm:$0xff]
          %v802 = vld [vmem:[#allocation2 + $0x10] sm:$0xff]
          %v803 = vld [vmem:[#allocation2 + $0x18] sm:$0xff]
          %v804 = vld [vmem:[#allocation2 + $0x20] sm:$0xff]
          %v805 = vld [vmem:[#allocation2 + $0x28] sm:$0xff]
          %v806 = vld [vmem:[#allocation2 + $0x30] sm:$0xff]
          %v807 = vld [vmem:[#allocation2 + $0x38] sm:$0xff]
          %v808 = vld [vmem:[#allocation2 + $0x40] sm:$0xff]
          %v809 = vld [vmem:[#allocation2 + $0x48] sm:$0xff]
          %v810 = vld [vmem:[#allocation2 + $0x50] sm:$0xff]
          %v811 = vld [vmem:[#allocation2 + $0x58] sm:$0xff]
          %v812 = vld [vmem:[#allocation2 + $0x60] sm:$0xff]
          %v813 = vld [vmem:[#allocation2 + $0x68] sm:$0xff]
          %v814 = vld [vmem:[#allocation2 + $0x70] sm:$0xff]
          %v815 = vld [vmem:[#allocation2 + $0x78] sm:$0xff]
          %v816 = vld [vmem:[#allocation2 + $0x80] sm:$0xff]
          %v817 = vld [vmem:[#allocation2 + $0x88] sm:$0xff]
          %v818 = vld [vmem:[#allocation2 + $0x90] sm:$0xff]
          %v819 = vld [vmem:[#allocation2 + $0x98] sm:$0xff]
          %v820 = vld [vmem:[#allocation2 + $0xa0] sm:$0xff]
          %v821 = vld [vmem:[#allocation2 + $0xa8] sm:$0xff]
          %v822 = vld [vmem:[#allocation2 + $0xb0] sm:$0xff]
          %v823 = vld [vmem:[#allocation2 + $0xb8] sm:$0xff]
          %v824 = vld [vmem:[#allocation2 + $0xc0] sm:$0xff]
          %v825 = vld [vmem:[#allocation2 + $0xc8] sm:$0xff]
          %v826 = vld [vmem:[#allocation2 + $0xd0] sm:$0xff]
          %v827 = vld [vmem:[#allocation2 + $0xd8] sm:$0xff]
          %v828 = vld [vmem:[#allocation2 + $0xe0] sm:$0xff]
          %v829 = vld [vmem:[#allocation2 + $0xe8] sm:$0xff]
          %v830 = vld [vmem:[#allocation2 + $0xf0] sm:$0xff]
          %v831 = vld [vmem:[#allocation2 + $0xf8] sm:$0xff]
          %v832 = vld [vmem:[%s300] sm:$0x1]
          %v834 = vlaneseq
          %v835 = vshrl.u32 %v834, 7
          %v836 = vsub.s32 0, %v835
          %v837 = vrot.slane %v832, %v836
          %v839 = vadd.f32 %v800, %v837
          %v840 = vadd.f32 %v801, %v837
          %v841 = vadd.f32 %v802, %v837
          %v842 = vadd.f32 %v803, %v837
          %v843 = vadd.f32 %v804, %v837
          %v844 = vadd.f32 %v805, %v837
          %v845 = vadd.f32 %v806, %v837
          %v846 = vadd.f32 %v807, %v837
          %v847 = vadd.f32 %v808, %v837
          %v848 = vadd.f32 %v809, %v837
          %v849 = vadd.f32 %v810, %v837
          %v850 = vadd.f32 %v811, %v837
          %v851 = vadd.f32 %v812, %v837
          %v852 = vadd.f32 %v813, %v837
          %v853 = vadd.f32 %v814, %v837
          %v854 = vadd.f32 %v815, %v837
          %v855 = vadd.f32 %v816, %v837
          %v856 = vadd.f32 %v817, %v837
          %v857 = vadd.f32 %v818, %v837
          %v858 = vadd.f32 %v819, %v837
          %v859 = vadd.f32 %v820, %v837
          %v860 = vadd.f32 %v821, %v837
          %v861 = vadd.f32 %v822, %v837
          %v862 = vadd.f32 %v823, %v837
          %v863 = vadd.f32 %v824, %v837
          %v864 = vadd.f32 %v825, %v837
          %v865 = vadd.f32 %v826, %v837
          %v866 = vadd.f32 %v827, %v837
          %v867 = vadd.f32 %v828, %v837
          %v868 = vadd.f32 %v829, %v837
          %v869 = vadd.f32 %v830, %v837
          %v870 = vadd.f32 %v831, %v837
          %v871 = vld [vmem:[%s308] sm:$0xff]
          %v872 = vld [vmem:[%s308 + $0x8] sm:$0xff]
          %v873 = vld [vmem:[%s308 + $0x10] sm:$0xff]
          %v874 = vld [vmem:[%s308 + $0x18] sm:$0xff]
          %v875 = vld [vmem:[%s308 + $0x20] sm:$0xff]
          %v876 = vld [vmem:[%s308 + $0x28] sm:$0xff]
          %v877 = vld [vmem:[%s308 + $0x30] sm:$0xff]
          %v878 = vld [vmem:[%s308 + $0x38] sm:$0xff]
          %v879 = vld [vmem:[%s308 + $0x40] sm:$0xff]
          %v880 = vld [vmem:[%s308 + $0x48] sm:$0xff]
          %v881 = vld [vmem:[%s308 + $0x50] sm:$0xff]
          %v882 = vld [vmem:[%s308 + $0x58] sm:$0xff]
          %v883 = vld [vmem:[%s308 + $0x60] sm:$0xff]
          %v884 = vld [vmem:[%s308 + $0x68] sm:$0xff]
          %v885 = vld [vmem:[%s308 + $0x70] sm:$0xff]
          %v886 = vld [vmem:[%s308 + $0x78] sm:$0xff]
          %v887 = vld [vmem:[%s308 + $0x80] sm:$0xff]
          %v888 = vld [vmem:[%s308 + $0x88] sm:$0xff]
          %v889 = vld [vmem:[%s308 + $0x90] sm:$0xff]
          %v890 = vld [vmem:[%s308 + $0x98] sm:$0xff]
          %v891 = vld [vmem:[%s308 + $0xa0] sm:$0xff]
          %v892 = vld [vmem:[%s308 + $0xa8] sm:$0xff]
          %v893 = vld [vmem:[%s308 + $0xb0] sm:$0xff]
          %v894 = vld [vmem:[%s308 + $0xb8] sm:$0xff]
          %v895 = vld [vmem:[%s308 + $0xc0] sm:$0xff]
          %v896 = vld [vmem:[%s308 + $0xc8] sm:$0xff]
          %v897 = vld [vmem:[%s308 + $0xd0] sm:$0xff]
          %v898 = vld [vmem:[%s308 + $0xd8] sm:$0xff]
          %v899 = vld [vmem:[%s308 + $0xe0] sm:$0xff]
          %v900 = vld [vmem:[%s308 + $0xe8] sm:$0xff]
          %v901 = vld [vmem:[%s308 + $0xf0] sm:$0xff]
          %v902 = vld [vmem:[%s308 + $0xf8] sm:$0xff]
          %v903 = vadd.f32 %v839, %v871
          %v904 = vadd.f32 %v840, %v872
          %v905 = vadd.f32 %v841, %v873
          %v906 = vadd.f32 %v842, %v874
          %v907 = vadd.f32 %v843, %v875
          %v908 = vadd.f32 %v844, %v876
          %v909 = vadd.f32 %v845, %v877
          %v910 = vadd.f32 %v846, %v878
          %v911 = vadd.f32 %v847, %v879
          %v912 = vadd.f32 %v848, %v880
          %v913 = vadd.f32 %v849, %v881
          %v914 = vadd.f32 %v850, %v882
          %v915 = vadd.f32 %v851, %v883
          %v916 = vadd.f32 %v852, %v884
          %v917 = vadd.f32 %v853, %v885
          %v918 = vadd.f32 %v854, %v886
          %v919 = vadd.f32 %v855, %v887
          %v920 = vadd.f32 %v856, %v888
          %v921 = vadd.f32 %v857, %v889
          %v922 = vadd.f32 %v858, %v890
          %v923 = vadd.f32 %v859, %v891
          %v924 = vadd.f32 %v860, %v892
          %v925 = vadd.f32 %v861, %v893
          %v926 = vadd.f32 %v862, %v894
          %v927 = vadd.f32 %v863, %v895
          %v928 = vadd.f32 %v864, %v896
          %v929 = vadd.f32 %v865, %v897
          %v930 = vadd.f32 %v866, %v898
          %v931 = vadd.f32 %v867, %v899
          %v932 = vadd.f32 %v868, %v900
          %v933 = vadd.f32 %v869, %v901
          %v934 = vadd.f32 %v870, %v902
          %v935 = vmax.f32 %v903, 0.0
          %v936 = vmax.f32 %v904, 0.0
          %v937 = vmax.f32 %v905, 0.0
          %v938 = vmax.f32 %v906, 0.0
          %v939 = vmax.f32 %v907, 0.0
          %v940 = vmax.f32 %v908, 0.0
          %v941 = vmax.f32 %v909, 0.0
          %v942 = vmax.f32 %v910, 0.0
          %v943 = vmax.f32 %v911, 0.0
          %v944 = vmax.f32 %v912, 0.0
          %v945 = vmax.f32 %v913, 0.0
          %v946 = vmax.f32 %v914, 0.0
          %v947 = vmax.f32 %v915, 0.0
          %v948 = vmax.f32 %v916, 0.0
          %v949 = vmax.f32 %v917, 0.0
          %v950 = vmax.f32 %v918, 0.0
          %v951 = vmax.f32 %v919, 0.0
          %v952 = vmax.f32 %v920, 0.0
          %v953 = vmax.f32 %v921, 0.0
          %v954 = vmax.f32 %v922, 0.0
          %v955 = vmax.f32 %v923, 0.0
          %v956 = vmax.f32 %v924, 0.0
          %v957 = vmax.f32 %v925, 0.0
          %v958 = vmax.f32 %v926, 0.0
          %v959 = vmax.f32 %v927, 0.0
          %v960 = vmax.f32 %v928, 0.0
          %v961 = vmax.f32 %v929, 0.0
          %v962 = vmax.f32 %v930, 0.0
          %v963 = vmax.f32 %v931, 0.0
          %v964 = vmax.f32 %v932, 0.0
          %v965 = vmax.f32 %v933, 0.0
          %v966 = vmax.f32 %v934, 0.0
          %967 = vst [vmem:[%s279] sm:$0xff] %v935
          %968 = vst [vmem:[%s279 + $0x8] sm:$0xff] %v936
          %969 = vst [vmem:[%s279 + $0x10] sm:$0xff] %v937
          %970 = vst [vmem:[%s279 + $0x18] sm:$0xff] %v938
          %971 = vst [vmem:[%s279 + $0x20] sm:$0xff] %v939
          %972 = vst [vmem:[%s279 + $0x28] sm:$0xff] %v940
          %973 = vst [vmem:[%s279 + $0x30] sm:$0xff] %v941
          %974 = vst [vmem:[%s279 + $0x38] sm:$0xff] %v942
          %975 = vst [vmem:[%s279 + $0x40] sm:$0xff] %v943
          %976 = vst [vmem:[%s279 + $0x48] sm:$0xff] %v944
          %977 = vst [vmem:[%s279 + $0x50] sm:$0xff] %v945
          %978 = vst [vmem:[%s279 + $0x58] sm:$0xff] %v946
          %979 = vst [vmem:[%s279 + $0x60] sm:$0xff] %v947
          %980 = vst [vmem:[%s279 + $0x68] sm:$0xff] %v948
          %981 = vst [vmem:[%s279 + $0x70] sm:$0xff] %v949
          %982 = vst [vmem:[%s279 + $0x78] sm:$0xff] %v950
          %983 = vst [vmem:[%s279 + $0x80] sm:$0xff] %v951
          %984 = vst [vmem:[%s279 + $0x88] sm:$0xff] %v952
          %985 = vst [vmem:[%s279 + $0x90] sm:$0xff] %v953
          %986 = vst [vmem:[%s279 + $0x98] sm:$0xff] %v954
          %987 = vst [vmem:[%s279 + $0xa0] sm:$0xff] %v955
          %988 = vst [vmem:[%s279 + $0xa8] sm:$0xff] %v956
          %989 = vst [vmem:[%s279 + $0xb0] sm:$0xff] %v957
          %990 = vst [vmem:[%s279 + $0xb8] sm:$0xff] %v958
          %991 = vst [vmem:[%s279 + $0xc0] sm:$0xff] %v959
          %992 = vst [vmem:[%s279 + $0xc8] sm:$0xff] %v960
          %993 = vst [vmem:[%s279 + $0xd0] sm:$0xff] %v961
          %994 = vst [vmem:[%s279 + $0xd8] sm:$0xff] %v962
          %995 = vst [vmem:[%s279 + $0xe0] sm:$0xff] %v963
          %996 = vst [vmem:[%s279 + $0xe8] sm:$0xff] %v964
          %997 = vst [vmem:[%s279 + $0xf0] sm:$0xff] %v965
          %998 = vst [vmem:[%s279 + $0xf8] sm:$0xff] %v966
        $region44: #{bottleneck_forward.5} parent=35 // pred_fallthru
          _
        %s999 = sand.u32 %s157, 1
        %s1000 = scalar_lea.sflag [#allocation4], %s999
        %s1001 = sand.u32 %s157, 1
        %s1002 = smul.addr %s1001, 256
        %s1003 = scalar_lea.vmem [#allocation3], %s1002
        // Predicated region
        $region45: #{bottleneck_forward.5} parent=35 // pred_check
          %p1004 = pneg %p167
        $region46: #{bottleneck_forward.5} parent=35 // pred_check_branch
          %1006 = sbr.rel (%p1004) target = $region48
        $region47: #{bottleneck_forward.5} parent=35 // pred_region
          %s1007 = smul.u32 32, %s23
          %s1009 = ssub.s32 4096, 4096
          %1010 = vsyncadd %s1000, %s1009
          %s1011 = sadd.s32 %s24, %s1007
          %s1012 = smul.addr %s1011, 128
          %s1013 = scalar_lea.hbm %s4, %s1012
          %s1014 = sshll.u32 %s1003, 4
          %s1015 = int_to_ptr.vmem [resolvable:$true] %s1014
          %1020 = dma.vmem_to_hbm [thread:$0]  %s1015, 4096, %s1013, %s1000, 128, 128, 8
        $region48: #{bottleneck_forward.5} parent=35 // pred_fallthru
          _
      $region36: #{bottleneck_forward.5} parent=5 // pred_fallthru
        _
      %p1021 = scmp.le.s32.totalorder 2, %s13
      // Predicated region
      $region49: #{bottleneck_forward.5} parent=5 // pred_check
        %p1022 = pneg %p1021
      $region50: #{bottleneck_forward.5} parent=5 // pred_check_branch
        %1024 = sbr.rel (%p1022) target = $region52
      $region51: #{bottleneck_forward.5} parent=5 // pred_region
        %s1025 = ssub.s32 %s13, 2
        // Predicated region
        $region53: #{bottleneck_forward.5} parent=51 // pred_check
          %p1026 = pneg %p173
        $region54: #{bottleneck_forward.5} parent=51 // pred_check_branch
          %1028 = sbr.rel (%p1026) target = $region56
        $region55: #{bottleneck_forward.5} parent=51 // pred_region
          %s1029 = sand.u32 %s158, 1
          %s1030 = scalar_lea.sflag [#allocation4], %s1029
          %s1031 = sand.u32 %s158, 1
          %s1032 = smul.addr %s1031, 256
          %s1033 = scalar_lea.vmem [#allocation3], %s1032
          %1034 = dma.done %s1030, 4096
        $region56: #{bottleneck_forward.5} parent=51 // pred_fallthru
          _
      $region52: #{bottleneck_forward.5} parent=5 // pred_fallthru
        _
    $region6: #{bottleneck_forward.5} parent=1 // loop_footer
      %s17 = sadd.s32 1, %s13
    $region7: #{bottleneck_forward.5} parent=1 // loop_footer_branch
      %12 = sbr.rel target = $region3
    $region8: #{bottleneck_forward.5} parent=1 // loop_exit
      _
    %1035 = vsyncpa [#allocation4], 1
    %s1036 = scalar_lea.sflag [#allocation4], 1
    %1037 = vsyncpa %s1036, 1

</llo_original>
